<compile_context>
chip_gen: v6e
topology: v6e:2x2x1
jax: 0.10.0
libtpu: 0.0.40
codegen_flags: <defaults>
</compile_context>

<pallas_src>
import functools

import numpy as np
import jax
import jax.numpy as jnp
from jax.experimental import pallas as pl
from jax.experimental.pallas import tpu as pltpu


# ---------------- configuration (small, consistent with the module) ----------
VOCAB_SIZE   = 50
D_MODEL      = 32              # == FEAT_DIM (required by the module's forward)
SEQ_LEN      = 8               # module uses 2048; scaled down for the demo
NUM_HEADS    = 4
D_FF         = 64
FEAT_DIM     = 32
ADD_FEAT     = 6               # pred_additional_feat_dim > 0
FEAT_HID     = min(ADD_FEAT, 10)
PRED_N_LAYER = 2
OUT_DIM      = 4
BATCH        = 2
LN_EPS       = 1e-5
PRED_IN_DIM  = 2 * FEAT_DIM + FEAT_HID
PRED_HID     = FEAT_DIM // 2

assert FEAT_DIM == D_MODEL, "module forward requires feat_dim == d_model"


def _layernorm(x, g, b, eps=LN_EPS):
    mu = jnp.mean(x, axis=-1, keepdims=True)
    var = jnp.mean((x - mu) ** 2, axis=-1, keepdims=True)
    return (x - mu) * jax.lax.rsqrt(var + eps) * g + b


# ===================== fused kernel: encoder layer + head =====================
def icc_tf_kernel(embed_ref, bert_ref, feat_ref,
                  wq_ref, wk_ref, wv_ref, bq_ref, bk_ref, bv_ref,
                  wo_ref, bo_ref, ln1g_ref, ln1b_ref,
                  w1_ref, b1_ref, w2_ref, b2_ref, ln2g_ref, ln2b_ref,
                  wb_ref, bb_ref, wf_ref, bf_ref, lnfg_ref, lnfb_ref,
                  *rest, num_heads, n_hidden):
    pred_refs = rest[:-2]
    h_ref, y_ref = rest[-2], rest[-1]

    x = embed_ref[0]                                   # (S, D)
    S, D = x.shape
    H = num_heads
    dh = D // H
    scale = 1.0 / float(np.sqrt(dh))

    # ---- self attention: heads batched on a leading axis (one batched
    # dot_general per stage; no lane slicing, no concat, no transposes) ----
    xb = jnp.broadcast_to(x[None], (H, S, D))          # (H, S, D)
    q = jnp.einsum('hsd,hde->hse', xb, wq_ref[...],
                   preferred_element_type=jnp.float32) + bq_ref[...]   # (H,S,dh)
    k = jnp.einsum('hsd,hde->hse', xb, wk_ref[...],
                   preferred_element_type=jnp.float32) + bk_ref[...]
    v = jnp.einsum('hsd,hde->hse', xb, wv_ref[...],
                   preferred_element_type=jnp.float32) + bv_ref[...]
    q = q * scale                                       # scale the small tensor

    s = jnp.einsum('hqd,hkd->hqk', q, k,
                   preferred_element_type=jnp.float32)                  # (H,S,S)
    s = s - jnp.max(s, axis=-1, keepdims=True)
    e = jnp.exp(s)
    probs = e * pl.reciprocal(jnp.sum(e, axis=-1, keepdims=True), approx=True)
    ctx = jnp.einsum('hqk,hkd->hqd', probs, v,
                     preferred_element_type=jnp.float32)                # (H,S,dh)
    # per-head output projection, summed over heads (== concat @ Wo.T)
    attn = jnp.sum(jnp.einsum('hqd,hde->hqe', ctx, wo_ref[...],
                              preferred_element_type=jnp.float32),
                   axis=0) + bo_ref[...]                                # (S, D)

    # ---- residual + layernorm 1 ----
    x1 = _layernorm(x + attn, ln1g_ref[...], ln1b_ref[...])

    # ---- feed forward (ReLU); weights pre-transposed on host ----
    ff = jnp.maximum(jnp.dot(x1, w1_ref[...],
                             preferred_element_type=jnp.float32) + b1_ref[...], 0.0)
    ff = jnp.dot(ff, w2_ref[...],
                 preferred_element_type=jnp.float32) + b2_ref[...]

    # ---- residual + layernorm 2 ----
    x2 = _layernorm(x1 + ff, ln2g_ref[...], ln2b_ref[...])              # (S, D)

    # ---- bottleneck: flatten(x2) @ Wb.T + bb, as a short unrolled sum of
    # per-row matmuls (host reshapes wb to (S, D, FEAT_DIM)); avoids an
    # in-kernel (S,D) -> (1, S*D) relayout ----
    tf_vec = bb_ref[...]                                                # (1, F)
    for s_i in range(S):
        tf_vec = tf_vec + jnp.dot(x2[s_i:s_i + 1, :], wb_ref[s_i],
                                  preferred_element_type=jnp.float32)

    # ---- pred_feat: Linear -> ELU -> LayerNorm ----
    fh = jnp.dot(feat_ref[0], wf_ref[...],
                 preferred_element_type=jnp.float32) + bf_ref[...]      # (1, FH)
    fh = jnp.where(fh > 0, fh, jnp.exp(fh) - 1.0)                       # ELU(a=1)
    fh = _layernorm(fh, lnfg_ref[...], lnfb_ref[...])

    # ---- h = cat([bert, tf_vec, feat_hidden]); single full-block store ----
    h_row = jnp.concatenate([bert_ref[0], tf_vec, fh], axis=1)          # (1, 70)
    h_ref[0] = h_row

    # ---- pred_head: (Linear + ReLU) x n_hidden, then final Linear ----
    y = h_row
    for i in range(n_hidden):
        w = pred_refs[2 * i][...]
        b = pred_refs[2 * i + 1][...]
        y = jnp.maximum(jnp.dot(y, w, preferred_element_type=jnp.float32) + b, 0.0)
    y_ref[0] = jnp.dot(y, pred_refs[-2][...],
                       preferred_element_type=jnp.float32) + pred_refs[-1][...]


# ======================= host-side layout plumbing ===========================
def prepare_kernel_params(p):
    """Pre-transpose / per-head-restructure all weights once, outside the kernel."""
    D, H = D_MODEL, NUM_HEADS
    dh = D // H
    wqkv = p['wqkv']                 # (3D, D), PyTorch in_proj_weight layout
    bqkv = p['bqkv'][0]              # (3D,)

    def per_head_in(w):              # (D, D) -> (H, D, dh): x @ w_h gives head h
        return w.reshape(H, dh, D).transpose(0, 2, 1)

    kp = {}
    kp['wq_h'] = per_head_in(wqkv[0:D])
    kp['wk_h'] = per_head_in(wqkv[D:2 * D])
    kp['wv_h'] = per_head_in(wqkv[2 * D:3 * D])
    kp['bq_h'] = bqkv[0:D].reshape(H, 1, dh)
    kp['bk_h'] = bqkv[D:2 * D].reshape(H, 1, dh)
    kp['bv_h'] = bqkv[2 * D:3 * D].reshape(H, 1, dh)
    kp['wo_h'] = p['wo'].T.reshape(H, dh, D)   # sum_h ctx_h @ wo_h[h] == concat @ Wo.T
    kp['bo'] = p['bo']
    kp['ln1g'], kp['ln1b'] = p['ln1g'], p['ln1b']
    kp['w1_t'] = p['w1'].T
    kp['b1'] = p['b1']
    kp['w2_t'] = p['w2'].T
    kp['b2'] = p['b2']
    kp['ln2g'], kp['ln2b'] = p['ln2g'], p['ln2b']
    kp['wb3'] = p['wb'].T.reshape(SEQ_LEN, D_MODEL, FEAT_DIM)   # row-major flatten match
    kp['bb'] = p['bb']
    kp['wf_t'] = p['wf'].T
    kp['bf'] = p['bf']
    kp['lnfg'], kp['lnfb'] = p['lnfg'], p['lnfb']
    kp['pred_w_t'] = [w.T for w in p['pred_w']]
    kp['pred_b'] = list(p['pred_b'])
    kp['pred_wout_t'] = p['pred_wout'].T
    kp['pred_bout'] = p['pred_bout']
    return kp


def icc_tf_fused(embed, bert, feat, kp):
    B, S, D = embed.shape
    bert3 = bert[:, None, :]                           # (B, 1, FEAT_DIM)
    feat3 = feat[:, None, :]                           # (B, 1, ADD_FEAT)

    weights = [kp['wq_h'], kp['wk_h'], kp['wv_h'],
               kp['bq_h'], kp['bk_h'], kp['bv_h'],
               kp['wo_h'], kp['bo'], kp['ln1g'], kp['ln1b'],
               kp['w1_t'], kp['b1'], kp['w2_t'], kp['b2'],
               kp['ln2g'], kp['ln2b'],
               kp['wb3'], kp['bb'], kp['wf_t'], kp['bf'],
               kp['lnfg'], kp['lnfb']]
    pred_flat = []
    for w, b in zip(kp['pred_w_t'], kp['pred_b']):
        pred_flat += [w, b]
    pred_flat += [kp['pred_wout_t'], kp['pred_bout']]

    in_specs = [pl.BlockSpec((1, S, D), lambda b: (b, 0, 0)),
                pl.BlockSpec((1, 1, bert.shape[1]), lambda b: (b, 0, 0)),
                pl.BlockSpec((1, 1, feat.shape[1]), lambda b: (b, 0, 0))]
    for w in weights + pred_flat:
        # full-array blocks, same block for every grid step (weights stay resident)
        in_specs.append(pl.BlockSpec(w.shape, lambda b, n=w.ndim: (0,) * n))

    out_shapes = (jax.ShapeDtypeStruct((B, 1, PRED_IN_DIM), jnp.float32),
                  jax.ShapeDtypeStruct((B, 1, OUT_DIM), jnp.float32))
    out_specs = (pl.BlockSpec((1, 1, PRED_IN_DIM), lambda b: (b, 0, 0)),
                 pl.BlockSpec((1, 1, OUT_DIM), lambda b: (b, 0, 0)))

    kernel = functools.partial(icc_tf_kernel,
                               num_heads=NUM_HEADS, n_hidden=PRED_N_LAYER)
    h3, y3 = pl.pallas_call(
        kernel,
        out_shape=out_shapes,
        grid_spec=pltpu.PrefetchScalarGridSpec(
            num_scalar_prefetch=0,
            grid=(B,),
            in_specs=in_specs,
            out_specs=out_specs),
        compiler_params=pltpu.CompilerParams(
            dimension_semantics=("parallel",)),       # feeds both TCs on v7x
    )(embed, bert3, feat3, *weights, *pred_flat)
    return h3[:, 0, :], y3[:, 0, :]


# ============================== full forward =================================
def icc_tf_forward(token, bert, feat, p):
    kp = prepare_kernel_params(p)                      # host-side layout plumbing
    # embedding lookups (gather) are glue in plain JAX
    word = jnp.take(p['word_embed'], token, axis=0)    # (B, S, D)
    embed = (word + p['pos_embed'][None, :, :]).astype(jnp.float32)
    return icc_tf_fused(embed, bert, feat, kp)         # single fused Pallas call


# ============================ pure-JAX reference =============================
def reference_forward(token, bert, feat, p):
    word = jnp.take(p['word_embed'], token, axis=0)
    x = word + p['pos_embed'][None]
    B, S, D = x.shape
    dh = D // NUM_HEADS

    def ln(t, g, b):
        mu = t.mean(-1, keepdims=True)
        var = ((t - mu) ** 2).mean(-1, keepdims=True)
        return (t - mu) / jnp.sqrt(var + LN_EPS) * g + b

    qkv = jnp.einsum('bsd,ed->bse', x, p['wqkv']) + p['bqkv'][0]
    q, k, v = qkv[..., :D], qkv[..., D:2 * D], qkv[..., 2 * D:]
    q = q.reshape(B, S, NUM_HEADS, dh)
    k = k.reshape(B, S, NUM_HEADS, dh)
    v = v.reshape(B, S, NUM_HEADS, dh)
    s = jnp.einsum('bqhd,bkhd->bhqk', q, k) / np.sqrt(dh)
    pm = jax.nn.softmax(s, axis=-1)
    o = jnp.einsum('bhqk,bkhd->bqhd', pm, v).reshape(B, S, D)
    attn = jnp.einsum('bsd,ed->bse', o, p['wo']) + p['bo'][0]
    x1 = ln(x + attn, p['ln1g'][0], p['ln1b'][0])
    ff = jax.nn.relu(jnp.einsum('bsd,fd->bsf', x1, p['w1']) + p['b1'][0])
    ff = jnp.einsum('bsf,df->bsd', ff, p['w2']) + p['b2'][0]
    x2 = ln(x1 + ff, p['ln2g'][0], p['ln2b'][0])

    xflat = x2.reshape(B, -1)
    tf_vec = xflat @ p['wb'].T + p['bb'][0]
    fh = feat @ p['wf'].T + p['bf'][0]
    fh = jnp.where(fh > 0, fh, jnp.exp(fh) - 1.0)
    fh = ln(fh, p['lnfg'][0], p['lnfb'][0])
    h = jnp.concatenate([bert, tf_vec, fh], axis=1)
    y = h
    for w, b in zip(p['pred_w'], p['pred_b']):
        y = jax.nn.relu(y @ w.T + b[0])
    y = y @ p['pred_wout'].T + p['pred_bout'][0]
    return h, y


# ============================== parameter init ===============================
def init_params(key):
    ks = jax.random.split(key, 24)

    def rnd(i, shape, scale=0.05):
        return (scale * jax.random.normal(ks[i], shape)).astype(jnp.float32)

    p = {}
    p['word_embed'] = rnd(0, (VOCAB_SIZE, D_MODEL), 0.1)
    p['pos_embed'] = rnd(1, (SEQ_LEN, D_MODEL), 0.1)
    # TransformerEncoderLayer
    p['wqkv'] = rnd(2, (3 * D_MODEL, D_MODEL));  p['bqkv'] = rnd(3, (1, 3 * D_MODEL), 0.01)
    p['wo'] = rnd(4, (D_MODEL, D_MODEL));        p['bo'] = rnd(5, (1, D_MODEL), 0.01)
    p['ln1g'] = jnp.ones((1, D_MODEL), jnp.float32)
    p['ln1b'] = jnp.zeros((1, D_MODEL), jnp.float32)
    p['w1'] = rnd(6, (D_FF, D_MODEL));           p['b1'] = rnd(7, (1, D_FF), 0.01)
    p['w2'] = rnd(8, (D_MODEL, D_FF));           p['b2'] = rnd(9, (1, D_MODEL), 0.01)
    p['ln2g'] = jnp.ones((1, D_MODEL), jnp.float32)
    p['ln2b'] = jnp.zeros((1, D_MODEL), jnp.float32)
    # bottleneck layer (seq_length*feat_dim -> feat_dim)
    p['wb'] = rnd(10, (FEAT_DIM, SEQ_LEN * D_MODEL));  p['bb'] = rnd(11, (1, FEAT_DIM), 0.01)
    # pred_feat: Linear -> ELU -> LayerNorm
    p['wf'] = rnd(12, (FEAT_HID, ADD_FEAT));     p['bf'] = rnd(13, (1, FEAT_HID), 0.01)
    p['lnfg'] = jnp.ones((1, FEAT_HID), jnp.float32)
    p['lnfb'] = jnp.zeros((1, FEAT_HID), jnp.float32)
    # pred_head
    pred_w, pred_b = [], []
    in_dim = PRED_IN_DIM
    for i in range(PRED_N_LAYER):
        pred_w.append(rnd(14 + 2 * i, (PRED_HID, in_dim)))
        pred_b.append(rnd(15 + 2 * i, (1, PRED_HID), 0.01))
        in_dim = PRED_HID
    p['pred_w'], p['pred_b'] = pred_w, pred_b
    p['pred_wout'] = rnd(20, (OUT_DIM, PRED_HID))
    p['pred_bout'] = rnd(21, (1, OUT_DIM), 0.01)
    return p


if __name__ == "__main__":
    key = jax.random.PRNGKey(0)
    k1, k2, k3 = jax.random.split(key, 3)
    token = jax.random.randint(k1, (BATCH, SEQ_LEN), 0, VOCAB_SIZE)
    bert = jax.random.normal(k2, (BATCH, FEAT_DIM), jnp.float32)
    feat = jax.random.normal(k3, (BATCH, ADD_FEAT), jnp.float32)
    params = init_params(jax.random.PRNGKey(42))

    fwd = jax.jit(icc_tf_forward)
    h, y = fwd(token, bert, feat, params)
    h = jax.block_until_ready(h)
    y = jax.block_until_ready(y)

    assert h.shape == (BATCH, PRED_IN_DIM) and y.shape == (BATCH, OUT_DIM)
    assert bool(jnp.all(jnp.isfinite(h))) and bool(jnp.all(jnp.isfinite(y)))

    h_ref, y_ref = reference_forward(token, bert, feat, params)
    np.testing.assert_allclose(np.asarray(h), np.asarray(h_ref), rtol=2e-2, atol=2e-2)
    np.testing.assert_allclose(np.asarray(y), np.asarray(y_ref), rtol=2e-2, atol=2e-2)

    print("KERNEL_OK")
</pallas_src>

<mosaic_0001>
module attributes {stable_mosaic.version = 11 : i64} {
  func.func @icc_tf_kernel(%arg0: i32, %arg1: memref<1x8x32xf32, #tpu.memory_space<vmem>>, %arg2: memref<1x1x32xf32, #tpu.memory_space<vmem>>, %arg3: memref<1x1x6xf32, #tpu.memory_space<vmem>>, %arg4: memref<4x32x8xf32, #tpu.memory_space<vmem>>, %arg5: memref<4x32x8xf32, #tpu.memory_space<vmem>>, %arg6: memref<4x32x8xf32, #tpu.memory_space<vmem>>, %arg7: memref<4x1x8xf32, #tpu.memory_space<vmem>>, %arg8: memref<4x1x8xf32, #tpu.memory_space<vmem>>, %arg9: memref<4x1x8xf32, #tpu.memory_space<vmem>>, %arg10: memref<4x8x32xf32, #tpu.memory_space<vmem>>, %arg11: memref<1x32xf32, #tpu.memory_space<vmem>>, %arg12: memref<1x32xf32, #tpu.memory_space<vmem>>, %arg13: memref<1x32xf32, #tpu.memory_space<vmem>>, %arg14: memref<32x64xf32, #tpu.memory_space<vmem>>, %arg15: memref<1x64xf32, #tpu.memory_space<vmem>>, %arg16: memref<64x32xf32, #tpu.memory_space<vmem>>, %arg17: memref<1x32xf32, #tpu.memory_space<vmem>>, %arg18: memref<1x32xf32, #tpu.memory_space<vmem>>, %arg19: memref<1x32xf32, #tpu.memory_space<vmem>>, %arg20: memref<8x32x32xf32, #tpu.memory_space<vmem>>, %arg21: memref<1x32xf32, #tpu.memory_space<vmem>>, %arg22: memref<6x6xf32, #tpu.memory_space<vmem>>, %arg23: memref<1x6xf32, #tpu.memory_space<vmem>>, %arg24: memref<1x6xf32, #tpu.memory_space<vmem>>, %arg25: memref<1x6xf32, #tpu.memory_space<vmem>>, %arg26: memref<70x16xf32, #tpu.memory_space<vmem>>, %arg27: memref<1x16xf32, #tpu.memory_space<vmem>>, %arg28: memref<16x16xf32, #tpu.memory_space<vmem>>, %arg29: memref<1x16xf32, #tpu.memory_space<vmem>>, %arg30: memref<16x4xf32, #tpu.memory_space<vmem>>, %arg31: memref<1x4xf32, #tpu.memory_space<vmem>>, %arg32: memref<1x1x70xf32, #tpu.memory_space<vmem>>, %arg33: memref<1x1x4xf32, #tpu.memory_space<vmem>>) attributes {dimension_semantics = [#tpu.dimension_semantics<parallel>], iteration_bounds = array<i64: 2>, scalar_prefetch = 0 : i64, scratch_operands = 0 : i64, tpu.core_type = #tpu.core_type<tc>, window_params = [{transform_indices = @transform_0, window_bounds = array<i64: 1, 8, 32>}, {transform_indices = @transform_1, window_bounds = array<i64: 1, 1, 32>}, {transform_indices = @transform_2, window_bounds = array<i64: 1, 1, 6>}, {pipeline_mode = #tpu.pipeline_mode<synchronous>, transform_indices = @transform_3, window_bounds = array<i64: 4, 32, 8>}, {pipeline_mode = #tpu.pipeline_mode<synchronous>, transform_indices = @transform_4, window_bounds = array<i64: 4, 32, 8>}, {pipeline_mode = #tpu.pipeline_mode<synchronous>, transform_indices = @transform_5, window_bounds = array<i64: 4, 32, 8>}, {pipeline_mode = #tpu.pipeline_mode<synchronous>, transform_indices = @transform_6, window_bounds = array<i64: 4, 1, 8>}, {pipeline_mode = #tpu.pipeline_mode<synchronous>, transform_indices = @transform_7, window_bounds = array<i64: 4, 1, 8>}, {pipeline_mode = #tpu.pipeline_mode<synchronous>, transform_indices = @transform_8, window_bounds = array<i64: 4, 1, 8>}, {pipeline_mode = #tpu.pipeline_mode<synchronous>, transform_indices = @transform_9, window_bounds = array<i64: 4, 8, 32>}, {pipeline_mode = #tpu.pipeline_mode<synchronous>, transform_indices = @transform_10, window_bounds = array<i64: 1, 32>}, {pipeline_mode = #tpu.pipeline_mode<synchronous>, transform_indices = @transform_11, window_bounds = array<i64: 1, 32>}, {pipeline_mode = #tpu.pipeline_mode<synchronous>, transform_indices = @transform_12, window_bounds = array<i64: 1, 32>}, {pipeline_mode = #tpu.pipeline_mode<synchronous>, transform_indices = @transform_13, window_bounds = array<i64: 32, 64>}, {pipeline_mode = #tpu.pipeline_mode<synchronous>, transform_indices = @transform_14, window_bounds = array<i64: 1, 64>}, {pipeline_mode = #tpu.pipeline_mode<synchronous>, transform_indices = @transform_15, window_bounds = array<i64: 64, 32>}, {pipeline_mode = #tpu.pipeline_mode<synchronous>, transform_indices = @transform_16, window_bounds = array<i64: 1, 32>}, {pipeline_mode = #tpu.pipeline_mode<synchronous>, transform_indices = @transform_17, window_bounds = array<i64: 1, 32>}, {pipeline_mode = #tpu.pipeline_mode<synchronous>, transform_indices = @transform_18, window_bounds = array<i64: 1, 32>}, {pipeline_mode = #tpu.pipeline_mode<synchronous>, transform_indices = @transform_19, window_bounds = array<i64: 8, 32, 32>}, {pipeline_mode = #tpu.pipeline_mode<synchronous>, transform_indices = @transform_20, window_bounds = array<i64: 1, 32>}, {pipeline_mode = #tpu.pipeline_mode<synchronous>, transform_indices = @transform_21, window_bounds = array<i64: 6, 6>}, {pipeline_mode = #tpu.pipeline_mode<synchronous>, transform_indices = @transform_22, window_bounds = array<i64: 1, 6>}, {pipeline_mode = #tpu.pipeline_mode<synchronous>, transform_indices = @transform_23, window_bounds = array<i64: 1, 6>}, {pipeline_mode = #tpu.pipeline_mode<synchronous>, transform_indices = @transform_24, window_bounds = array<i64: 1, 6>}, {pipeline_mode = #tpu.pipeline_mode<synchronous>, transform_indices = @transform_25, window_bounds = array<i64: 70, 16>}, {pipeline_mode = #tpu.pipeline_mode<synchronous>, transform_indices = @transform_26, window_bounds = array<i64: 1, 16>}, {pipeline_mode = #tpu.pipeline_mode<synchronous>, transform_indices = @transform_27, window_bounds = array<i64: 16, 16>}, {pipeline_mode = #tpu.pipeline_mode<synchronous>, transform_indices = @transform_28, window_bounds = array<i64: 1, 16>}, {pipeline_mode = #tpu.pipeline_mode<synchronous>, transform_indices = @transform_29, window_bounds = array<i64: 16, 4>}, {pipeline_mode = #tpu.pipeline_mode<synchronous>, transform_indices = @transform_30, window_bounds = array<i64: 1, 4>}, {transform_indices = @transform_31, window_bounds = array<i64: 1, 1, 70>}, {transform_indices = @transform_32, window_bounds = array<i64: 1, 1, 4>}]} {
    %c0 = arith.constant 0 : index
    %c0_0 = arith.constant 0 : index
    %c0_1 = arith.constant 0 : index
    %0 = vector.load %arg1[%c0, %c0_0, %c0_1] : memref<1x8x32xf32, #tpu.memory_space<vmem>>, vector<1x8x32xf32>
    %1 = vector.shape_cast %0 : vector<1x8x32xf32> to vector<8x32xf32>
    %2 = vector.shape_cast %1 : vector<8x32xf32> to vector<1x8x32xf32>
    %3 = vector.shape_cast %2 : vector<1x8x32xf32> to vector<1x8x32xf32>
    %4 = vector.broadcast %3 : vector<1x8x32xf32> to vector<4x8x32xf32>
    %c0_2 = arith.constant 0 : index
    %c0_3 = arith.constant 0 : index
    %c0_4 = arith.constant 0 : index
    %5 = vector.load %arg4[%c0_2, %c0_3, %c0_4] : memref<4x32x8xf32, #tpu.memory_space<vmem>>, vector<4x32x8xf32>
    "tpu.trace_start"() <{level = 10 : i32, message = "hsd,hde->hse"}> : () -> ()
    %cst = arith.constant dense<0.000000e+00> : vector<4x8x8xf32>
    %6 = tpu.matmul %4, %5, %cst {dimension_numbers = #tpu.dot_dimension_numbers<[2], [1], [1], [2], [0, 0, 0, 1, 1, 2], [0], [0]>} : vector<4x8x32xf32>, vector<4x32x8xf32>, vector<4x8x8xf32> -> vector<4x8x8xf32>
    "tpu.trace_stop"() : () -> ()
    %c0_5 = arith.constant 0 : index
    %c0_6 = arith.constant 0 : index
    %c0_7 = arith.constant 0 : index
    %7 = vector.load %arg7[%c0_5, %c0_6, %c0_7] : memref<4x1x8xf32, #tpu.memory_space<vmem>>, vector<4x1x8xf32>
    %8 = vector.broadcast %7 : vector<4x1x8xf32> to vector<4x8x8xf32>
    %9 = arith.addf %6, %8 : vector<4x8x8xf32>
    %c0_8 = arith.constant 0 : index
    %c0_9 = arith.constant 0 : index
    %c0_10 = arith.constant 0 : index
    %10 = vector.load %arg5[%c0_8, %c0_9, %c0_10] : memref<4x32x8xf32, #tpu.memory_space<vmem>>, vector<4x32x8xf32>
    "tpu.trace_start"() <{level = 10 : i32, message = "hsd,hde->hse"}> : () -> ()
    %cst_11 = arith.constant dense<0.000000e+00> : vector<4x8x8xf32>
    %11 = tpu.matmul %4, %10, %cst_11 {dimension_numbers = #tpu.dot_dimension_numbers<[2], [1], [1], [2], [0, 0, 0, 1, 1, 2], [0], [0]>} : vector<4x8x32xf32>, vector<4x32x8xf32>, vector<4x8x8xf32> -> vector<4x8x8xf32>
    "tpu.trace_stop"() : () -> ()
    %c0_12 = arith.constant 0 : index
    %c0_13 = arith.constant 0 : index
    %c0_14 = arith.constant 0 : index
    %12 = vector.load %arg8[%c0_12, %c0_13, %c0_14] : memref<4x1x8xf32, #tpu.memory_space<vmem>>, vector<4x1x8xf32>
    %13 = vector.broadcast %12 : vector<4x1x8xf32> to vector<4x8x8xf32>
    %14 = arith.addf %11, %13 : vector<4x8x8xf32>
    %c0_15 = arith.constant 0 : index
    %c0_16 = arith.constant 0 : index
    %c0_17 = arith.constant 0 : index
    %15 = vector.load %arg6[%c0_15, %c0_16, %c0_17] : memref<4x32x8xf32, #tpu.memory_space<vmem>>, vector<4x32x8xf32>
    "tpu.trace_start"() <{level = 10 : i32, message = "hsd,hde->hse"}> : () -> ()
    %cst_18 = arith.constant dense<0.000000e+00> : vector<4x8x8xf32>
    %16 = tpu.matmul %4, %15, %cst_18 {dimension_numbers = #tpu.dot_dimension_numbers<[2], [1], [1], [2], [0, 0, 0, 1, 1, 2], [0], [0]>} : vector<4x8x32xf32>, vector<4x32x8xf32>, vector<4x8x8xf32> -> vector<4x8x8xf32>
    "tpu.trace_stop"() : () -> ()
    %c0_19 = arith.constant 0 : index
    %c0_20 = arith.constant 0 : index
    %c0_21 = arith.constant 0 : index
    %17 = vector.load %arg9[%c0_19, %c0_20, %c0_21] : memref<4x1x8xf32, #tpu.memory_space<vmem>>, vector<4x1x8xf32>
    %18 = vector.broadcast %17 : vector<4x1x8xf32> to vector<4x8x8xf32>
    %19 = arith.addf %16, %18 : vector<4x8x8xf32>
    %cst_22 = arith.constant 0.353553385 : f32
    %20 = vector.broadcast %cst_22 : f32 to vector<4x8x8xf32>
    %21 = arith.mulf %9, %20 : vector<4x8x8xf32>
    "tpu.trace_start"() <{level = 10 : i32, message = "hqd,hkd->hqk"}> : () -> ()
    %cst_23 = arith.constant dense<0.000000e+00> : vector<4x8x8xf32>
    %22 = tpu.matmul %21, %14, %cst_23 {dimension_numbers = #tpu.dot_dimension_numbers<[2], [2], [1], [1], [0, 0, 0, 1, 1, 1], [0], [0]>} : vector<4x8x8xf32>, vector<4x8x8xf32>, vector<4x8x8xf32> -> vector<4x8x8xf32>
    "tpu.trace_stop"() : () -> ()
    %cst_24 = arith.constant dense<0xFF800000> : vector<4x8xf32>
    %23 = vector.multi_reduction <maximumf>, %22, %cst_24 [2] : vector<4x8x8xf32> to vector<4x8xf32>
    %24 = vector.shape_cast %23 : vector<4x8xf32> to vector<4x8x1xf32>
    %25 = vector.broadcast %24 : vector<4x8x1xf32> to vector<4x8x8xf32>
    %26 = arith.subf %22, %25 : vector<4x8x8xf32>
    %27 = math.exp %26 : vector<4x8x8xf32>
    %cst_25 = arith.constant dense<0.000000e+00> : vector<4x8xf32>
    %28 = vector.multi_reduction <add>, %27, %cst_25 [2] : vector<4x8x8xf32> to vector<4x8xf32>
    %29 = vector.shape_cast %28 : vector<4x8xf32> to vector<4x8x1xf32>
    %30 = tpu.reciprocal %29 {approx = true} : vector<4x8x1xf32> -> vector<4x8x1xf32>
    %31 = vector.broadcast %30 : vector<4x8x1xf32> to vector<4x8x8xf32>
    %32 = arith.mulf %27, %31 : vector<4x8x8xf32>
    "tpu.trace_start"() <{level = 10 : i32, message = "hqk,hkd->hqd"}> : () -> ()
    %cst_26 = arith.constant dense<0.000000e+00> : vector<4x8x8xf32>
    %33 = tpu.matmul %32, %19, %cst_26 {dimension_numbers = #tpu.dot_dimension_numbers<[2], [1], [1], [2], [0, 0, 0, 1, 1, 2], [0], [0]>} : vector<4x8x8xf32>, vector<4x8x8xf32>, vector<4x8x8xf32> -> vector<4x8x8xf32>
    "tpu.trace_stop"() : () -> ()
    %c0_27 = arith.constant 0 : index
    %c0_28 = arith.constant 0 : index
    %c0_29 = arith.constant 0 : index
    %34 = vector.load %arg10[%c0_27, %c0_28, %c0_29] : memref<4x8x32xf32, #tpu.memory_space<vmem>>, vector<4x8x32xf32>
    "tpu.trace_start"() <{level = 10 : i32, message = "hqd,hde->hqe"}> : () -> ()
    %cst_30 = arith.constant dense<0.000000e+00> : vector<4x8x32xf32>
    %35 = tpu.matmul %33, %34, %cst_30 {dimension_numbers = #tpu.dot_dimension_numbers<[2], [1], [1], [2], [0, 0, 0, 1, 1, 2], [0], [0]>} : vector<4x8x8xf32>, vector<4x8x32xf32>, vector<4x8x32xf32> -> vector<4x8x32xf32>
    "tpu.trace_stop"() : () -> ()
    %cst_31 = arith.constant dense<0.000000e+00> : vector<8x32xf32>
    %36 = vector.multi_reduction <add>, %35, %cst_31 [0] : vector<4x8x32xf32> to vector<8x32xf32>
    %c0_32 = arith.constant 0 : index
    %c0_33 = arith.constant 0 : index
    %37 = vector.load %arg11[%c0_32, %c0_33] : memref<1x32xf32, #tpu.memory_space<vmem>>, vector<1x32xf32>
    %38 = vector.broadcast %37 : vector<1x32xf32> to vector<8x32xf32>
    %39 = arith.addf %36, %38 : vector<8x32xf32>
    %40 = arith.addf %1, %39 : vector<8x32xf32>
    %c0_34 = arith.constant 0 : index
    %c0_35 = arith.constant 0 : index
    %41 = vector.load %arg12[%c0_34, %c0_35] : memref<1x32xf32, #tpu.memory_space<vmem>>, vector<1x32xf32>
    %c0_36 = arith.constant 0 : index
    %c0_37 = arith.constant 0 : index
    %42 = vector.load %arg13[%c0_36, %c0_37] : memref<1x32xf32, #tpu.memory_space<vmem>>, vector<1x32xf32>
    %cst_38 = arith.constant dense<0.000000e+00> : vector<8xf32>
    %43 = vector.multi_reduction <add>, %40, %cst_38 [1] : vector<8x32xf32> to vector<8xf32>
    %44 = vector.shape_cast %43 : vector<8xf32> to vector<8x1xf32>
    %cst_39 = arith.constant 3.200000e+01 : f32
    %45 = vector.broadcast %cst_39 : f32 to vector<8x1xf32>
    %46 = arith.divf %44, %45 : vector<8x1xf32>
    %47 = vector.broadcast %46 : vector<8x1xf32> to vector<8x32xf32>
    %48 = arith.subf %40, %47 : vector<8x32xf32>
    %49 = arith.mulf %48, %48 : vector<8x32xf32>
    %cst_40 = arith.constant dense<0.000000e+00> : vector<8xf32>
    %50 = vector.multi_reduction <add>, %49, %cst_40 [1] : vector<8x32xf32> to vector<8xf32>
    %51 = vector.shape_cast %50 : vector<8xf32> to vector<8x1xf32>
    %cst_41 = arith.constant 3.200000e+01 : f32
    %52 = vector.broadcast %cst_41 : f32 to vector<8x1xf32>
    %53 = arith.divf %51, %52 : vector<8x1xf32>
    %54 = vector.broadcast %46 : vector<8x1xf32> to vector<8x32xf32>
    %55 = arith.subf %40, %54 : vector<8x32xf32>
    %cst_42 = arith.constant 9.99999974E-6 : f32
    %56 = vector.broadcast %cst_42 : f32 to vector<8x1xf32>
    %57 = arith.addf %53, %56 : vector<8x1xf32>
    %58 = math.rsqrt %57 : vector<8x1xf32>
    %59 = vector.broadcast %58 : vector<8x1xf32> to vector<8x32xf32>
    %60 = arith.mulf %55, %59 : vector<8x32xf32>
    %61 = vector.broadcast %41 : vector<1x32xf32> to vector<8x32xf32>
    %62 = arith.mulf %60, %61 : vector<8x32xf32>
    %63 = vector.broadcast %42 : vector<1x32xf32> to vector<8x32xf32>
    %64 = arith.addf %62, %63 : vector<8x32xf32>
    %c0_43 = arith.constant 0 : index
    %c0_44 = arith.constant 0 : index
    %65 = vector.load %arg14[%c0_43, %c0_44] : memref<32x64xf32, #tpu.memory_space<vmem>>, vector<32x64xf32>
    %cst_45 = arith.constant dense<0.000000e+00> : vector<8x64xf32>
    %66 = tpu.matmul %64, %65, %cst_45 {dimension_numbers = #tpu.dot_dimension_numbers<[1], [0], [0], [1], [0, 0, 1, 1], [], []>} : vector<8x32xf32>, vector<32x64xf32>, vector<8x64xf32> -> vector<8x64xf32>
    %c0_46 = arith.constant 0 : index
    %c0_47 = arith.constant 0 : index
    %67 = vector.load %arg15[%c0_46, %c0_47] : memref<1x64xf32, #tpu.memory_space<vmem>>, vector<1x64xf32>
    %68 = vector.broadcast %67 : vector<1x64xf32> to vector<8x64xf32>
    %69 = arith.addf %66, %68 : vector<8x64xf32>
    %cst_48 = arith.constant 0.000000e+00 : f32
    %70 = vector.broadcast %cst_48 : f32 to vector<8x64xf32>
    %71 = arith.maximumf %69, %70 : vector<8x64xf32>
    %c0_49 = arith.constant 0 : index
    %c0_50 = arith.constant 0 : index
    %72 = vector.load %arg16[%c0_49, %c0_50] : memref<64x32xf32, #tpu.memory_space<vmem>>, vector<64x32xf32>
    %cst_51 = arith.constant dense<0.000000e+00> : vector<8x32xf32>
    %73 = tpu.matmul %71, %72, %cst_51 {dimension_numbers = #tpu.dot_dimension_numbers<[1], [0], [0], [1], [0, 0, 1, 1], [], []>} : vector<8x64xf32>, vector<64x32xf32>, vector<8x32xf32> -> vector<8x32xf32>
    %c0_52 = arith.constant 0 : index
    %c0_53 = arith.constant 0 : index
    %74 = vector.load %arg17[%c0_52, %c0_53] : memref<1x32xf32, #tpu.memory_space<vmem>>, vector<1x32xf32>
    %75 = vector.broadcast %74 : vector<1x32xf32> to vector<8x32xf32>
    %76 = arith.addf %73, %75 : vector<8x32xf32>
    %77 = arith.addf %64, %76 : vector<8x32xf32>
    %c0_54 = arith.constant 0 : index
    %c0_55 = arith.constant 0 : index
    %78 = vector.load %arg18[%c0_54, %c0_55] : memref<1x32xf32, #tpu.memory_space<vmem>>, vector<1x32xf32>
    %c0_56 = arith.constant 0 : index
    %c0_57 = arith.constant 0 : index
    %79 = vector.load %arg19[%c0_56, %c0_57] : memref<1x32xf32, #tpu.memory_space<vmem>>, vector<1x32xf32>
    %cst_58 = arith.constant dense<0.000000e+00> : vector<8xf32>
    %80 = vector.multi_reduction <add>, %77, %cst_58 [1] : vector<8x32xf32> to vector<8xf32>
    %81 = vector.shape_cast %80 : vector<8xf32> to vector<8x1xf32>
    %cst_59 = arith.constant 3.200000e+01 : f32
    %82 = vector.broadcast %cst_59 : f32 to vector<8x1xf32>
    %83 = arith.divf %81, %82 : vector<8x1xf32>
    %84 = vector.broadcast %83 : vector<8x1xf32> to vector<8x32xf32>
    %85 = arith.subf %77, %84 : vector<8x32xf32>
    %86 = arith.mulf %85, %85 : vector<8x32xf32>
    %cst_60 = arith.constant dense<0.000000e+00> : vector<8xf32>
    %87 = vector.multi_reduction <add>, %86, %cst_60 [1] : vector<8x32xf32> to vector<8xf32>
    %88 = vector.shape_cast %87 : vector<8xf32> to vector<8x1xf32>
    %cst_61 = arith.constant 3.200000e+01 : f32
    %89 = vector.broadcast %cst_61 : f32 to vector<8x1xf32>
    %90 = arith.divf %88, %89 : vector<8x1xf32>
    %91 = vector.broadcast %83 : vector<8x1xf32> to vector<8x32xf32>
    %92 = arith.subf %77, %91 : vector<8x32xf32>
    %cst_62 = arith.constant 9.99999974E-6 : f32
    %93 = vector.broadcast %cst_62 : f32 to vector<8x1xf32>
    %94 = arith.addf %90, %93 : vector<8x1xf32>
    %95 = math.rsqrt %94 : vector<8x1xf32>
    %96 = vector.broadcast %95 : vector<8x1xf32> to vector<8x32xf32>
    %97 = arith.mulf %92, %96 : vector<8x32xf32>
    %98 = vector.broadcast %78 : vector<1x32xf32> to vector<8x32xf32>
    %99 = arith.mulf %97, %98 : vector<8x32xf32>
    %100 = vector.broadcast %79 : vector<1x32xf32> to vector<8x32xf32>
    %101 = arith.addf %99, %100 : vector<8x32xf32>
    %c0_63 = arith.constant 0 : index
    %c0_64 = arith.constant 0 : index
    %102 = vector.load %arg21[%c0_63, %c0_64] : memref<1x32xf32, #tpu.memory_space<vmem>>, vector<1x32xf32>
    %103 = vector.extract_strided_slice %101 {offsets = [0, 0], sizes = [1, 32], strides = [1, 1]} : vector<8x32xf32> to vector<1x32xf32>
    %c0_65 = arith.constant 0 : index
    %c0_66 = arith.constant 0 : index
    %c0_67 = arith.constant 0 : index
    %104 = vector.load %arg20[%c0_65, %c0_66, %c0_67] : memref<8x32x32xf32, #tpu.memory_space<vmem>>, vector<1x32x32xf32>
    %105 = vector.shape_cast %104 : vector<1x32x32xf32> to vector<32x32xf32>
    %cst_68 = arith.constant dense<0.000000e+00> : vector<1x32xf32>
    %106 = tpu.matmul %103, %105, %cst_68 {dimension_numbers = #tpu.dot_dimension_numbers<[1], [0], [0], [1], [0, 0, 1, 1], [], []>} : vector<1x32xf32>, vector<32x32xf32>, vector<1x32xf32> -> vector<1x32xf32>
    %107 = arith.addf %102, %106 : vector<1x32xf32>
    %108 = vector.extract_strided_slice %101 {offsets = [1, 0], sizes = [1, 32], strides = [1, 1]} : vector<8x32xf32> to vector<1x32xf32>
    %c1 = arith.constant 1 : index
    %c0_69 = arith.constant 0 : index
    %c0_70 = arith.constant 0 : index
    %109 = vector.load %arg20[%c1, %c0_69, %c0_70] : memref<8x32x32xf32, #tpu.memory_space<vmem>>, vector<1x32x32xf32>
    %110 = vector.shape_cast %109 : vector<1x32x32xf32> to vector<32x32xf32>
    %cst_71 = arith.constant dense<0.000000e+00> : vector<1x32xf32>
    %111 = tpu.matmul %108, %110, %cst_71 {dimension_numbers = #tpu.dot_dimension_numbers<[1], [0], [0], [1], [0, 0, 1, 1], [], []>} : vector<1x32xf32>, vector<32x32xf32>, vector<1x32xf32> -> vector<1x32xf32>
    %112 = arith.addf %107, %111 : vector<1x32xf32>
    %113 = vector.extract_strided_slice %101 {offsets = [2, 0], sizes = [1, 32], strides = [1, 1]} : vector<8x32xf32> to vector<1x32xf32>
    %c2 = arith.constant 2 : index
    %c0_72 = arith.constant 0 : index
    %c0_73 = arith.constant 0 : index
    %114 = vector.load %arg20[%c2, %c0_72, %c0_73] : memref<8x32x32xf32, #tpu.memory_space<vmem>>, vector<1x32x32xf32>
    %115 = vector.shape_cast %114 : vector<1x32x32xf32> to vector<32x32xf32>
    %cst_74 = arith.constant dense<0.000000e+00> : vector<1x32xf32>
    %116 = tpu.matmul %113, %115, %cst_74 {dimension_numbers = #tpu.dot_dimension_numbers<[1], [0], [0], [1], [0, 0, 1, 1], [], []>} : vector<1x32xf32>, vector<32x32xf32>, vector<1x32xf32> -> vector<1x32xf32>
    %117 = arith.addf %112, %116 : vector<1x32xf32>
    %118 = vector.extract_strided_slice %101 {offsets = [3, 0], sizes = [1, 32], strides = [1, 1]} : vector<8x32xf32> to vector<1x32xf32>
    %c3 = arith.constant 3 : index
    %c0_75 = arith.constant 0 : index
    %c0_76 = arith.constant 0 : index
    %119 = vector.load %arg20[%c3, %c0_75, %c0_76] : memref<8x32x32xf32, #tpu.memory_space<vmem>>, vector<1x32x32xf32>
    %120 = vector.shape_cast %119 : vector<1x32x32xf32> to vector<32x32xf32>
    %cst_77 = arith.constant dense<0.000000e+00> : vector<1x32xf32>
    %121 = tpu.matmul %118, %120, %cst_77 {dimension_numbers = #tpu.dot_dimension_numbers<[1], [0], [0], [1], [0, 0, 1, 1], [], []>} : vector<1x32xf32>, vector<32x32xf32>, vector<1x32xf32> -> vector<1x32xf32>
    %122 = arith.addf %117, %121 : vector<1x32xf32>
    %123 = vector.extract_strided_slice %101 {offsets = [4, 0], sizes = [1, 32], strides = [1, 1]} : vector<8x32xf32> to vector<1x32xf32>
    %c4 = arith.constant 4 : index
    %c0_78 = arith.constant 0 : index
    %c0_79 = arith.constant 0 : index
    %124 = vector.load %arg20[%c4, %c0_78, %c0_79] : memref<8x32x32xf32, #tpu.memory_space<vmem>>, vector<1x32x32xf32>
    %125 = vector.shape_cast %124 : vector<1x32x32xf32> to vector<32x32xf32>
    %cst_80 = arith.constant dense<0.000000e+00> : vector<1x32xf32>
    %126 = tpu.matmul %123, %125, %cst_80 {dimension_numbers = #tpu.dot_dimension_numbers<[1], [0], [0], [1], [0, 0, 1, 1], [], []>} : vector<1x32xf32>, vector<32x32xf32>, vector<1x32xf32> -> vector<1x32xf32>
    %127 = arith.addf %122, %126 : vector<1x32xf32>
    %128 = vector.extract_strided_slice %101 {offsets = [5, 0], sizes = [1, 32], strides = [1, 1]} : vector<8x32xf32> to vector<1x32xf32>
    %c5 = arith.constant 5 : index
    %c0_81 = arith.constant 0 : index
    %c0_82 = arith.constant 0 : index
    %129 = vector.load %arg20[%c5, %c0_81, %c0_82] : memref<8x32x32xf32, #tpu.memory_space<vmem>>, vector<1x32x32xf32>
    %130 = vector.shape_cast %129 : vector<1x32x32xf32> to vector<32x32xf32>
    %cst_83 = arith.constant dense<0.000000e+00> : vector<1x32xf32>
    %131 = tpu.matmul %128, %130, %cst_83 {dimension_numbers = #tpu.dot_dimension_numbers<[1], [0], [0], [1], [0, 0, 1, 1], [], []>} : vector<1x32xf32>, vector<32x32xf32>, vector<1x32xf32> -> vector<1x32xf32>
    %132 = arith.addf %127, %131 : vector<1x32xf32>
    %133 = vector.extract_strided_slice %101 {offsets = [6, 0], sizes = [1, 32], strides = [1, 1]} : vector<8x32xf32> to vector<1x32xf32>
    %c6 = arith.constant 6 : index
    %c0_84 = arith.constant 0 : index
    %c0_85 = arith.constant 0 : index
    %134 = vector.load %arg20[%c6, %c0_84, %c0_85] : memref<8x32x32xf32, #tpu.memory_space<vmem>>, vector<1x32x32xf32>
    %135 = vector.shape_cast %134 : vector<1x32x32xf32> to vector<32x32xf32>
    %cst_86 = arith.constant dense<0.000000e+00> : vector<1x32xf32>
    %136 = tpu.matmul %133, %135, %cst_86 {dimension_numbers = #tpu.dot_dimension_numbers<[1], [0], [0], [1], [0, 0, 1, 1], [], []>} : vector<1x32xf32>, vector<32x32xf32>, vector<1x32xf32> -> vector<1x32xf32>
    %137 = arith.addf %132, %136 : vector<1x32xf32>
    %138 = vector.extract_strided_slice %101 {offsets = [7, 0], sizes = [1, 32], strides = [1, 1]} : vector<8x32xf32> to vector<1x32xf32>
    %c7 = arith.constant 7 : index
    %c0_87 = arith.constant 0 : index
    %c0_88 = arith.constant 0 : index
    %139 = vector.load %arg20[%c7, %c0_87, %c0_88] : memref<8x32x32xf32, #tpu.memory_space<vmem>>, vector<1x32x32xf32>
    %140 = vector.shape_cast %139 : vector<1x32x32xf32> to vector<32x32xf32>
    %cst_89 = arith.constant dense<0.000000e+00> : vector<1x32xf32>
    %141 = tpu.matmul %138, %140, %cst_89 {dimension_numbers = #tpu.dot_dimension_numbers<[1], [0], [0], [1], [0, 0, 1, 1], [], []>} : vector<1x32xf32>, vector<32x32xf32>, vector<1x32xf32> -> vector<1x32xf32>
    %142 = arith.addf %137, %141 : vector<1x32xf32>
    %c0_90 = arith.constant 0 : index
    %c0_91 = arith.constant 0 : index
    %c0_92 = arith.constant 0 : index
    %143 = vector.load %arg3[%c0_90, %c0_91, %c0_92] : memref<1x1x6xf32, #tpu.memory_space<vmem>>, vector<1x1x6xf32>
    %144 = vector.shape_cast %143 : vector<1x1x6xf32> to vector<1x6xf32>
    %c0_93 = arith.constant 0 : index
    %c0_94 = arith.constant 0 : index
    %145 = vector.load %arg22[%c0_93, %c0_94] : memref<6x6xf32, #tpu.memory_space<vmem>>, vector<6x6xf32>
    %cst_95 = arith.constant dense<0.000000e+00> : vector<1x6xf32>
    %146 = tpu.matmul %144, %145, %cst_95 {dimension_numbers = #tpu.dot_dimension_numbers<[1], [0], [0], [1], [0, 0, 1, 1], [], []>} : vector<1x6xf32>, vector<6x6xf32>, vector<1x6xf32> -> vector<1x6xf32>
    %c0_96 = arith.constant 0 : index
    %c0_97 = arith.constant 0 : index
    %147 = vector.load %arg23[%c0_96, %c0_97] : memref<1x6xf32, #tpu.memory_space<vmem>>, vector<1x6xf32>
    %148 = arith.addf %146, %147 : vector<1x6xf32>
    %cst_98 = arith.constant 0.000000e+00 : f32
    %149 = vector.broadcast %cst_98 : f32 to vector<1x6xf32>
    %150 = arith.cmpf ogt, %148, %149 : vector<1x6xf32>
    %151 = math.exp %148 : vector<1x6xf32>
    %cst_99 = arith.constant 1.000000e+00 : f32
    %152 = vector.broadcast %cst_99 : f32 to vector<1x6xf32>
    %153 = arith.subf %151, %152 : vector<1x6xf32>
    %154 = arith.select %150, %148, %153 : vector<1x6xi1>, vector<1x6xf32>
    %c0_100 = arith.constant 0 : index
    %c0_101 = arith.constant 0 : index
    %155 = vector.load %arg24[%c0_100, %c0_101] : memref<1x6xf32, #tpu.memory_space<vmem>>, vector<1x6xf32>
    %c0_102 = arith.constant 0 : index
    %c0_103 = arith.constant 0 : index
    %156 = vector.load %arg25[%c0_102, %c0_103] : memref<1x6xf32, #tpu.memory_space<vmem>>, vector<1x6xf32>
    %cst_104 = arith.constant dense<0.000000e+00> : vector<1xf32>
    %157 = vector.multi_reduction <add>, %154, %cst_104 [1] : vector<1x6xf32> to vector<1xf32>
    %158 = vector.shape_cast %157 : vector<1xf32> to vector<1x1xf32>
    %cst_105 = arith.constant 6.000000e+00 : f32
    %159 = vector.broadcast %cst_105 : f32 to vector<1x1xf32>
    %160 = arith.divf %158, %159 : vector<1x1xf32>
    %161 = vector.broadcast %160 : vector<1x1xf32> to vector<1x6xf32>
    %162 = arith.subf %154, %161 : vector<1x6xf32>
    %163 = arith.mulf %162, %162 : vector<1x6xf32>
    %cst_106 = arith.constant dense<0.000000e+00> : vector<1xf32>
    %164 = vector.multi_reduction <add>, %163, %cst_106 [1] : vector<1x6xf32> to vector<1xf32>
    %165 = vector.shape_cast %164 : vector<1xf32> to vector<1x1xf32>
    %cst_107 = arith.constant 6.000000e+00 : f32
    %166 = vector.broadcast %cst_107 : f32 to vector<1x1xf32>
    %167 = arith.divf %165, %166 : vector<1x1xf32>
    %168 = vector.broadcast %160 : vector<1x1xf32> to vector<1x6xf32>
    %169 = arith.subf %154, %168 : vector<1x6xf32>
    %cst_108 = arith.constant 9.99999974E-6 : f32
    %170 = vector.broadcast %cst_108 : f32 to vector<1x1xf32>
    %171 = arith.addf %167, %170 : vector<1x1xf32>
    %172 = math.rsqrt %171 : vector<1x1xf32>
    %173 = vector.broadcast %172 : vector<1x1xf32> to vector<1x6xf32>
    %174 = arith.mulf %169, %173 : vector<1x6xf32>
    %175 = arith.mulf %174, %155 : vector<1x6xf32>
    %176 = arith.addf %175, %156 : vector<1x6xf32>
    %c0_109 = arith.constant 0 : index
    %c0_110 = arith.constant 0 : index
    %c0_111 = arith.constant 0 : index
    %177 = vector.load %arg2[%c0_109, %c0_110, %c0_111] : memref<1x1x32xf32, #tpu.memory_space<vmem>>, vector<1x1x32xf32>
    %178 = vector.shape_cast %177 : vector<1x1x32xf32> to vector<1x32xf32>
    %179 = tpu.concatenate %178, %142, %176 in 1 : vector<1x32xf32>, vector<1x32xf32>, vector<1x6xf32> -> vector<1x70xf32>
    %c0_112 = arith.constant 0 : index
    %c0_113 = arith.constant 0 : index
    %c0_114 = arith.constant 0 : index
    %180 = vector.load %arg32[%c0_112, %c0_113, %c0_114] : memref<1x1x70xf32, #tpu.memory_space<vmem>>, vector<1x1x70xf32>
    %181 = vector.shape_cast %180 : vector<1x1x70xf32> to vector<1x70xf32>
    %182 = vector.shape_cast %179 : vector<1x70xf32> to vector<1x1x70xf32>
    tpu.vector_store %arg32[%c0_112, %c0_113, %c0_114], %182 {strides = array<i32>} : memref<1x1x70xf32, #tpu.memory_space<vmem>>, vector<1x1x70xf32>,
    %c0_115 = arith.constant 0 : index
    %c0_116 = arith.constant 0 : index
    %183 = vector.load %arg26[%c0_115, %c0_116] : memref<70x16xf32, #tpu.memory_space<vmem>>, vector<70x16xf32>
    %c0_117 = arith.constant 0 : index
    %c0_118 = arith.constant 0 : index
    %184 = vector.load %arg27[%c0_117, %c0_118] : memref<1x16xf32, #tpu.memory_space<vmem>>, vector<1x16xf32>
    %cst_119 = arith.constant dense<0.000000e+00> : vector<1x16xf32>
    %185 = tpu.matmul %179, %183, %cst_119 {dimension_numbers = #tpu.dot_dimension_numbers<[1], [0], [0], [1], [0, 0, 1, 1], [], []>} : vector<1x70xf32>, vector<70x16xf32>, vector<1x16xf32> -> vector<1x16xf32>
    %186 = arith.addf %185, %184 : vector<1x16xf32>
    %cst_120 = arith.constant 0.000000e+00 : f32
    %187 = vector.broadcast %cst_120 : f32 to vector<1x16xf32>
    %188 = arith.maximumf %186, %187 : vector<1x16xf32>
    %c0_121 = arith.constant 0 : index
    %c0_122 = arith.constant 0 : index
    %189 = vector.load %arg28[%c0_121, %c0_122] : memref<16x16xf32, #tpu.memory_space<vmem>>, vector<16x16xf32>
    %c0_123 = arith.constant 0 : index
    %c0_124 = arith.constant 0 : index
    %190 = vector.load %arg29[%c0_123, %c0_124] : memref<1x16xf32, #tpu.memory_space<vmem>>, vector<1x16xf32>
    %cst_125 = arith.constant dense<0.000000e+00> : vector<1x16xf32>
    %191 = tpu.matmul %188, %189, %cst_125 {dimension_numbers = #tpu.dot_dimension_numbers<[1], [0], [0], [1], [0, 0, 1, 1], [], []>} : vector<1x16xf32>, vector<16x16xf32>, vector<1x16xf32> -> vector<1x16xf32>
    %192 = arith.addf %191, %190 : vector<1x16xf32>
    %cst_126 = arith.constant 0.000000e+00 : f32
    %193 = vector.broadcast %cst_126 : f32 to vector<1x16xf32>
    %194 = arith.maximumf %192, %193 : vector<1x16xf32>
    %c0_127 = arith.constant 0 : index
    %c0_128 = arith.constant 0 : index
    %195 = vector.load %arg30[%c0_127, %c0_128] : memref<16x4xf32, #tpu.memory_space<vmem>>, vector<16x4xf32>
    %cst_129 = arith.constant dense<0.000000e+00> : vector<1x4xf32>
    %196 = tpu.matmul %194, %195, %cst_129 {dimension_numbers = #tpu.dot_dimension_numbers<[1], [0], [0], [1], [0, 0, 1, 1], [], []>} : vector<1x16xf32>, vector<16x4xf32>, vector<1x4xf32> -> vector<1x4xf32>
    %c0_130 = arith.constant 0 : index
    %c0_131 = arith.constant 0 : index
    %197 = vector.load %arg31[%c0_130, %c0_131] : memref<1x4xf32, #tpu.memory_space<vmem>>, vector<1x4xf32>
    %198 = arith.addf %196, %197 : vector<1x4xf32>
    %c0_132 = arith.constant 0 : index
    %c0_133 = arith.constant 0 : index
    %c0_134 = arith.constant 0 : index
    %199 = vector.load %arg33[%c0_132, %c0_133, %c0_134] : memref<1x1x4xf32, #tpu.memory_space<vmem>>, vector<1x1x4xf32>
    %200 = vector.shape_cast %199 : vector<1x1x4xf32> to vector<1x4xf32>
    %201 = vector.shape_cast %198 : vector<1x4xf32> to vector<1x1x4xf32>
    tpu.vector_store %arg33[%c0_132, %c0_133, %c0_134], %201 {strides = array<i32>} : memref<1x1x4xf32, #tpu.memory_space<vmem>>, vector<1x1x4xf32>,
    return
  }
  func.func @transform_0(%arg0: i32) -> (i32, i32, i32) {
    %c0_i32 = arith.constant 0 : i32
    %c0_i32_0 = arith.constant 0 : i32
    %c0_i32_1 = arith.constant 0 : i32
    return %arg0, %c0_i32, %c0_i32_0 : i32, i32, i32
  }
  func.func @transform_1(%arg0: i32) -> (i32, i32, i32) {
    %c0_i32 = arith.constant 0 : i32
    %c0_i32_0 = arith.constant 0 : i32
    %c0_i32_1 = arith.constant 0 : i32
    return %arg0, %c0_i32, %c0_i32_0 : i32, i32, i32
  }
  func.func @transform_2(%arg0: i32) -> (i32, i32, i32) {
    %c0_i32 = arith.constant 0 : i32
    %c0_i32_0 = arith.constant 0 : i32
    %c0_i32_1 = arith.constant 0 : i32
    return %arg0, %c0_i32, %c0_i32_0 : i32, i32, i32
  }
  func.func @transform_3(%arg0: i32) -> (i32, i32, i32) {
    %c0_i32 = arith.constant 0 : i32
    %c0_i32_0 = arith.constant 0 : i32
    %c0_i32_1 = arith.constant 0 : i32
    %c0_i32_2 = arith.constant 0 : i32
    return %c0_i32, %c0_i32_0, %c0_i32_1 : i32, i32, i32
  }
  func.func @transform_4(%arg0: i32) -> (i32, i32, i32) {
    %c0_i32 = arith.constant 0 : i32
    %c0_i32_0 = arith.constant 0 : i32
    %c0_i32_1 = arith.constant 0 : i32
    %c0_i32_2 = arith.constant 0 : i32
    return %c0_i32, %c0_i32_0, %c0_i32_1 : i32, i32, i32
  }
  func.func @transform_5(%arg0: i32) -> (i32, i32, i32) {
    %c0_i32 = arith.constant 0 : i32
    %c0_i32_0 = arith.constant 0 : i32
    %c0_i32_1 = arith.constant 0 : i32
    %c0_i32_2 = arith.constant 0 : i32
    return %c0_i32, %c0_i32_0, %c0_i32_1 : i32, i32, i32
  }
  func.func @transform_6(%arg0: i32) -> (i32, i32, i32) {
    %c0_i32 = arith.constant 0 : i32
    %c0_i32_0 = arith.constant 0 : i32
    %c0_i32_1 = arith.constant 0 : i32
    %c0_i32_2 = arith.constant 0 : i32
    return %c0_i32, %c0_i32_0, %c0_i32_1 : i32, i32, i32
  }
  func.func @transform_7(%arg0: i32) -> (i32, i32, i32) {
    %c0_i32 = arith.constant 0 : i32
    %c0_i32_0 = arith.constant 0 : i32
    %c0_i32_1 = arith.constant 0 : i32
    %c0_i32_2 = arith.constant 0 : i32
    return %c0_i32, %c0_i32_0, %c0_i32_1 : i32, i32, i32
  }
  func.func @transform_8(%arg0: i32) -> (i32, i32, i32) {
    %c0_i32 = arith.constant 0 : i32
    %c0_i32_0 = arith.constant 0 : i32
    %c0_i32_1 = arith.constant 0 : i32
    %c0_i32_2 = arith.constant 0 : i32
    return %c0_i32, %c0_i32_0, %c0_i32_1 : i32, i32, i32
  }
  func.func @transform_9(%arg0: i32) -> (i32, i32, i32) {
    %c0_i32 = arith.constant 0 : i32
    %c0_i32_0 = arith.constant 0 : i32
    %c0_i32_1 = arith.constant 0 : i32
    %c0_i32_2 = arith.constant 0 : i32
    return %c0_i32, %c0_i32_0, %c0_i32_1 : i32, i32, i32
  }
  func.func @transform_10(%arg0: i32) -> (i32, i32) {
    %c0_i32 = arith.constant 0 : i32
    %c0_i32_0 = arith.constant 0 : i32
    %c0_i32_1 = arith.constant 0 : i32
    return %c0_i32, %c0_i32_0 : i32, i32
  }
  func.func @transform_11(%arg0: i32) -> (i32, i32) {
    %c0_i32 = arith.constant 0 : i32
    %c0_i32_0 = arith.constant 0 : i32
    %c0_i32_1 = arith.constant 0 : i32
    return %c0_i32, %c0_i32_0 : i32, i32
  }
  func.func @transform_12(%arg0: i32) -> (i32, i32) {
    %c0_i32 = arith.constant 0 : i32
    %c0_i32_0 = arith.constant 0 : i32
    %c0_i32_1 = arith.constant 0 : i32
    return %c0_i32, %c0_i32_0 : i32, i32
  }
  func.func @transform_13(%arg0: i32) -> (i32, i32) {
    %c0_i32 = arith.constant 0 : i32
    %c0_i32_0 = arith.constant 0 : i32
    %c0_i32_1 = arith.constant 0 : i32
    return %c0_i32, %c0_i32_0 : i32, i32
  }
  func.func @transform_14(%arg0: i32) -> (i32, i32) {
    %c0_i32 = arith.constant 0 : i32
    %c0_i32_0 = arith.constant 0 : i32
    %c0_i32_1 = arith.constant 0 : i32
    return %c0_i32, %c0_i32_0 : i32, i32
  }
  func.func @transform_15(%arg0: i32) -> (i32, i32) {
    %c0_i32 = arith.constant 0 : i32
    %c0_i32_0 = arith.constant 0 : i32
    %c0_i32_1 = arith.constant 0 : i32
    return %c0_i32, %c0_i32_0 : i32, i32
  }
  func.func @transform_16(%arg0: i32) -> (i32, i32) {
    %c0_i32 = arith.constant 0 : i32
    %c0_i32_0 = arith.constant 0 : i32
    %c0_i32_1 = arith.constant 0 : i32
    return %c0_i32, %c0_i32_0 : i32, i32
  }
  func.func @transform_17(%arg0: i32) -> (i32, i32) {
    %c0_i32 = arith.constant 0 : i32
    %c0_i32_0 = arith.constant 0 : i32
    %c0_i32_1 = arith.constant 0 : i32
    return %c0_i32, %c0_i32_0 : i32, i32
  }
  func.func @transform_18(%arg0: i32) -> (i32, i32) {
    %c0_i32 = arith.constant 0 : i32
    %c0_i32_0 = arith.constant 0 : i32
    %c0_i32_1 = arith.constant 0 : i32
    return %c0_i32, %c0_i32_0 : i32, i32
  }
  func.func @transform_19(%arg0: i32) -> (i32, i32, i32) {
    %c0_i32 = arith.constant 0 : i32
    %c0_i32_0 = arith.constant 0 : i32
    %c0_i32_1 = arith.constant 0 : i32
    %c0_i32_2 = arith.constant 0 : i32
    return %c0_i32, %c0_i32_0, %c0_i32_1 : i32, i32, i32
  }
  func.func @transform_20(%arg0: i32) -> (i32, i32) {
    %c0_i32 = arith.constant 0 : i32
    %c0_i32_0 = arith.constant 0 : i32
    %c0_i32_1 = arith.constant 0 : i32
    return %c0_i32, %c0_i32_0 : i32, i32
  }
  func.func @transform_21(%arg0: i32) -> (i32, i32) {
    %c0_i32 = arith.constant 0 : i32
    %c0_i32_0 = arith.constant 0 : i32
    %c0_i32_1 = arith.constant 0 : i32
    return %c0_i32, %c0_i32_0 : i32, i32
  }
  func.func @transform_22(%arg0: i32) -> (i32, i32) {
    %c0_i32 = arith.constant 0 : i32
    %c0_i32_0 = arith.constant 0 : i32
    %c0_i32_1 = arith.constant 0 : i32
    return %c0_i32, %c0_i32_0 : i32, i32
  }
  func.func @transform_23(%arg0: i32) -> (i32, i32) {
    %c0_i32 = arith.constant 0 : i32
    %c0_i32_0 = arith.constant 0 : i32
    %c0_i32_1 = arith.constant 0 : i32
    return %c0_i32, %c0_i32_0 : i32, i32
  }
  func.func @transform_24(%arg0: i32) -> (i32, i32) {
    %c0_i32 = arith.constant 0 : i32
    %c0_i32_0 = arith.constant 0 : i32
    %c0_i32_1 = arith.constant 0 : i32
    return %c0_i32, %c0_i32_0 : i32, i32
  }
  func.func @transform_25(%arg0: i32) -> (i32, i32) {
    %c0_i32 = arith.constant 0 : i32
    %c0_i32_0 = arith.constant 0 : i32
    %c0_i32_1 = arith.constant 0 : i32
    return %c0_i32, %c0_i32_0 : i32, i32
  }
  func.func @transform_26(%arg0: i32) -> (i32, i32) {
    %c0_i32 = arith.constant 0 : i32
    %c0_i32_0 = arith.constant 0 : i32
    %c0_i32_1 = arith.constant 0 : i32
    return %c0_i32, %c0_i32_0 : i32, i32
  }
  func.func @transform_27(%arg0: i32) -> (i32, i32) {
    %c0_i32 = arith.constant 0 : i32
    %c0_i32_0 = arith.constant 0 : i32
    %c0_i32_1 = arith.constant 0 : i32
    return %c0_i32, %c0_i32_0 : i32, i32
  }
  func.func @transform_28(%arg0: i32) -> (i32, i32) {
    %c0_i32 = arith.constant 0 : i32
    %c0_i32_0 = arith.constant 0 : i32
    %c0_i32_1 = arith.constant 0 : i32
    return %c0_i32, %c0_i32_0 : i32, i32
  }
  func.func @transform_29(%arg0: i32) -> (i32, i32) {
    %c0_i32 = arith.constant 0 : i32
    %c0_i32_0 = arith.constant 0 : i32
    %c0_i32_1 = arith.constant 0 : i32
    return %c0_i32, %c0_i32_0 : i32, i32
  }
  func.func @transform_30(%arg0: i32) -> (i32, i32) {
    %c0_i32 = arith.constant 0 : i32
    %c0_i32_0 = arith.constant 0 : i32
    %c0_i32_1 = arith.constant 0 : i32
    return %c0_i32, %c0_i32_0 : i32, i32
  }
  func.func @transform_31(%arg0: i32) -> (i32, i32, i32) {
    %c0_i32 = arith.constant 0 : i32
    %c0_i32_0 = arith.constant 0 : i32
    %c0_i32_1 = arith.constant 0 : i32
    return %arg0, %c0_i32, %c0_i32_0 : i32, i32, i32
  }
  func.func @transform_32(%arg0: i32) -> (i32, i32, i32) {
    %c0_i32 = arith.constant 0 : i32
    %c0_i32_0 = arith.constant 0 : i32
    %c0_i32_1 = arith.constant 0 : i32
    return %arg0, %c0_i32, %c0_i32_0 : i32, i32, i32
  }
}

</mosaic_0001>

<llo_original>
// kernel: icc_tf_forward.1
$region0: #{icc_tf_forward.1}
  #allocation0 [shape = 'u32[]', space=smem, size = 0x4, offset = 0x4, fixed_abs, tag = 'smem constant byte address 0x4 - core index']
  #allocation1 [shape = 'u32[144,128]{1,0:T(1,128)}', space=vmem, size = 0x12000, scoped, tag = 'internal scratch']
  %s0 = inlined_call_operand.smem [shape: u32[33], index: -1, kind: input, shape index: {}]
  %s1 = sld [smem:[%s0]]
  %s2 = scalar_lea.smem %s0, 1
  %s3 = sld [smem:[%s2]]
  %s4 = scalar_lea.smem %s0, 2
  %s5 = sld [smem:[%s4]]
  %s6 = scalar_lea.smem %s0, 3
  %s7 = sld [smem:[%s6]]
  %s8 = scalar_lea.smem %s0, 4
  %s9 = sld [smem:[%s8]]
  %s10 = scalar_lea.smem %s0, 5
  %s11 = sld [smem:[%s10]]
  %s12 = scalar_lea.smem %s0, 6
  %s13 = sld [smem:[%s12]]
  %s14 = scalar_lea.smem %s0, 7
  %s15 = sld [smem:[%s14]]
  %s16 = scalar_lea.smem %s0, 8
  %s17 = sld [smem:[%s16]]
  %s18 = scalar_lea.smem %s0, 9
  %s19 = sld [smem:[%s18]]
  %s20 = scalar_lea.smem %s0, 10
  %s21 = sld [smem:[%s20]]
  %s22 = scalar_lea.smem %s0, 11
  %s23 = sld [smem:[%s22]]
  %s24 = scalar_lea.smem %s0, 12
  %s25 = sld [smem:[%s24]]
  %s26 = scalar_lea.smem %s0, 13
  %s27 = sld [smem:[%s26]]
  %s28 = scalar_lea.smem %s0, 14
  %s29 = sld [smem:[%s28]]
  %s30 = scalar_lea.smem %s0, 15
  %s31 = sld [smem:[%s30]]
  %s32 = scalar_lea.smem %s0, 16
  %s33 = sld [smem:[%s32]]
  %s34 = scalar_lea.smem %s0, 17
  %s35 = sld [smem:[%s34]]
  %s36 = scalar_lea.smem %s0, 18
  %s37 = sld [smem:[%s36]]
  %s38 = scalar_lea.smem %s0, 19
  %s39 = sld [smem:[%s38]]
  %s40 = scalar_lea.smem %s0, 20
  %s41 = sld [smem:[%s40]]
  %s42 = scalar_lea.smem %s0, 21
  %s43 = sld [smem:[%s42]]
  %s44 = scalar_lea.smem %s0, 22
  %s45 = sld [smem:[%s44]]
  %s46 = scalar_lea.smem %s0, 23
  %s47 = sld [smem:[%s46]]
  %s48 = scalar_lea.smem %s0, 24
  %s49 = sld [smem:[%s48]]
  %s50 = scalar_lea.smem %s0, 25
  %s51 = sld [smem:[%s50]]
  %s52 = scalar_lea.smem %s0, 26
  %s53 = sld [smem:[%s52]]
  %s54 = scalar_lea.smem %s0, 27
  %s55 = sld [smem:[%s54]]
  %s56 = scalar_lea.smem %s0, 28
  %s57 = sld [smem:[%s56]]
  %s58 = scalar_lea.smem %s0, 29
  %s59 = sld [smem:[%s58]]
  %s60 = scalar_lea.smem %s0, 30
  %s61 = sld [smem:[%s60]]
  %s62 = scalar_lea.smem %s0, 31
  %s63 = sld [smem:[%s62]]
  %s64 = scalar_lea.smem %s0, 32
  %s65 = sld [smem:[%s64]]
  %66 = xla_tuple %s63, %s65
  %s67 = sld [smem:[#allocation0]]
  $region165: #{icc_tf_forward.1} parent=0
    _
  %s69 = ssub.s32 1, %s67
  %s70 = scalar_select 0, %s69, %s67
  $region1: #{icc_tf_forward.1} parent=0
    #allocation2 [shape = 'u8[1024]{0}', space=vmem, size = 0x400, scoped, tag = 'output window, operand 0']
    #allocation3 [shape = 's32[2]{0}', space=sflag, size = 0x8, scoped, tag = 'scoped memory for icc_tf_forward.1']
    #allocation4 [shape = 'u8[1024]{0}', space=vmem, size = 0x400, scoped, tag = 'output window, operand 1']
    #allocation5 [shape = 's32[2]{0}', space=sflag, size = 0x8, scoped, tag = 'scoped memory for icc_tf_forward.1']
    %71 = vsyncpa [#allocation3], 0
    %s72 = scalar_lea.sflag [#allocation3], 1
    %73 = vsyncpa %s72, 0
    %74 = vsyncpa [#allocation5], 0
    %s75 = scalar_lea.sflag [#allocation5], 1
    %76 = vsyncpa %s75, 0
    loop: start=0, step=1, limit=4
    $region2: #{icc_tf_forward.1} parent=1 // loop_pre_header
      _
    $region3: #{icc_tf_forward.1} parent=1 // loop_header
      %s78 = sphi 0, %s82
      %p79 = scmp.ge.s32.totalorder %s78, 4
      %s88 = sphi 0, %s90
      %s91 = sphi 0, %s88
      %s92 = sphi 0, %s91
      %s108 = sphi 0, %s92
      %s114 = sphi 0, %s116
      %s117 = sphi 0, %s114
      %s118 = sphi 0, %s117
      %s134 = sphi 0, %s118
      %s140 = sphi 0, %s142
      %s143 = sphi 0, %s140
      %s144 = sphi 0, %s143
      %s160 = sphi 0, %s144
      %s164 = sphi 0, %s164
      %s166 = sphi 0, %s164
      %s167 = sphi 0, %s166
      %s181 = sphi 0, %s167
      %s185 = sphi 0, %s185
      %s187 = sphi 0, %s185
      %s188 = sphi 0, %s187
      %s202 = sphi 0, %s188
      %s206 = sphi 0, %s206
      %s208 = sphi 0, %s206
      %s209 = sphi 0, %s208
      %s223 = sphi 0, %s209
      %s227 = sphi 0, %s227
      %s229 = sphi 0, %s227
      %s230 = sphi 0, %s229
      %s244 = sphi 0, %s230
      %s248 = sphi 0, %s248
      %s250 = sphi 0, %s248
      %s251 = sphi 0, %s250
      %s265 = sphi 0, %s251
      %s269 = sphi 0, %s269
      %s271 = sphi 0, %s269
      %s272 = sphi 0, %s271
      %s286 = sphi 0, %s272
      %s290 = sphi 0, %s290
      %s292 = sphi 0, %s290
      %s293 = sphi 0, %s292
      %s307 = sphi 0, %s293
      %s311 = sphi 0, %s311
      %s313 = sphi 0, %s311
      %s314 = sphi 0, %s313
      %s328 = sphi 0, %s314
      %s332 = sphi 0, %s332
      %s334 = sphi 0, %s332
      %s335 = sphi 0, %s334
      %s349 = sphi 0, %s335
      %s353 = sphi 0, %s353
      %s355 = sphi 0, %s353
      %s356 = sphi 0, %s355
      %s370 = sphi 0, %s356
      %s374 = sphi 0, %s374
      %s376 = sphi 0, %s374
      %s377 = sphi 0, %s376
      %s391 = sphi 0, %s377
      %s395 = sphi 0, %s395
      %s397 = sphi 0, %s395
      %s398 = sphi 0, %s397
      %s412 = sphi 0, %s398
      %s416 = sphi 0, %s416
      %s418 = sphi 0, %s416
      %s419 = sphi 0, %s418
      %s433 = sphi 0, %s419
      %s437 = sphi 0, %s437
      %s439 = sphi 0, %s437
      %s440 = sphi 0, %s439
      %s454 = sphi 0, %s440
      %s458 = sphi 0, %s458
      %s460 = sphi 0, %s458
      %s461 = sphi 0, %s460
      %s475 = sphi 0, %s461
      %s479 = sphi 0, %s479
      %s481 = sphi 0, %s479
      %s482 = sphi 0, %s481
      %s496 = sphi 0, %s482
      %s500 = sphi 0, %s500
      %s502 = sphi 0, %s500
      %s503 = sphi 0, %s502
      %s517 = sphi 0, %s503
      %s521 = sphi 0, %s521
      %s523 = sphi 0, %s521
      %s524 = sphi 0, %s523
      %s538 = sphi 0, %s524
      %s542 = sphi 0, %s542
      %s544 = sphi 0, %s542
      %s545 = sphi 0, %s544
      %s559 = sphi 0, %s545
      %s563 = sphi 0, %s563
      %s565 = sphi 0, %s563
      %s566 = sphi 0, %s565
      %s580 = sphi 0, %s566
      %s584 = sphi 0, %s584
      %s586 = sphi 0, %s584
      %s587 = sphi 0, %s586
      %s601 = sphi 0, %s587
      %s605 = sphi 0, %s605
      %s607 = sphi 0, %s605
      %s608 = sphi 0, %s607
      %s622 = sphi 0, %s608
      %s626 = sphi 0, %s626
      %s628 = sphi 0, %s626
      %s629 = sphi 0, %s628
      %s643 = sphi 0, %s629
      %s647 = sphi 0, %s647
      %s649 = sphi 0, %s647
      %s650 = sphi 0, %s649
      %s664 = sphi 0, %s650
      %s668 = sphi 0, %s668
      %s670 = sphi 0, %s668
      %s671 = sphi 0, %s670
      %s685 = sphi 0, %s671
      %s689 = sphi 0, %s689
      %s691 = sphi 0, %s689
      %s692 = sphi 0, %s691
      %s706 = sphi 0, %s692
      %s710 = sphi 0, %s710
      %s712 = sphi 0, %s710
      %s713 = sphi 0, %s712
      %s727 = sphi 0, %s713
      %s731 = sphi 0, %s731
      %s733 = sphi 0, %s731
      %s734 = sphi 0, %s733
      %s748 = sphi 0, %s734
      %s754 = sphi 0, %s756
      %s757 = sphi 0, %s754
      %s758 = sphi 0, %s757
      %s774 = sphi 0, %s758
      %s780 = sphi 0, %s782
      %s783 = sphi 0, %s780
      %s784 = sphi 0, %s783
      %s800 = sphi 0, %s784
    $region4: #{icc_tf_forward.1} parent=1 // loop_header_branch
      %81 = sbr.rel (%p79) target = $region8
    $region5: #{icc_tf_forward.1} parent=1 // loop_body
      %s83 = ssub.s32 %s78, 1
      %s84 = ssub.s32 %s78, 2
      %s85 = sadd.s32 %s78, 1
      %s86 = ssub.s32 %s78, %s85
      %p87 = scmp.eq.s32.totalorder %s86, 0
      %s89 = sadd.s32 %s88, 1
      %s90 = scalar_select %p87, %s88, %s89
      %p93 = pneg %p87
      %p94 = scmp.eq.s32.totalorder %s78, 1
      %p95 = por %p93, %p94
      %p96 = scmp.ne.s32.totalorder %s88, %s91
      %p97 = scmp.eq.s32.totalorder %s78, 0
      %p98 = por %p96, %p97
      %p99 = scmp.ne.s32.totalorder %s88, %s91
      %p100 = scmp.eq.s32.totalorder %s83, 1
      %p101 = por %p99, %p100
      %p102 = scmp.ne.s32.totalorder %s91, %s92
      %p103 = scmp.eq.s32.totalorder %s83, 0
      %p104 = por %p102, %p103
      %p105 = scmp.ne.s32.totalorder %s91, %s92
      %p106 = scmp.eq.s32.totalorder %s84, 1
      %p107 = por %p105, %p106
      %p109 = scmp.ne.s32.totalorder %s92, %s108
      %p110 = scmp.eq.s32.totalorder %s84, 0
      %p111 = por %p109, %p110
      %s112 = ssub.s32 %s78, %s85
      %p113 = scmp.eq.s32.totalorder %s112, 0
      %s115 = sadd.s32 %s114, 1
      %s116 = scalar_select %p113, %s114, %s115
      %p119 = pneg %p113
      %p120 = scmp.eq.s32.totalorder %s78, 1
      %p121 = por %p119, %p120
      %p122 = scmp.ne.s32.totalorder %s114, %s117
      %p123 = scmp.eq.s32.totalorder %s78, 0
      %p124 = por %p122, %p123
      %p125 = scmp.ne.s32.totalorder %s114, %s117
      %p126 = scmp.eq.s32.totalorder %s83, 1
      %p127 = por %p125, %p126
      %p128 = scmp.ne.s32.totalorder %s117, %s118
      %p129 = scmp.eq.s32.totalorder %s83, 0
      %p130 = por %p128, %p129
      %p131 = scmp.ne.s32.totalorder %s117, %s118
      %p132 = scmp.eq.s32.totalorder %s84, 1
      %p133 = por %p131, %p132
      %p135 = scmp.ne.s32.totalorder %s118, %s134
      %p136 = scmp.eq.s32.totalorder %s84, 0
      %p137 = por %p135, %p136
      %s138 = ssub.s32 %s78, %s85
      %p139 = scmp.eq.s32.totalorder %s138, 0
      %s141 = sadd.s32 %s140, 1
      %s142 = scalar_select %p139, %s140, %s141
      %p145 = pneg %p139
      %p146 = scmp.eq.s32.totalorder %s78, 1
      %p147 = por %p145, %p146
      %p148 = scmp.ne.s32.totalorder %s140, %s143
      %p149 = scmp.eq.s32.totalorder %s78, 0
      %p150 = por %p148, %p149
      %p151 = scmp.ne.s32.totalorder %s140, %s143
      %p152 = scmp.eq.s32.totalorder %s83, 1
      %p153 = por %p151, %p152
      %p154 = scmp.ne.s32.totalorder %s143, %s144
      %p155 = scmp.eq.s32.totalorder %s83, 0
      %p156 = por %p154, %p155
      %p157 = scmp.ne.s32.totalorder %s143, %s144
      %p158 = scmp.eq.s32.totalorder %s84, 1
      %p159 = por %p157, %p158
      %p161 = scmp.ne.s32.totalorder %s144, %s160
      %p162 = scmp.eq.s32.totalorder %s84, 0
      %p163 = por %p161, %p162
      %s165 = sadd.s32 %s164, 1
      %p168 = scmp.eq.s32.totalorder %s78, 1
      %p169 = scmp.ne.s32.totalorder %s164, %s166
      %p170 = scmp.eq.s32.totalorder %s78, 0
      %p171 = por %p169, %p170
      %p172 = scmp.ne.s32.totalorder %s164, %s166
      %p173 = scmp.eq.s32.totalorder %s83, 1
      %p174 = por %p172, %p173
      %p175 = scmp.ne.s32.totalorder %s166, %s167
      %p176 = scmp.eq.s32.totalorder %s83, 0
      %p177 = por %p175, %p176
      %p178 = scmp.ne.s32.totalorder %s166, %s167
      %p179 = scmp.eq.s32.totalorder %s84, 1
      %p180 = por %p178, %p179
      %p182 = scmp.ne.s32.totalorder %s167, %s181
      %p183 = scmp.eq.s32.totalorder %s84, 0
      %p184 = por %p182, %p183
      %s186 = sadd.s32 %s185, 1
      %p189 = scmp.eq.s32.totalorder %s78, 1
      %p190 = scmp.ne.s32.totalorder %s185, %s187
      %p191 = scmp.eq.s32.totalorder %s78, 0
      %p192 = por %p190, %p191
      %p193 = scmp.ne.s32.totalorder %s185, %s187
      %p194 = scmp.eq.s32.totalorder %s83, 1
      %p195 = por %p193, %p194
      %p196 = scmp.ne.s32.totalorder %s187, %s188
      %p197 = scmp.eq.s32.totalorder %s83, 0
      %p198 = por %p196, %p197
      %p199 = scmp.ne.s32.totalorder %s187, %s188
      %p200 = scmp.eq.s32.totalorder %s84, 1
      %p201 = por %p199, %p200
      %p203 = scmp.ne.s32.totalorder %s188, %s202
      %p204 = scmp.eq.s32.totalorder %s84, 0
      %p205 = por %p203, %p204
      %s207 = sadd.s32 %s206, 1
      %p210 = scmp.eq.s32.totalorder %s78, 1
      %p211 = scmp.ne.s32.totalorder %s206, %s208
      %p212 = scmp.eq.s32.totalorder %s78, 0
      %p213 = por %p211, %p212
      %p214 = scmp.ne.s32.totalorder %s206, %s208
      %p215 = scmp.eq.s32.totalorder %s83, 1
      %p216 = por %p214, %p215
      %p217 = scmp.ne.s32.totalorder %s208, %s209
      %p218 = scmp.eq.s32.totalorder %s83, 0
      %p219 = por %p217, %p218
      %p220 = scmp.ne.s32.totalorder %s208, %s209
      %p221 = scmp.eq.s32.totalorder %s84, 1
      %p222 = por %p220, %p221
      %p224 = scmp.ne.s32.totalorder %s209, %s223
      %p225 = scmp.eq.s32.totalorder %s84, 0
      %p226 = por %p224, %p225
      %s228 = sadd.s32 %s227, 1
      %p231 = scmp.eq.s32.totalorder %s78, 1
      %p232 = scmp.ne.s32.totalorder %s227, %s229
      %p233 = scmp.eq.s32.totalorder %s78, 0
      %p234 = por %p232, %p233
      %p235 = scmp.ne.s32.totalorder %s227, %s229
      %p236 = scmp.eq.s32.totalorder %s83, 1
      %p237 = por %p235, %p236
      %p238 = scmp.ne.s32.totalorder %s229, %s230
      %p239 = scmp.eq.s32.totalorder %s83, 0
      %p240 = por %p238, %p239
      %p241 = scmp.ne.s32.totalorder %s229, %s230
      %p242 = scmp.eq.s32.totalorder %s84, 1
      %p243 = por %p241, %p242
      %p245 = scmp.ne.s32.totalorder %s230, %s244
      %p246 = scmp.eq.s32.totalorder %s84, 0
      %p247 = por %p245, %p246
      %s249 = sadd.s32 %s248, 1
      %p252 = scmp.eq.s32.totalorder %s78, 1
      %p253 = scmp.ne.s32.totalorder %s248, %s250
      %p254 = scmp.eq.s32.totalorder %s78, 0
      %p255 = por %p253, %p254
      %p256 = scmp.ne.s32.totalorder %s248, %s250
      %p257 = scmp.eq.s32.totalorder %s83, 1
      %p258 = por %p256, %p257
      %p259 = scmp.ne.s32.totalorder %s250, %s251
      %p260 = scmp.eq.s32.totalorder %s83, 0
      %p261 = por %p259, %p260
      %p262 = scmp.ne.s32.totalorder %s250, %s251
      %p263 = scmp.eq.s32.totalorder %s84, 1
      %p264 = por %p262, %p263
      %p266 = scmp.ne.s32.totalorder %s251, %s265
      %p267 = scmp.eq.s32.totalorder %s84, 0
      %p268 = por %p266, %p267
      %s270 = sadd.s32 %s269, 1
      %p273 = scmp.eq.s32.totalorder %s78, 1
      %p274 = scmp.ne.s32.totalorder %s269, %s271
      %p275 = scmp.eq.s32.totalorder %s78, 0
      %p276 = por %p274, %p275
      %p277 = scmp.ne.s32.totalorder %s269, %s271
      %p278 = scmp.eq.s32.totalorder %s83, 1
      %p279 = por %p277, %p278
      %p280 = scmp.ne.s32.totalorder %s271, %s272
      %p281 = scmp.eq.s32.totalorder %s83, 0
      %p282 = por %p280, %p281
      %p283 = scmp.ne.s32.totalorder %s271, %s272
      %p284 = scmp.eq.s32.totalorder %s84, 1
      %p285 = por %p283, %p284
      %p287 = scmp.ne.s32.totalorder %s272, %s286
      %p288 = scmp.eq.s32.totalorder %s84, 0
      %p289 = por %p287, %p288
      %s291 = sadd.s32 %s290, 1
      %p294 = scmp.eq.s32.totalorder %s78, 1
      %p295 = scmp.ne.s32.totalorder %s290, %s292
      %p296 = scmp.eq.s32.totalorder %s78, 0
      %p297 = por %p295, %p296
      %p298 = scmp.ne.s32.totalorder %s290, %s292
      %p299 = scmp.eq.s32.totalorder %s83, 1
      %p300 = por %p298, %p299
      %p301 = scmp.ne.s32.totalorder %s292, %s293
      %p302 = scmp.eq.s32.totalorder %s83, 0
      %p303 = por %p301, %p302
      %p304 = scmp.ne.s32.totalorder %s292, %s293
      %p305 = scmp.eq.s32.totalorder %s84, 1
      %p306 = por %p304, %p305
      %p308 = scmp.ne.s32.totalorder %s293, %s307
      %p309 = scmp.eq.s32.totalorder %s84, 0
      %p310 = por %p308, %p309
      %s312 = sadd.s32 %s311, 1
      %p315 = scmp.eq.s32.totalorder %s78, 1
      %p316 = scmp.ne.s32.totalorder %s311, %s313
      %p317 = scmp.eq.s32.totalorder %s78, 0
      %p318 = por %p316, %p317
      %p319 = scmp.ne.s32.totalorder %s311, %s313
      %p320 = scmp.eq.s32.totalorder %s83, 1
      %p321 = por %p319, %p320
      %p322 = scmp.ne.s32.totalorder %s313, %s314
      %p323 = scmp.eq.s32.totalorder %s83, 0
      %p324 = por %p322, %p323
      %p325 = scmp.ne.s32.totalorder %s313, %s314
      %p326 = scmp.eq.s32.totalorder %s84, 1
      %p327 = por %p325, %p326
      %p329 = scmp.ne.s32.totalorder %s314, %s328
      %p330 = scmp.eq.s32.totalorder %s84, 0
      %p331 = por %p329, %p330
      %s333 = sadd.s32 %s332, 1
      %p336 = scmp.eq.s32.totalorder %s78, 1
      %p337 = scmp.ne.s32.totalorder %s332, %s334
      %p338 = scmp.eq.s32.totalorder %s78, 0
      %p339 = por %p337, %p338
      %p340 = scmp.ne.s32.totalorder %s332, %s334
      %p341 = scmp.eq.s32.totalorder %s83, 1
      %p342 = por %p340, %p341
      %p343 = scmp.ne.s32.totalorder %s334, %s335
      %p344 = scmp.eq.s32.totalorder %s83, 0
      %p345 = por %p343, %p344
      %p346 = scmp.ne.s32.totalorder %s334, %s335
      %p347 = scmp.eq.s32.totalorder %s84, 1
      %p348 = por %p346, %p347
      %p350 = scmp.ne.s32.totalorder %s335, %s349
      %p351 = scmp.eq.s32.totalorder %s84, 0
      %p352 = por %p350, %p351
      %s354 = sadd.s32 %s353, 1
      %p357 = scmp.eq.s32.totalorder %s78, 1
      %p358 = scmp.ne.s32.totalorder %s353, %s355
      %p359 = scmp.eq.s32.totalorder %s78, 0
      %p360 = por %p358, %p359
      %p361 = scmp.ne.s32.totalorder %s353, %s355
      %p362 = scmp.eq.s32.totalorder %s83, 1
      %p363 = por %p361, %p362
      %p364 = scmp.ne.s32.totalorder %s355, %s356
      %p365 = scmp.eq.s32.totalorder %s83, 0
      %p366 = por %p364, %p365
      %p367 = scmp.ne.s32.totalorder %s355, %s356
      %p368 = scmp.eq.s32.totalorder %s84, 1
      %p369 = por %p367, %p368
      %p371 = scmp.ne.s32.totalorder %s356, %s370
      %p372 = scmp.eq.s32.totalorder %s84, 0
      %p373 = por %p371, %p372
      %s375 = sadd.s32 %s374, 1
      %p378 = scmp.eq.s32.totalorder %s78, 1
      %p379 = scmp.ne.s32.totalorder %s374, %s376
      %p380 = scmp.eq.s32.totalorder %s78, 0
      %p381 = por %p379, %p380
      %p382 = scmp.ne.s32.totalorder %s374, %s376
      %p383 = scmp.eq.s32.totalorder %s83, 1
      %p384 = por %p382, %p383
      %p385 = scmp.ne.s32.totalorder %s376, %s377
      %p386 = scmp.eq.s32.totalorder %s83, 0
      %p387 = por %p385, %p386
      %p388 = scmp.ne.s32.totalorder %s376, %s377
      %p389 = scmp.eq.s32.totalorder %s84, 1
      %p390 = por %p388, %p389
      %p392 = scmp.ne.s32.totalorder %s377, %s391
      %p393 = scmp.eq.s32.totalorder %s84, 0
      %p394 = por %p392, %p393
      %s396 = sadd.s32 %s395, 1
      %p399 = scmp.eq.s32.totalorder %s78, 1
      %p400 = scmp.ne.s32.totalorder %s395, %s397
      %p401 = scmp.eq.s32.totalorder %s78, 0
      %p402 = por %p400, %p401
      %p403 = scmp.ne.s32.totalorder %s395, %s397
      %p404 = scmp.eq.s32.totalorder %s83, 1
      %p405 = por %p403, %p404
      %p406 = scmp.ne.s32.totalorder %s397, %s398
      %p407 = scmp.eq.s32.totalorder %s83, 0
      %p408 = por %p406, %p407
      %p409 = scmp.ne.s32.totalorder %s397, %s398
      %p410 = scmp.eq.s32.totalorder %s84, 1
      %p411 = por %p409, %p410
      %p413 = scmp.ne.s32.totalorder %s398, %s412
      %p414 = scmp.eq.s32.totalorder %s84, 0
      %p415 = por %p413, %p414
      %s417 = sadd.s32 %s416, 1
      %p420 = scmp.eq.s32.totalorder %s78, 1
      %p421 = scmp.ne.s32.totalorder %s416, %s418
      %p422 = scmp.eq.s32.totalorder %s78, 0
      %p423 = por %p421, %p422
      %p424 = scmp.ne.s32.totalorder %s416, %s418
      %p425 = scmp.eq.s32.totalorder %s83, 1
      %p426 = por %p424, %p425
      %p427 = scmp.ne.s32.totalorder %s418, %s419
      %p428 = scmp.eq.s32.totalorder %s83, 0
      %p429 = por %p427, %p428
      %p430 = scmp.ne.s32.totalorder %s418, %s419
      %p431 = scmp.eq.s32.totalorder %s84, 1
      %p432 = por %p430, %p431
      %p434 = scmp.ne.s32.totalorder %s419, %s433
      %p435 = scmp.eq.s32.totalorder %s84, 0
      %p436 = por %p434, %p435
      %s438 = sadd.s32 %s437, 1
      %p441 = scmp.eq.s32.totalorder %s78, 1
      %p442 = scmp.ne.s32.totalorder %s437, %s439
      %p443 = scmp.eq.s32.totalorder %s78, 0
      %p444 = por %p442, %p443
      %p445 = scmp.ne.s32.totalorder %s437, %s439
      %p446 = scmp.eq.s32.totalorder %s83, 1
      %p447 = por %p445, %p446
      %p448 = scmp.ne.s32.totalorder %s439, %s440
      %p449 = scmp.eq.s32.totalorder %s83, 0
      %p450 = por %p448, %p449
      %p451 = scmp.ne.s32.totalorder %s439, %s440
      %p452 = scmp.eq.s32.totalorder %s84, 1
      %p453 = por %p451, %p452
      %p455 = scmp.ne.s32.totalorder %s440, %s454
      %p456 = scmp.eq.s32.totalorder %s84, 0
      %p457 = por %p455, %p456
      %s459 = sadd.s32 %s458, 1
      %p462 = scmp.eq.s32.totalorder %s78, 1
      %p463 = scmp.ne.s32.totalorder %s458, %s460
      %p464 = scmp.eq.s32.totalorder %s78, 0
      %p465 = por %p463, %p464
      %p466 = scmp.ne.s32.totalorder %s458, %s460
      %p467 = scmp.eq.s32.totalorder %s83, 1
      %p468 = por %p466, %p467
      %p469 = scmp.ne.s32.totalorder %s460, %s461
      %p470 = scmp.eq.s32.totalorder %s83, 0
      %p471 = por %p469, %p470
      %p472 = scmp.ne.s32.totalorder %s460, %s461
      %p473 = scmp.eq.s32.totalorder %s84, 1
      %p474 = por %p472, %p473
      %p476 = scmp.ne.s32.totalorder %s461, %s475
      %p477 = scmp.eq.s32.totalorder %s84, 0
      %p478 = por %p476, %p477
      %s480 = sadd.s32 %s479, 1
      %p483 = scmp.eq.s32.totalorder %s78, 1
      %p484 = scmp.ne.s32.totalorder %s479, %s481
      %p485 = scmp.eq.s32.totalorder %s78, 0
      %p486 = por %p484, %p485
      %p487 = scmp.ne.s32.totalorder %s479, %s481
      %p488 = scmp.eq.s32.totalorder %s83, 1
      %p489 = por %p487, %p488
      %p490 = scmp.ne.s32.totalorder %s481, %s482
      %p491 = scmp.eq.s32.totalorder %s83, 0
      %p492 = por %p490, %p491
      %p493 = scmp.ne.s32.totalorder %s481, %s482
      %p494 = scmp.eq.s32.totalorder %s84, 1
      %p495 = por %p493, %p494
      %p497 = scmp.ne.s32.totalorder %s482, %s496
      %p498 = scmp.eq.s32.totalorder %s84, 0
      %p499 = por %p497, %p498
      %s501 = sadd.s32 %s500, 1
      %p504 = scmp.eq.s32.totalorder %s78, 1
      %p505 = scmp.ne.s32.totalorder %s500, %s502
      %p506 = scmp.eq.s32.totalorder %s78, 0
      %p507 = por %p505, %p506
      %p508 = scmp.ne.s32.totalorder %s500, %s502
      %p509 = scmp.eq.s32.totalorder %s83, 1
      %p510 = por %p508, %p509
      %p511 = scmp.ne.s32.totalorder %s502, %s503
      %p512 = scmp.eq.s32.totalorder %s83, 0
      %p513 = por %p511, %p512
      %p514 = scmp.ne.s32.totalorder %s502, %s503
      %p515 = scmp.eq.s32.totalorder %s84, 1
      %p516 = por %p514, %p515
      %p518 = scmp.ne.s32.totalorder %s503, %s517
      %p519 = scmp.eq.s32.totalorder %s84, 0
      %p520 = por %p518, %p519
      %s522 = sadd.s32 %s521, 1
      %p525 = scmp.eq.s32.totalorder %s78, 1
      %p526 = scmp.ne.s32.totalorder %s521, %s523
      %p527 = scmp.eq.s32.totalorder %s78, 0
      %p528 = por %p526, %p527
      %p529 = scmp.ne.s32.totalorder %s521, %s523
      %p530 = scmp.eq.s32.totalorder %s83, 1
      %p531 = por %p529, %p530
      %p532 = scmp.ne.s32.totalorder %s523, %s524
      %p533 = scmp.eq.s32.totalorder %s83, 0
      %p534 = por %p532, %p533
      %p535 = scmp.ne.s32.totalorder %s523, %s524
      %p536 = scmp.eq.s32.totalorder %s84, 1
      %p537 = por %p535, %p536
      %p539 = scmp.ne.s32.totalorder %s524, %s538
      %p540 = scmp.eq.s32.totalorder %s84, 0
      %p541 = por %p539, %p540
      %s543 = sadd.s32 %s542, 1
      %p546 = scmp.eq.s32.totalorder %s78, 1
      %p547 = scmp.ne.s32.totalorder %s542, %s544
      %p548 = scmp.eq.s32.totalorder %s78, 0
      %p549 = por %p547, %p548
      %p550 = scmp.ne.s32.totalorder %s542, %s544
      %p551 = scmp.eq.s32.totalorder %s83, 1
      %p552 = por %p550, %p551
      %p553 = scmp.ne.s32.totalorder %s544, %s545
      %p554 = scmp.eq.s32.totalorder %s83, 0
      %p555 = por %p553, %p554
      %p556 = scmp.ne.s32.totalorder %s544, %s545
      %p557 = scmp.eq.s32.totalorder %s84, 1
      %p558 = por %p556, %p557
      %p560 = scmp.ne.s32.totalorder %s545, %s559
      %p561 = scmp.eq.s32.totalorder %s84, 0
      %p562 = por %p560, %p561
      %s564 = sadd.s32 %s563, 1
      %p567 = scmp.eq.s32.totalorder %s78, 1
      %p568 = scmp.ne.s32.totalorder %s563, %s565
      %p569 = scmp.eq.s32.totalorder %s78, 0
      %p570 = por %p568, %p569
      %p571 = scmp.ne.s32.totalorder %s563, %s565
      %p572 = scmp.eq.s32.totalorder %s83, 1
      %p573 = por %p571, %p572
      %p574 = scmp.ne.s32.totalorder %s565, %s566
      %p575 = scmp.eq.s32.totalorder %s83, 0
      %p576 = por %p574, %p575
      %p577 = scmp.ne.s32.totalorder %s565, %s566
      %p578 = scmp.eq.s32.totalorder %s84, 1
      %p579 = por %p577, %p578
      %p581 = scmp.ne.s32.totalorder %s566, %s580
      %p582 = scmp.eq.s32.totalorder %s84, 0
      %p583 = por %p581, %p582
      %s585 = sadd.s32 %s584, 1
      %p588 = scmp.eq.s32.totalorder %s78, 1
      %p589 = scmp.ne.s32.totalorder %s584, %s586
      %p590 = scmp.eq.s32.totalorder %s78, 0
      %p591 = por %p589, %p590
      %p592 = scmp.ne.s32.totalorder %s584, %s586
      %p593 = scmp.eq.s32.totalorder %s83, 1
      %p594 = por %p592, %p593
      %p595 = scmp.ne.s32.totalorder %s586, %s587
      %p596 = scmp.eq.s32.totalorder %s83, 0
      %p597 = por %p595, %p596
      %p598 = scmp.ne.s32.totalorder %s586, %s587
      %p599 = scmp.eq.s32.totalorder %s84, 1
      %p600 = por %p598, %p599
      %p602 = scmp.ne.s32.totalorder %s587, %s601
      %p603 = scmp.eq.s32.totalorder %s84, 0
      %p604 = por %p602, %p603
      %s606 = sadd.s32 %s605, 1
      %p609 = scmp.eq.s32.totalorder %s78, 1
      %p610 = scmp.ne.s32.totalorder %s605, %s607
      %p611 = scmp.eq.s32.totalorder %s78, 0
      %p612 = por %p610, %p611
      %p613 = scmp.ne.s32.totalorder %s605, %s607
      %p614 = scmp.eq.s32.totalorder %s83, 1
      %p615 = por %p613, %p614
      %p616 = scmp.ne.s32.totalorder %s607, %s608
      %p617 = scmp.eq.s32.totalorder %s83, 0
      %p618 = por %p616, %p617
      %p619 = scmp.ne.s32.totalorder %s607, %s608
      %p620 = scmp.eq.s32.totalorder %s84, 1
      %p621 = por %p619, %p620
      %p623 = scmp.ne.s32.totalorder %s608, %s622
      %p624 = scmp.eq.s32.totalorder %s84, 0
      %p625 = por %p623, %p624
      %s627 = sadd.s32 %s626, 1
      %p630 = scmp.eq.s32.totalorder %s78, 1
      %p631 = scmp.ne.s32.totalorder %s626, %s628
      %p632 = scmp.eq.s32.totalorder %s78, 0
      %p633 = por %p631, %p632
      %p634 = scmp.ne.s32.totalorder %s626, %s628
      %p635 = scmp.eq.s32.totalorder %s83, 1
      %p636 = por %p634, %p635
      %p637 = scmp.ne.s32.totalorder %s628, %s629
      %p638 = scmp.eq.s32.totalorder %s83, 0
      %p639 = por %p637, %p638
      %p640 = scmp.ne.s32.totalorder %s628, %s629
      %p641 = scmp.eq.s32.totalorder %s84, 1
      %p642 = por %p640, %p641
      %p644 = scmp.ne.s32.totalorder %s629, %s643
      %p645 = scmp.eq.s32.totalorder %s84, 0
      %p646 = por %p644, %p645
      %s648 = sadd.s32 %s647, 1
      %p651 = scmp.eq.s32.totalorder %s78, 1
      %p652 = scmp.ne.s32.totalorder %s647, %s649
      %p653 = scmp.eq.s32.totalorder %s78, 0
      %p654 = por %p652, %p653
      %p655 = scmp.ne.s32.totalorder %s647, %s649
      %p656 = scmp.eq.s32.totalorder %s83, 1
      %p657 = por %p655, %p656
      %p658 = scmp.ne.s32.totalorder %s649, %s650
      %p659 = scmp.eq.s32.totalorder %s83, 0
      %p660 = por %p658, %p659
      %p661 = scmp.ne.s32.totalorder %s649, %s650
      %p662 = scmp.eq.s32.totalorder %s84, 1
      %p663 = por %p661, %p662
      %p665 = scmp.ne.s32.totalorder %s650, %s664
      %p666 = scmp.eq.s32.totalorder %s84, 0
      %p667 = por %p665, %p666
      %s669 = sadd.s32 %s668, 1
      %p672 = scmp.eq.s32.totalorder %s78, 1
      %p673 = scmp.ne.s32.totalorder %s668, %s670
      %p674 = scmp.eq.s32.totalorder %s78, 0
      %p675 = por %p673, %p674
      %p676 = scmp.ne.s32.totalorder %s668, %s670
      %p677 = scmp.eq.s32.totalorder %s83, 1
      %p678 = por %p676, %p677
      %p679 = scmp.ne.s32.totalorder %s670, %s671
      %p680 = scmp.eq.s32.totalorder %s83, 0
      %p681 = por %p679, %p680
      %p682 = scmp.ne.s32.totalorder %s670, %s671
      %p683 = scmp.eq.s32.totalorder %s84, 1
      %p684 = por %p682, %p683
      %p686 = scmp.ne.s32.totalorder %s671, %s685
      %p687 = scmp.eq.s32.totalorder %s84, 0
      %p688 = por %p686, %p687
      %s690 = sadd.s32 %s689, 1
      %p693 = scmp.eq.s32.totalorder %s78, 1
      %p694 = scmp.ne.s32.totalorder %s689, %s691
      %p695 = scmp.eq.s32.totalorder %s78, 0
      %p696 = por %p694, %p695
      %p697 = scmp.ne.s32.totalorder %s689, %s691
      %p698 = scmp.eq.s32.totalorder %s83, 1
      %p699 = por %p697, %p698
      %p700 = scmp.ne.s32.totalorder %s691, %s692
      %p701 = scmp.eq.s32.totalorder %s83, 0
      %p702 = por %p700, %p701
      %p703 = scmp.ne.s32.totalorder %s691, %s692
      %p704 = scmp.eq.s32.totalorder %s84, 1
      %p705 = por %p703, %p704
      %p707 = scmp.ne.s32.totalorder %s692, %s706
      %p708 = scmp.eq.s32.totalorder %s84, 0
      %p709 = por %p707, %p708
      %s711 = sadd.s32 %s710, 1
      %p714 = scmp.eq.s32.totalorder %s78, 1
      %p715 = scmp.ne.s32.totalorder %s710, %s712
      %p716 = scmp.eq.s32.totalorder %s78, 0
      %p717 = por %p715, %p716
      %p718 = scmp.ne.s32.totalorder %s710, %s712
      %p719 = scmp.eq.s32.totalorder %s83, 1
      %p720 = por %p718, %p719
      %p721 = scmp.ne.s32.totalorder %s712, %s713
      %p722 = scmp.eq.s32.totalorder %s83, 0
      %p723 = por %p721, %p722
      %p724 = scmp.ne.s32.totalorder %s712, %s713
      %p725 = scmp.eq.s32.totalorder %s84, 1
      %p726 = por %p724, %p725
      %p728 = scmp.ne.s32.totalorder %s713, %s727
      %p729 = scmp.eq.s32.totalorder %s84, 0
      %p730 = por %p728, %p729
      %s732 = sadd.s32 %s731, 1
      %p735 = scmp.eq.s32.totalorder %s78, 1
      %p736 = scmp.ne.s32.totalorder %s731, %s733
      %p737 = scmp.eq.s32.totalorder %s78, 0
      %p738 = por %p736, %p737
      %p739 = scmp.ne.s32.totalorder %s731, %s733
      %p740 = scmp.eq.s32.totalorder %s83, 1
      %p741 = por %p739, %p740
      %p742 = scmp.ne.s32.totalorder %s733, %s734
      %p743 = scmp.eq.s32.totalorder %s83, 0
      %p744 = por %p742, %p743
      %p745 = scmp.ne.s32.totalorder %s733, %s734
      %p746 = scmp.eq.s32.totalorder %s84, 1
      %p747 = por %p745, %p746
      %p749 = scmp.ne.s32.totalorder %s734, %s748
      %p750 = scmp.eq.s32.totalorder %s84, 0
      %p751 = por %p749, %p750
      %s752 = ssub.s32 %s78, %s85
      %p753 = scmp.eq.s32.totalorder %s752, 0
      %s755 = sadd.s32 %s754, 1
      %s756 = scalar_select %p753, %s754, %s755
      %p759 = pneg %p753
      %p760 = scmp.eq.s32.totalorder %s78, 1
      %p761 = por %p759, %p760
      %p762 = scmp.ne.s32.totalorder %s754, %s757
      %p763 = scmp.eq.s32.totalorder %s78, 0
      %p764 = por %p762, %p763
      %p765 = scmp.ne.s32.totalorder %s754, %s757
      %p766 = scmp.eq.s32.totalorder %s83, 1
      %p767 = por %p765, %p766
      %p768 = scmp.ne.s32.totalorder %s757, %s758
      %p769 = scmp.eq.s32.totalorder %s83, 0
      %p770 = por %p768, %p769
      %p771 = scmp.ne.s32.totalorder %s757, %s758
      %p772 = scmp.eq.s32.totalorder %s84, 1
      %p773 = por %p771, %p772
      %p775 = scmp.ne.s32.totalorder %s758, %s774
      %p776 = scmp.eq.s32.totalorder %s84, 0
      %p777 = por %p775, %p776
      %s778 = ssub.s32 %s78, %s85
      %p779 = scmp.eq.s32.totalorder %s778, 0
      %s781 = sadd.s32 %s780, 1
      %s782 = scalar_select %p779, %s780, %s781
      %p785 = pneg %p779
      %p786 = scmp.eq.s32.totalorder %s78, 1
      %p787 = por %p785, %p786
      %p788 = scmp.ne.s32.totalorder %s780, %s783
      %p789 = scmp.eq.s32.totalorder %s78, 0
      %p790 = por %p788, %p789
      %p791 = scmp.ne.s32.totalorder %s780, %s783
      %p792 = scmp.eq.s32.totalorder %s83, 1
      %p793 = por %p791, %p792
      %p794 = scmp.ne.s32.totalorder %s783, %s784
      %p795 = scmp.eq.s32.totalorder %s83, 0
      %p796 = por %p794, %p795
      %p797 = scmp.ne.s32.totalorder %s783, %s784
      %p798 = scmp.eq.s32.totalorder %s84, 1
      %p799 = por %p797, %p798
      %p801 = scmp.ne.s32.totalorder %s784, %s800
      %p802 = scmp.eq.s32.totalorder %s84, 0
      %p803 = por %p801, %p802
      %p804 = scmp.le.s32.totalorder 1, %s78
      %p805 = scmp.lt.s32.totalorder %s78, 3
      %p806 = pnand %p804, %p805
      %p807 = pneg %p806
      // Predicated region
      $region9: #{icc_tf_forward.1} parent=5 // pred_check
        _
      $region10: #{icc_tf_forward.1} parent=5 // pred_check_branch
        %809 = sbr.rel (%p806) target = $region12
      $region11: #{icc_tf_forward.1} parent=5 // pred_region
        %s810 = ssub.s32 %s78, 1
        // Predicated region
        $region13: #{icc_tf_forward.1} parent=11 // pred_check
          %p811 = pneg %p177
        $region14: #{icc_tf_forward.1} parent=11 // pred_check_branch
          %813 = sbr.rel (%p811) target = $region16
        $region15: #{icc_tf_forward.1} parent=11 // pred_region
          _
        $region16: #{icc_tf_forward.1} parent=11 // pred_fallthru
          _
        // Predicated region
        $region17: #{icc_tf_forward.1} parent=11 // pred_check
          %p814 = pneg %p198
        $region18: #{icc_tf_forward.1} parent=11 // pred_check_branch
          %816 = sbr.rel (%p814) target = $region20
        $region19: #{icc_tf_forward.1} parent=11 // pred_region
          _
        $region20: #{icc_tf_forward.1} parent=11 // pred_fallthru
          _
        // Predicated region
        $region21: #{icc_tf_forward.1} parent=11 // pred_check
          %p817 = pneg %p219
        $region22: #{icc_tf_forward.1} parent=11 // pred_check_branch
          %819 = sbr.rel (%p817) target = $region24
        $region23: #{icc_tf_forward.1} parent=11 // pred_region
          _
        $region24: #{icc_tf_forward.1} parent=11 // pred_fallthru
          _
        // Predicated region
        $region25: #{icc_tf_forward.1} parent=11 // pred_check
          %p820 = pneg %p240
        $region26: #{icc_tf_forward.1} parent=11 // pred_check_branch
          %822 = sbr.rel (%p820) target = $region28
        $region27: #{icc_tf_forward.1} parent=11 // pred_region
          _
        $region28: #{icc_tf_forward.1} parent=11 // pred_fallthru
          _
        // Predicated region
        $region29: #{icc_tf_forward.1} parent=11 // pred_check
          %p823 = pneg %p261
        $region30: #{icc_tf_forward.1} parent=11 // pred_check_branch
          %825 = sbr.rel (%p823) target = $region32
        $region31: #{icc_tf_forward.1} parent=11 // pred_region
          _
        $region32: #{icc_tf_forward.1} parent=11 // pred_fallthru
          _
        // Predicated region
        $region33: #{icc_tf_forward.1} parent=11 // pred_check
          %p826 = pneg %p282
        $region34: #{icc_tf_forward.1} parent=11 // pred_check_branch
          %828 = sbr.rel (%p826) target = $region36
        $region35: #{icc_tf_forward.1} parent=11 // pred_region
          _
        $region36: #{icc_tf_forward.1} parent=11 // pred_fallthru
          _
        // Predicated region
        $region37: #{icc_tf_forward.1} parent=11 // pred_check
          %p829 = pneg %p303
        $region38: #{icc_tf_forward.1} parent=11 // pred_check_branch
          %831 = sbr.rel (%p829) target = $region40
        $region39: #{icc_tf_forward.1} parent=11 // pred_region
          _
        $region40: #{icc_tf_forward.1} parent=11 // pred_fallthru
          _
        // Predicated region
        $region41: #{icc_tf_forward.1} parent=11 // pred_check
          %p832 = pneg %p324
        $region42: #{icc_tf_forward.1} parent=11 // pred_check_branch
          %834 = sbr.rel (%p832) target = $region44
        $region43: #{icc_tf_forward.1} parent=11 // pred_region
          _
        $region44: #{icc_tf_forward.1} parent=11 // pred_fallthru
          _
        // Predicated region
        $region45: #{icc_tf_forward.1} parent=11 // pred_check
          %p835 = pneg %p345
        $region46: #{icc_tf_forward.1} parent=11 // pred_check_branch
          %837 = sbr.rel (%p835) target = $region48
        $region47: #{icc_tf_forward.1} parent=11 // pred_region
          _
        $region48: #{icc_tf_forward.1} parent=11 // pred_fallthru
          _
        // Predicated region
        $region49: #{icc_tf_forward.1} parent=11 // pred_check
          %p838 = pneg %p366
        $region50: #{icc_tf_forward.1} parent=11 // pred_check_branch
          %840 = sbr.rel (%p838) target = $region52
        $region51: #{icc_tf_forward.1} parent=11 // pred_region
          _
        $region52: #{icc_tf_forward.1} parent=11 // pred_fallthru
          _
        // Predicated region
        $region53: #{icc_tf_forward.1} parent=11 // pred_check
          %p841 = pneg %p387
        $region54: #{icc_tf_forward.1} parent=11 // pred_check_branch
          %843 = sbr.rel (%p841) target = $region56
        $region55: #{icc_tf_forward.1} parent=11 // pred_region
          _
        $region56: #{icc_tf_forward.1} parent=11 // pred_fallthru
          _
        // Predicated region
        $region57: #{icc_tf_forward.1} parent=11 // pred_check
          %p844 = pneg %p408
        $region58: #{icc_tf_forward.1} parent=11 // pred_check_branch
          %846 = sbr.rel (%p844) target = $region60
        $region59: #{icc_tf_forward.1} parent=11 // pred_region
          _
        $region60: #{icc_tf_forward.1} parent=11 // pred_fallthru
          _
        // Predicated region
        $region61: #{icc_tf_forward.1} parent=11 // pred_check
          %p847 = pneg %p429
        $region62: #{icc_tf_forward.1} parent=11 // pred_check_branch
          %849 = sbr.rel (%p847) target = $region64
        $region63: #{icc_tf_forward.1} parent=11 // pred_region
          _
        $region64: #{icc_tf_forward.1} parent=11 // pred_fallthru
          _
        // Predicated region
        $region65: #{icc_tf_forward.1} parent=11 // pred_check
          %p850 = pneg %p450
        $region66: #{icc_tf_forward.1} parent=11 // pred_check_branch
          %852 = sbr.rel (%p850) target = $region68
        $region67: #{icc_tf_forward.1} parent=11 // pred_region
          _
        $region68: #{icc_tf_forward.1} parent=11 // pred_fallthru
          _
        // Predicated region
        $region69: #{icc_tf_forward.1} parent=11 // pred_check
          %p853 = pneg %p471
        $region70: #{icc_tf_forward.1} parent=11 // pred_check_branch
          %855 = sbr.rel (%p853) target = $region72
        $region71: #{icc_tf_forward.1} parent=11 // pred_region
          _
        $region72: #{icc_tf_forward.1} parent=11 // pred_fallthru
          _
        // Predicated region
        $region73: #{icc_tf_forward.1} parent=11 // pred_check
          %p856 = pneg %p492
        $region74: #{icc_tf_forward.1} parent=11 // pred_check_branch
          %858 = sbr.rel (%p856) target = $region76
        $region75: #{icc_tf_forward.1} parent=11 // pred_region
          _
        $region76: #{icc_tf_forward.1} parent=11 // pred_fallthru
          _
        // Predicated region
        $region77: #{icc_tf_forward.1} parent=11 // pred_check
          %p859 = pneg %p513
        $region78: #{icc_tf_forward.1} parent=11 // pred_check_branch
          %861 = sbr.rel (%p859) target = $region80
        $region79: #{icc_tf_forward.1} parent=11 // pred_region
          _
        $region80: #{icc_tf_forward.1} parent=11 // pred_fallthru
          _
        // Predicated region
        $region81: #{icc_tf_forward.1} parent=11 // pred_check
          %p862 = pneg %p534
        $region82: #{icc_tf_forward.1} parent=11 // pred_check_branch
          %864 = sbr.rel (%p862) target = $region84
        $region83: #{icc_tf_forward.1} parent=11 // pred_region
          _
        $region84: #{icc_tf_forward.1} parent=11 // pred_fallthru
          _
        // Predicated region
        $region85: #{icc_tf_forward.1} parent=11 // pred_check
          %p865 = pneg %p555
        $region86: #{icc_tf_forward.1} parent=11 // pred_check_branch
          %867 = sbr.rel (%p865) target = $region88
        $region87: #{icc_tf_forward.1} parent=11 // pred_region
          _
        $region88: #{icc_tf_forward.1} parent=11 // pred_fallthru
          _
        // Predicated region
        $region89: #{icc_tf_forward.1} parent=11 // pred_check
          %p868 = pneg %p576
        $region90: #{icc_tf_forward.1} parent=11 // pred_check_branch
          %870 = sbr.rel (%p868) target = $region92
        $region91: #{icc_tf_forward.1} parent=11 // pred_region
          _
        $region92: #{icc_tf_forward.1} parent=11 // pred_fallthru
          _
        // Predicated region
        $region93: #{icc_tf_forward.1} parent=11 // pred_check
          %p871 = pneg %p597
        $region94: #{icc_tf_forward.1} parent=11 // pred_check_branch
          %873 = sbr.rel (%p871) target = $region96
        $region95: #{icc_tf_forward.1} parent=11 // pred_region
          _
        $region96: #{icc_tf_forward.1} parent=11 // pred_fallthru
          _
        // Predicated region
        $region97: #{icc_tf_forward.1} parent=11 // pred_check
          %p874 = pneg %p618
        $region98: #{icc_tf_forward.1} parent=11 // pred_check_branch
          %876 = sbr.rel (%p874) target = $region100
        $region99: #{icc_tf_forward.1} parent=11 // pred_region
          _
        $region100: #{icc_tf_forward.1} parent=11 // pred_fallthru
          _
        // Predicated region
        $region101: #{icc_tf_forward.1} parent=11 // pred_check
          %p877 = pneg %p639
        $region102: #{icc_tf_forward.1} parent=11 // pred_check_branch
          %879 = sbr.rel (%p877) target = $region104
        $region103: #{icc_tf_forward.1} parent=11 // pred_region
          _
        $region104: #{icc_tf_forward.1} parent=11 // pred_fallthru
          _
        // Predicated region
        $region105: #{icc_tf_forward.1} parent=11 // pred_check
          %p880 = pneg %p660
        $region106: #{icc_tf_forward.1} parent=11 // pred_check_branch
          %882 = sbr.rel (%p880) target = $region108
        $region107: #{icc_tf_forward.1} parent=11 // pred_region
          _
        $region108: #{icc_tf_forward.1} parent=11 // pred_fallthru
          _
        // Predicated region
        $region109: #{icc_tf_forward.1} parent=11 // pred_check
          %p883 = pneg %p681
        $region110: #{icc_tf_forward.1} parent=11 // pred_check_branch
          %885 = sbr.rel (%p883) target = $region112
        $region111: #{icc_tf_forward.1} parent=11 // pred_region
          _
        $region112: #{icc_tf_forward.1} parent=11 // pred_fallthru
          _
        // Predicated region
        $region113: #{icc_tf_forward.1} parent=11 // pred_check
          %p886 = pneg %p702
        $region114: #{icc_tf_forward.1} parent=11 // pred_check_branch
          %888 = sbr.rel (%p886) target = $region116
        $region115: #{icc_tf_forward.1} parent=11 // pred_region
          _
        $region116: #{icc_tf_forward.1} parent=11 // pred_fallthru
          _
        // Predicated region
        $region117: #{icc_tf_forward.1} parent=11 // pred_check
          %p889 = pneg %p723
        $region118: #{icc_tf_forward.1} parent=11 // pred_check_branch
          %891 = sbr.rel (%p889) target = $region120
        $region119: #{icc_tf_forward.1} parent=11 // pred_region
          _
        $region120: #{icc_tf_forward.1} parent=11 // pred_fallthru
          _
        // Predicated region
        $region121: #{icc_tf_forward.1} parent=11 // pred_check
          %p892 = pneg %p744
        $region122: #{icc_tf_forward.1} parent=11 // pred_check_branch
          %894 = sbr.rel (%p892) target = $region124
        $region123: #{icc_tf_forward.1} parent=11 // pred_region
          _
        $region124: #{icc_tf_forward.1} parent=11 // pred_fallthru
          _
      $region12: #{icc_tf_forward.1} parent=5 // pred_fallthru
        _
      %p895 = scmp.lt.s32.totalorder %s78, 2
      // Predicated region
      $region125: #{icc_tf_forward.1} parent=5 // pred_check
        %p896 = pneg %p895
      $region126: #{icc_tf_forward.1} parent=5 // pred_check_branch
        %898 = sbr.rel (%p896) target = $region128
      $region127: #{icc_tf_forward.1} parent=5 // pred_region
        // Predicated region
        $region129: #{icc_tf_forward.1} parent=127 // pred_check
          %p899 = pneg %p98
        $region130: #{icc_tf_forward.1} parent=127 // pred_check_branch
          %901 = sbr.rel (%p899) target = $region132
        $region131: #{icc_tf_forward.1} parent=127 // pred_region
          %p902 = scmp.lt.s32.totalorder %s78, 1
          %s903 = scalar_select %p902, %s78, 1
          %s904 = smul.addr %s903, 8
          %s905 = scalar_lea.vmem %s1, %s904
        $region132: #{icc_tf_forward.1} parent=127 // pred_fallthru
          _
        // Predicated region
        $region133: #{icc_tf_forward.1} parent=127 // pred_check
          %p906 = pneg %p124
        $region134: #{icc_tf_forward.1} parent=127 // pred_check_branch
          %908 = sbr.rel (%p906) target = $region136
        $region135: #{icc_tf_forward.1} parent=127 // pred_region
          %p909 = scmp.lt.s32.totalorder %s78, 1
          %s910 = scalar_select %p909, %s78, 1
          %s911 = scalar_lea.vmem %s3, %s910
        $region136: #{icc_tf_forward.1} parent=127 // pred_fallthru
          _
        // Predicated region
        $region137: #{icc_tf_forward.1} parent=127 // pred_check
          %p912 = pneg %p150
        $region138: #{icc_tf_forward.1} parent=127 // pred_check_branch
          %914 = sbr.rel (%p912) target = $region140
        $region139: #{icc_tf_forward.1} parent=127 // pred_region
          %p915 = scmp.lt.s32.totalorder %s78, 1
          %s916 = scalar_select %p915, %s78, 1
          %s917 = scalar_lea.vmem %s5, %s916
        $region140: #{icc_tf_forward.1} parent=127 // pred_fallthru
          _
      $region128: #{icc_tf_forward.1} parent=5 // pred_fallthru
        _
      %p918 = scmp.le.s32.totalorder 1, %s78
      %p919 = scmp.lt.s32.totalorder %s78, 3
      %p920 = pnand %p918, %p919
      %p921 = pneg %p920
      // Predicated region
      $region141: #{icc_tf_forward.1} parent=5 // pred_check
        _
      $region142: #{icc_tf_forward.1} parent=5 // pred_check_branch
        %923 = sbr.rel (%p920) target = $region144
      $region143: #{icc_tf_forward.1} parent=5 // pred_region
        %s924 = ssub.s32 %s78, 1
        %p925 = scmp.lt.s32.totalorder %s83, 1
        %s926 = scalar_select %p925, %s83, 1
        %s927 = smul.addr %s926, 8
        %s928 = scalar_lea.vmem %s1, %s927
        %p929 = pneg %p104
        %p930 = pneg %p101
        %p931 = scmp.lt.s32.totalorder %s83, 1
        %s932 = scalar_select %p931, %s83, 1
        %s933 = scalar_lea.vmem %s3, %s932
        %p934 = pneg %p130
        %p935 = pneg %p127
        %p936 = scmp.lt.s32.totalorder %s83, 1
        %s937 = scalar_select %p936, %s83, 1
        %s938 = scalar_lea.vmem %s5, %s937
        %p939 = pneg %p156
        %p940 = pneg %p153
        %p941 = pneg %p177
        %p942 = pneg %p174
        %p943 = pneg %p198
        %p944 = pneg %p195
        %p945 = pneg %p219
        %p946 = pneg %p216
        %p947 = pneg %p240
        %p948 = pneg %p237
        %p949 = pneg %p261
        %p950 = pneg %p258
        %p951 = pneg %p282
        %p952 = pneg %p279
        %p953 = pneg %p303
        %p954 = pneg %p300
        %p955 = pneg %p324
        %p956 = pneg %p321
        %p957 = pneg %p345
        %p958 = pneg %p342
        %p959 = pneg %p366
        %p960 = pneg %p363
        %p961 = pneg %p387
        %p962 = pneg %p384
        %p963 = pneg %p408
        %p964 = pneg %p405
        %p965 = pneg %p429
        %p966 = pneg %p426
        %p967 = pneg %p450
        %p968 = pneg %p447
        %p969 = pneg %p471
        %p970 = pneg %p468
        %p971 = pneg %p492
        %p972 = pneg %p489
        %p973 = pneg %p513
        %p974 = pneg %p510
        %p975 = pneg %p534
        %p976 = pneg %p531
        %p977 = pneg %p555
        %p978 = pneg %p552
        %p979 = pneg %p576
        %p980 = pneg %p573
        %p981 = pneg %p597
        %p982 = pneg %p594
        %p983 = pneg %p618
        %p984 = pneg %p615
        %p985 = pneg %p639
        %p986 = pneg %p636
        %p987 = pneg %p660
        %p988 = pneg %p657
        %p989 = pneg %p681
        %p990 = pneg %p678
        %p991 = pneg %p702
        %p992 = pneg %p699
        %p993 = pneg %p723
        %p994 = pneg %p720
        %p995 = pneg %p744
        %p996 = pneg %p741
        %p997 = pneg %p770
        %p998 = pneg %p767
        %s999 = sand.u32 %s757, 1
        %s1000 = scalar_lea.sflag [#allocation3], %s999
        %s1001 = sand.u32 %s757, 1
        %s1002 = scalar_lea.vmem [#allocation2], %s1001
        %p1003 = pneg %p796
        %p1004 = pneg %p793
        %s1005 = sand.u32 %s783, 1
        %s1006 = scalar_lea.sflag [#allocation5], %s1005
        %s1007 = sand.u32 %s783, 1
        %s1008 = scalar_lea.vmem [#allocation4], %s1007
        %p1009 = scmp.lt.s32.totalorder %s83, 1
        %s1010 = scalar_select %p1009, %s83, 1
        %s1011 = smul.addr %s1010, 8
        %s1012 = scalar_lea.vmem %s1, %s1011
        %p1013 = scmp.lt.s32.totalorder %s83, 1
        %s1014 = scalar_select %p1013, %s83, 1
        %s1015 = scalar_lea.vmem %s3, %s1014
        %p1016 = scmp.lt.s32.totalorder %s83, 1
        %s1017 = scalar_select %p1016, %s83, 1
        %s1018 = scalar_lea.vmem %s5, %s1017
        %v1019 = vld [vmem:[%s1012] sm:$0xff]
        %v1020 = vld [vmem:[%s7] sm:$0xff]
        %v1021 = vld [vmem:[%s7 + $0x8] sm:$0xff]
        %v1022 = vld [vmem:[%s7 + $0x10] sm:$0xff]
        %v1023 = vld [vmem:[%s7 + $0x18] sm:$0xff]
        %v1024 = vld [vmem:[%s7 + $0x20] sm:$0xff]
        %v1025 = vld [vmem:[%s7 + $0x28] sm:$0xff]
        %v1026 = vld [vmem:[%s7 + $0x30] sm:$0xff]
        %v1027 = vld [vmem:[%s7 + $0x38] sm:$0xff]
        %v1028 = vld [vmem:[%s7 + $0x40] sm:$0xff]
        %v1029 = vld [vmem:[%s7 + $0x48] sm:$0xff]
        %v1030 = vld [vmem:[%s7 + $0x50] sm:$0xff]
        %v1031 = vld [vmem:[%s7 + $0x58] sm:$0xff]
        %v1032 = vld [vmem:[%s7 + $0x60] sm:$0xff]
        %v1033 = vld [vmem:[%s7 + $0x68] sm:$0xff]
        %v1034 = vld [vmem:[%s7 + $0x70] sm:$0xff]
        %v1035 = vld [vmem:[%s7 + $0x78] sm:$0xff]
        %v1036 = vld [vmem:[%s13] sm:$0x1]
        %v1037 = vld [vmem:[%s13 + $0x1] sm:$0x1]
        %v1038 = vld [vmem:[%s13 + $0x2] sm:$0x1]
        %v1039 = vld [vmem:[%s13 + $0x3] sm:$0x1]
        %v1044 = vlaneseq
        %v1045 = vshrl.u32 %v1044, 7
        %v1046 = vsub.s32 0, %v1045
        %v1047 = vrot.slane %v1036, %v1046
        %v1048 = vlaneseq
        %v1049 = vshrl.u32 %v1048, 7
        %v1050 = vsub.s32 0, %v1049
        %v1051 = vrot.slane %v1037, %v1050
        %v1052 = vlaneseq
        %v1053 = vshrl.u32 %v1052, 7
        %v1054 = vsub.s32 0, %v1053
        %v1055 = vrot.slane %v1038, %v1054
        %v1056 = vlaneseq
        %v1057 = vshrl.u32 %v1056, 7
        %v1058 = vsub.s32 0, %v1057
        %v1059 = vrot.slane %v1039, %v1058
        %vm1064 = vcmask 261120
        %v1066 = vsel %vm1064, %v1019, 0
        %1068 = vmatprep.subr.mxu0 0.0
        %1069 = vmatpush1.msra.mxu0 0.0
        %1070 = vmatprep.subr.mxu0 0.0
        %1071 = vmatpush1.msra.mxu0 0.0
        %1072 = vmatprep.subr.mxu0 0.0
        %1073 = vmatpush1.msra.mxu0 0.0
        %1074 = vmatprep.subr.mxu0 0.0
        %1075 = vmatpush1.msra.mxu0 0.0
        %1076 = vmatprep.subr.mxu0 0.0
        %1077 = vmatpush1.msra.mxu0 0.0
        %1078 = vmatprep.subr.mxu0 0.0
        %1079 = vmatpush1.msra.mxu0 0.0
        %1080 = vmatprep.subr.mxu0 0.0
        %1081 = vmatpush1.msra.mxu0 0.0
        %1082 = vmatprep.subr.mxu0 0.0
        %1083 = vmatpush1.msra.mxu0 0.0
        %1084 = vmatprep.subr.mxu0 0.0
        %1085 = vmatpush1.msra.mxu0 0.0
        %1086 = vmatprep.subr.mxu0 0.0
        %1087 = vmatpush1.msra.mxu0 0.0
        %1088 = vmatprep.subr.mxu0 0.0
        %1089 = vmatpush1.msra.mxu0 0.0
        %1090 = vmatprep.subr.mxu0 0.0
        %1091 = vmatpush1.msra.mxu0 0.0
        %1092 = vmatprep.subr.mxu0 0.0
        %1093 = vmatpush1.msra.mxu0 %v1023
        %1094 = vmatprep.subr.mxu0 0.0
        %1095 = vmatpush1.msra.mxu0 %v1022
        %1096 = vmatprep.subr.mxu0 0.0
        %1097 = vmatpush1.msra.mxu0 %v1021
        %1098 = vmatprep.subr.mxu0 0.0
        %1099 = vmatpush1.msra.mxu0 %v1020
        %1100 = vmatprep.subr.mxu0 0.0
        %1101 = vmatpush2.msra.mxu0 0.0
        %1102 = vmatprep.subr.mxu0 0.0
        %1103 = vmatpush2.msra.mxu0 0.0
        %1104 = vmatprep.subr.mxu0 0.0
        %1105 = vmatpush2.msra.mxu0 0.0
        %1106 = vmatprep.subr.mxu0 0.0
        %1107 = vmatpush2.msra.mxu0 0.0
        %1108 = vmatprep.subr.mxu0 0.0
        %1109 = vmatpush2.msra.mxu0 0.0
        %1110 = vmatprep.subr.mxu0 0.0
        %1111 = vmatpush2.msra.mxu0 0.0
        %1112 = vmatprep.subr.mxu0 0.0
        %1113 = vmatpush2.msra.mxu0 0.0
        %1114 = vmatprep.subr.mxu0 0.0
        %1115 = vmatpush2.msra.mxu0 0.0
        %1116 = vmatprep.subr.mxu0 0.0
        %1117 = vmatpush2.msra.mxu0 0.0
        %1118 = vmatprep.subr.mxu0 0.0
        %1119 = vmatpush2.msra.mxu0 0.0
        %1120 = vmatprep.subr.mxu0 0.0
        %1121 = vmatpush2.msra.mxu0 0.0
        %1122 = vmatprep.subr.mxu0 0.0
        %1123 = vmatpush2.msra.mxu0 0.0
        %1124 = vmatprep.subr.mxu0 0.0
        %1125 = vmatpush2.msra.mxu0 0.0
        %1126 = vmatprep.subr.mxu0 0.0
        %1127 = vmatpush2.msra.mxu0 0.0
        %1128 = vmatprep.subr.mxu0 0.0
        %1129 = vmatpush2.msra.mxu0 0.0
        %1130 = vmatprep.subr.mxu0 0.0
        %1131 = vmatpush2.msra.mxu0 0.0
        %1132 = vmatprep.mubr.f32.mxu0 0.0
        %1133 = vmatmul.mubr.f32.gmra.mxu0 %v1066
        %v1134 = vpop.f32.mrf.mxu0
        %v1135 = vadd.f32 %v1047, %v1134
        %v1136 = vpop.f32.mrf.mxu0
        %1137 = vdwg.mxu0
        %1138 = vmatprep.subr.mxu0 0.0
        %1139 = vmatpush1.msra.mxu0 0.0
        %1140 = vmatprep.subr.mxu0 0.0
        %1141 = vmatpush1.msra.mxu0 0.0
        %1142 = vmatprep.subr.mxu0 0.0
        %1143 = vmatpush1.msra.mxu0 0.0
        %1144 = vmatprep.subr.mxu0 0.0
        %1145 = vmatpush1.msra.mxu0 0.0
        %1146 = vmatprep.subr.mxu0 0.0
        %1147 = vmatpush1.msra.mxu0 0.0
        %1148 = vmatprep.subr.mxu0 0.0
        %1149 = vmatpush1.msra.mxu0 0.0
        %1150 = vmatprep.subr.mxu0 0.0
        %1151 = vmatpush1.msra.mxu0 0.0
        %1152 = vmatprep.subr.mxu0 0.0
        %1153 = vmatpush1.msra.mxu0 0.0
        %1154 = vmatprep.subr.mxu0 0.0
        %1155 = vmatpush1.msra.mxu0 0.0
        %1156 = vmatprep.subr.mxu0 0.0
        %1157 = vmatpush1.msra.mxu0 0.0
        %1158 = vmatprep.subr.mxu0 0.0
        %1159 = vmatpush1.msra.mxu0 0.0
        %1160 = vmatprep.subr.mxu0 0.0
        %1161 = vmatpush1.msra.mxu0 0.0
        %1162 = vmatprep.subr.mxu0 0.0
        %1163 = vmatpush1.msra.mxu0 %v1027
        %1164 = vmatprep.subr.mxu0 0.0
        %1165 = vmatpush1.msra.mxu0 %v1026
        %1166 = vmatprep.subr.mxu0 0.0
        %1167 = vmatpush1.msra.mxu0 %v1025
        %1168 = vmatprep.subr.mxu0 0.0
        %1169 = vmatpush1.msra.mxu0 %v1024
        %1170 = vmatprep.subr.mxu0 0.0
        %1171 = vmatpush2.msra.mxu0 0.0
        %1172 = vmatprep.subr.mxu0 0.0
        %1173 = vmatpush2.msra.mxu0 0.0
        %1174 = vmatprep.subr.mxu0 0.0
        %1175 = vmatpush2.msra.mxu0 0.0
        %1176 = vmatprep.subr.mxu0 0.0
        %1177 = vmatpush2.msra.mxu0 0.0
        %1178 = vmatprep.subr.mxu0 0.0
        %1179 = vmatpush2.msra.mxu0 0.0
        %1180 = vmatprep.subr.mxu0 0.0
        %1181 = vmatpush2.msra.mxu0 0.0
        %1182 = vmatprep.subr.mxu0 0.0
        %1183 = vmatpush2.msra.mxu0 0.0
        %1184 = vmatprep.subr.mxu0 0.0
        %1185 = vmatpush2.msra.mxu0 0.0
        %1186 = vmatprep.subr.mxu0 0.0
        %1187 = vmatpush2.msra.mxu0 0.0
        %1188 = vmatprep.subr.mxu0 0.0
        %1189 = vmatpush2.msra.mxu0 0.0
        %1190 = vmatprep.subr.mxu0 0.0
        %1191 = vmatpush2.msra.mxu0 0.0
        %1192 = vmatprep.subr.mxu0 0.0
        %1193 = vmatpush2.msra.mxu0 0.0
        %1194 = vmatprep.subr.mxu0 0.0
        %1195 = vmatpush2.msra.mxu0 0.0
        %1196 = vmatprep.subr.mxu0 0.0
        %1197 = vmatpush2.msra.mxu0 0.0
        %1198 = vmatprep.subr.mxu0 0.0
        %1199 = vmatpush2.msra.mxu0 0.0
        %1200 = vmatprep.subr.mxu0 0.0
        %1201 = vmatpush2.msra.mxu0 0.0
        %1202 = vmatprep.mubr.f32.mxu0 0.0
        %1203 = vmatmul.mubr.f32.gmra.mxu0 %v1066
        %v1204 = vpop.f32.mrf.mxu0
        %v1205 = vadd.f32 %v1051, %v1204
        %v1206 = vpop.f32.mrf.mxu0
        %1207 = vdwg.mxu0
        %1208 = vmatprep.subr.mxu0 0.0
        %1209 = vmatpush1.msra.mxu0 0.0
        %1210 = vmatprep.subr.mxu0 0.0
        %1211 = vmatpush1.msra.mxu0 0.0
        %1212 = vmatprep.subr.mxu0 0.0
        %1213 = vmatpush1.msra.mxu0 0.0
        %1214 = vmatprep.subr.mxu0 0.0
        %1215 = vmatpush1.msra.mxu0 0.0
        %1216 = vmatprep.subr.mxu0 0.0
        %1217 = vmatpush1.msra.mxu0 0.0
        %1218 = vmatprep.subr.mxu0 0.0
        %1219 = vmatpush1.msra.mxu0 0.0
        %1220 = vmatprep.subr.mxu0 0.0
        %1221 = vmatpush1.msra.mxu0 0.0
        %1222 = vmatprep.subr.mxu0 0.0
        %1223 = vmatpush1.msra.mxu0 0.0
        %1224 = vmatprep.subr.mxu0 0.0
        %1225 = vmatpush1.msra.mxu0 0.0
        %1226 = vmatprep.subr.mxu0 0.0
        %1227 = vmatpush1.msra.mxu0 0.0
        %1228 = vmatprep.subr.mxu0 0.0
        %1229 = vmatpush1.msra.mxu0 0.0
        %1230 = vmatprep.subr.mxu0 0.0
        %1231 = vmatpush1.msra.mxu0 0.0
        %1232 = vmatprep.subr.mxu0 0.0
        %1233 = vmatpush1.msra.mxu0 %v1031
        %1234 = vmatprep.subr.mxu0 0.0
        %1235 = vmatpush1.msra.mxu0 %v1030
        %1236 = vmatprep.subr.mxu0 0.0
        %1237 = vmatpush1.msra.mxu0 %v1029
        %1238 = vmatprep.subr.mxu0 0.0
        %1239 = vmatpush1.msra.mxu0 %v1028
        %1240 = vmatprep.subr.mxu0 0.0
        %1241 = vmatpush2.msra.mxu0 0.0
        %1242 = vmatprep.subr.mxu0 0.0
        %1243 = vmatpush2.msra.mxu0 0.0
        %1244 = vmatprep.subr.mxu0 0.0
        %1245 = vmatpush2.msra.mxu0 0.0
        %1246 = vmatprep.subr.mxu0 0.0
        %1247 = vmatpush2.msra.mxu0 0.0
        %1248 = vmatprep.subr.mxu0 0.0
        %1249 = vmatpush2.msra.mxu0 0.0
        %1250 = vmatprep.subr.mxu0 0.0
        %1251 = vmatpush2.msra.mxu0 0.0
        %1252 = vmatprep.subr.mxu0 0.0
        %1253 = vmatpush2.msra.mxu0 0.0
        %1254 = vmatprep.subr.mxu0 0.0
        %1255 = vmatpush2.msra.mxu0 0.0
        %1256 = vmatprep.subr.mxu0 0.0
        %1257 = vmatpush2.msra.mxu0 0.0
        %1258 = vmatprep.subr.mxu0 0.0
        %1259 = vmatpush2.msra.mxu0 0.0
        %1260 = vmatprep.subr.mxu0 0.0
        %1261 = vmatpush2.msra.mxu0 0.0
        %1262 = vmatprep.subr.mxu0 0.0
        %1263 = vmatpush2.msra.mxu0 0.0
        %1264 = vmatprep.subr.mxu0 0.0
        %1265 = vmatpush2.msra.mxu0 0.0
        %1266 = vmatprep.subr.mxu0 0.0
        %1267 = vmatpush2.msra.mxu0 0.0
        %1268 = vmatprep.subr.mxu0 0.0
        %1269 = vmatpush2.msra.mxu0 0.0
        %1270 = vmatprep.subr.mxu0 0.0
        %1271 = vmatpush2.msra.mxu0 0.0
        %1272 = vmatprep.mubr.f32.mxu0 0.0
        %1273 = vmatmul.mubr.f32.gmra.mxu0 %v1066
        %v1274 = vpop.f32.mrf.mxu0
        %v1275 = vadd.f32 %v1055, %v1274
        %v1276 = vpop.f32.mrf.mxu0
        %1277 = vdwg.mxu0
        %1278 = vmatprep.subr.mxu0 0.0
        %1279 = vmatpush1.msra.mxu0 0.0
        %1280 = vmatprep.subr.mxu0 0.0
        %1281 = vmatpush1.msra.mxu0 0.0
        %1282 = vmatprep.subr.mxu0 0.0
        %1283 = vmatpush1.msra.mxu0 0.0
        %1284 = vmatprep.subr.mxu0 0.0
        %1285 = vmatpush1.msra.mxu0 0.0
        %1286 = vmatprep.subr.mxu0 0.0
        %1287 = vmatpush1.msra.mxu0 0.0
        %1288 = vmatprep.subr.mxu0 0.0
        %1289 = vmatpush1.msra.mxu0 0.0
        %1290 = vmatprep.subr.mxu0 0.0
        %1291 = vmatpush1.msra.mxu0 0.0
        %1292 = vmatprep.subr.mxu0 0.0
        %1293 = vmatpush1.msra.mxu0 0.0
        %1294 = vmatprep.subr.mxu0 0.0
        %1295 = vmatpush1.msra.mxu0 0.0
        %1296 = vmatprep.subr.mxu0 0.0
        %1297 = vmatpush1.msra.mxu0 0.0
        %1298 = vmatprep.subr.mxu0 0.0
        %1299 = vmatpush1.msra.mxu0 0.0
        %1300 = vmatprep.subr.mxu0 0.0
        %1301 = vmatpush1.msra.mxu0 0.0
        %1302 = vmatprep.subr.mxu0 0.0
        %1303 = vmatpush1.msra.mxu0 %v1035
        %1304 = vmatprep.subr.mxu0 0.0
        %1305 = vmatpush1.msra.mxu0 %v1034
        %1306 = vmatprep.subr.mxu0 0.0
        %1307 = vmatpush1.msra.mxu0 %v1033
        %1308 = vmatprep.subr.mxu0 0.0
        %1309 = vmatpush1.msra.mxu0 %v1032
        %1310 = vmatprep.subr.mxu0 0.0
        %1311 = vmatpush2.msra.mxu0 0.0
        %1312 = vmatprep.subr.mxu0 0.0
        %1313 = vmatpush2.msra.mxu0 0.0
        %1314 = vmatprep.subr.mxu0 0.0
        %1315 = vmatpush2.msra.mxu0 0.0
        %1316 = vmatprep.subr.mxu0 0.0
        %1317 = vmatpush2.msra.mxu0 0.0
        %1318 = vmatprep.subr.mxu0 0.0
        %1319 = vmatpush2.msra.mxu0 0.0
        %1320 = vmatprep.subr.mxu0 0.0
        %1321 = vmatpush2.msra.mxu0 0.0
        %1322 = vmatprep.subr.mxu0 0.0
        %1323 = vmatpush2.msra.mxu0 0.0
        %1324 = vmatprep.subr.mxu0 0.0
        %1325 = vmatpush2.msra.mxu0 0.0
        %1326 = vmatprep.subr.mxu0 0.0
        %1327 = vmatpush2.msra.mxu0 0.0
        %1328 = vmatprep.subr.mxu0 0.0
        %1329 = vmatpush2.msra.mxu0 0.0
        %1330 = vmatprep.subr.mxu0 0.0
        %1331 = vmatpush2.msra.mxu0 0.0
        %1332 = vmatprep.subr.mxu0 0.0
        %1333 = vmatpush2.msra.mxu0 0.0
        %1334 = vmatprep.subr.mxu0 0.0
        %1335 = vmatpush2.msra.mxu0 0.0
        %1336 = vmatprep.subr.mxu0 0.0
        %1337 = vmatpush2.msra.mxu0 0.0
        %1338 = vmatprep.subr.mxu0 0.0
        %1339 = vmatpush2.msra.mxu0 0.0
        %1340 = vmatprep.subr.mxu0 0.0
        %1341 = vmatpush2.msra.mxu0 0.0
        %1342 = vmatprep.mubr.f32.mxu0 0.0
        %1343 = vmatmul.mubr.f32.gmra.mxu0 %v1066
        %v1344 = vpop.f32.mrf.mxu0
        %v1345 = vadd.f32 %v1059, %v1344
        %v1346 = vpop.f32.mrf.mxu0
        %1347 = vdwg.mxu0
        %v1348 = vld [vmem:[%s9] sm:$0xff]
        %v1349 = vld [vmem:[%s9 + $0x8] sm:$0xff]
        %v1350 = vld [vmem:[%s9 + $0x10] sm:$0xff]
        %v1351 = vld [vmem:[%s9 + $0x18] sm:$0xff]
        %v1352 = vld [vmem:[%s9 + $0x20] sm:$0xff]
        %v1353 = vld [vmem:[%s9 + $0x28] sm:$0xff]
        %v1354 = vld [vmem:[%s9 + $0x30] sm:$0xff]
        %v1355 = vld [vmem:[%s9 + $0x38] sm:$0xff]
        %v1356 = vld [vmem:[%s9 + $0x40] sm:$0xff]
        %v1357 = vld [vmem:[%s9 + $0x48] sm:$0xff]
        %v1358 = vld [vmem:[%s9 + $0x50] sm:$0xff]
        %v1359 = vld [vmem:[%s9 + $0x58] sm:$0xff]
        %v1360 = vld [vmem:[%s9 + $0x60] sm:$0xff]
        %v1361 = vld [vmem:[%s9 + $0x68] sm:$0xff]
        %v1362 = vld [vmem:[%s9 + $0x70] sm:$0xff]
        %v1363 = vld [vmem:[%s9 + $0x78] sm:$0xff]
        %v1364 = vld [vmem:[%s15] sm:$0x1]
        %v1365 = vld [vmem:[%s15 + $0x1] sm:$0x1]
        %v1366 = vld [vmem:[%s15 + $0x2] sm:$0x1]
        %v1367 = vld [vmem:[%s15 + $0x3] sm:$0x1]
        %v1372 = vlaneseq
        %v1373 = vshrl.u32 %v1372, 7
        %v1374 = vsub.s32 0, %v1373
        %v1375 = vrot.slane %v1364, %v1374
        %v1376 = vlaneseq
        %v1377 = vshrl.u32 %v1376, 7
        %v1378 = vsub.s32 0, %v1377
        %v1379 = vrot.slane %v1365, %v1378
        %v1380 = vlaneseq
        %v1381 = vshrl.u32 %v1380, 7
        %v1382 = vsub.s32 0, %v1381
        %v1383 = vrot.slane %v1366, %v1382
        %v1384 = vlaneseq
        %v1385 = vshrl.u32 %v1384, 7
        %v1386 = vsub.s32 0, %v1385
        %v1387 = vrot.slane %v1367, %v1386
        %1392 = vmatprep.subr.mxu0 0.0
        %1393 = vmatpush1.msra.mxu0 0.0
        %1394 = vmatprep.subr.mxu0 0.0
        %1395 = vmatpush1.msra.mxu0 0.0
        %1396 = vmatprep.subr.mxu0 0.0
        %1397 = vmatpush1.msra.mxu0 0.0
        %1398 = vmatprep.subr.mxu0 0.0
        %1399 = vmatpush1.msra.mxu0 0.0
        %1400 = vmatprep.subr.mxu0 0.0
        %1401 = vmatpush1.msra.mxu0 0.0
        %1402 = vmatprep.subr.mxu0 0.0
        %1403 = vmatpush1.msra.mxu0 0.0
        %1404 = vmatprep.subr.mxu0 0.0
        %1405 = vmatpush1.msra.mxu0 0.0
        %1406 = vmatprep.subr.mxu0 0.0
        %1407 = vmatpush1.msra.mxu0 0.0
        %1408 = vmatprep.subr.mxu0 0.0
        %1409 = vmatpush1.msra.mxu0 0.0
        %1410 = vmatprep.subr.mxu0 0.0
        %1411 = vmatpush1.msra.mxu0 0.0
        %1412 = vmatprep.subr.mxu0 0.0
        %1413 = vmatpush1.msra.mxu0 0.0
        %1414 = vmatprep.subr.mxu0 0.0
        %1415 = vmatpush1.msra.mxu0 0.0
        %1416 = vmatprep.subr.mxu0 0.0
        %1417 = vmatpush1.msra.mxu0 %v1351
        %1418 = vmatprep.subr.mxu0 0.0
        %1419 = vmatpush1.msra.mxu0 %v1350
        %1420 = vmatprep.subr.mxu0 0.0
        %1421 = vmatpush1.msra.mxu0 %v1349
        %1422 = vmatprep.subr.mxu0 0.0
        %1423 = vmatpush1.msra.mxu0 %v1348
        %1424 = vmatprep.subr.mxu0 0.0
        %1425 = vmatpush2.msra.mxu0 0.0
        %1426 = vmatprep.subr.mxu0 0.0
        %1427 = vmatpush2.msra.mxu0 0.0
        %1428 = vmatprep.subr.mxu0 0.0
        %1429 = vmatpush2.msra.mxu0 0.0
        %1430 = vmatprep.subr.mxu0 0.0
        %1431 = vmatpush2.msra.mxu0 0.0
        %1432 = vmatprep.subr.mxu0 0.0
        %1433 = vmatpush2.msra.mxu0 0.0
        %1434 = vmatprep.subr.mxu0 0.0
        %1435 = vmatpush2.msra.mxu0 0.0
        %1436 = vmatprep.subr.mxu0 0.0
        %1437 = vmatpush2.msra.mxu0 0.0
        %1438 = vmatprep.subr.mxu0 0.0
        %1439 = vmatpush2.msra.mxu0 0.0
        %1440 = vmatprep.subr.mxu0 0.0
        %1441 = vmatpush2.msra.mxu0 0.0
        %1442 = vmatprep.subr.mxu0 0.0
        %1443 = vmatpush2.msra.mxu0 0.0
        %1444 = vmatprep.subr.mxu0 0.0
        %1445 = vmatpush2.msra.mxu0 0.0
        %1446 = vmatprep.subr.mxu0 0.0
        %1447 = vmatpush2.msra.mxu0 0.0
        %1448 = vmatprep.subr.mxu0 0.0
        %1449 = vmatpush2.msra.mxu0 0.0
        %1450 = vmatprep.subr.mxu0 0.0
        %1451 = vmatpush2.msra.mxu0 0.0
        %1452 = vmatprep.subr.mxu0 0.0
        %1453 = vmatpush2.msra.mxu0 0.0
        %1454 = vmatprep.subr.mxu0 0.0
        %1455 = vmatpush2.msra.mxu0 0.0
        %1456 = vmatprep.mubr.f32.mxu0 0.0
        %1457 = vmatmul.mubr.f32.gmra.mxu0 %v1066
        %v1458 = vpop.f32.mrf.mxu0
        %v1459 = vadd.f32 %v1375, %v1458
        %v1460 = vpop.f32.mrf.mxu0
        %1461 = vdwg.mxu0
        %1462 = vmatprep.subr.mxu0 0.0
        %1463 = vmatpush1.msra.mxu0 0.0
        %1464 = vmatprep.subr.mxu0 0.0
        %1465 = vmatpush1.msra.mxu0 0.0
        %1466 = vmatprep.subr.mxu0 0.0
        %1467 = vmatpush1.msra.mxu0 0.0
        %1468 = vmatprep.subr.mxu0 0.0
        %1469 = vmatpush1.msra.mxu0 0.0
        %1470 = vmatprep.subr.mxu0 0.0
        %1471 = vmatpush1.msra.mxu0 0.0
        %1472 = vmatprep.subr.mxu0 0.0
        %1473 = vmatpush1.msra.mxu0 0.0
        %1474 = vmatprep.subr.mxu0 0.0
        %1475 = vmatpush1.msra.mxu0 0.0
        %1476 = vmatprep.subr.mxu0 0.0
        %1477 = vmatpush1.msra.mxu0 0.0
        %1478 = vmatprep.subr.mxu0 0.0
        %1479 = vmatpush1.msra.mxu0 0.0
        %1480 = vmatprep.subr.mxu0 0.0
        %1481 = vmatpush1.msra.mxu0 0.0
        %1482 = vmatprep.subr.mxu0 0.0
        %1483 = vmatpush1.msra.mxu0 0.0
        %1484 = vmatprep.subr.mxu0 0.0
        %1485 = vmatpush1.msra.mxu0 0.0
        %1486 = vmatprep.subr.mxu0 0.0
        %1487 = vmatpush1.msra.mxu0 %v1355
        %1488 = vmatprep.subr.mxu0 0.0
        %1489 = vmatpush1.msra.mxu0 %v1354
        %1490 = vmatprep.subr.mxu0 0.0
        %1491 = vmatpush1.msra.mxu0 %v1353
        %1492 = vmatprep.subr.mxu0 0.0
        %1493 = vmatpush1.msra.mxu0 %v1352
        %1494 = vmatprep.subr.mxu0 0.0
        %1495 = vmatpush2.msra.mxu0 0.0
        %1496 = vmatprep.subr.mxu0 0.0
        %1497 = vmatpush2.msra.mxu0 0.0
        %1498 = vmatprep.subr.mxu0 0.0
        %1499 = vmatpush2.msra.mxu0 0.0
        %1500 = vmatprep.subr.mxu0 0.0
        %1501 = vmatpush2.msra.mxu0 0.0
        %1502 = vmatprep.subr.mxu0 0.0
        %1503 = vmatpush2.msra.mxu0 0.0
        %1504 = vmatprep.subr.mxu0 0.0
        %1505 = vmatpush2.msra.mxu0 0.0
        %1506 = vmatprep.subr.mxu0 0.0
        %1507 = vmatpush2.msra.mxu0 0.0
        %1508 = vmatprep.subr.mxu0 0.0
        %1509 = vmatpush2.msra.mxu0 0.0
        %1510 = vmatprep.subr.mxu0 0.0
        %1511 = vmatpush2.msra.mxu0 0.0
        %1512 = vmatprep.subr.mxu0 0.0
        %1513 = vmatpush2.msra.mxu0 0.0
        %1514 = vmatprep.subr.mxu0 0.0
        %1515 = vmatpush2.msra.mxu0 0.0
        %1516 = vmatprep.subr.mxu0 0.0
        %1517 = vmatpush2.msra.mxu0 0.0
        %1518 = vmatprep.subr.mxu0 0.0
        %1519 = vmatpush2.msra.mxu0 0.0
        %1520 = vmatprep.subr.mxu0 0.0
        %1521 = vmatpush2.msra.mxu0 0.0
        %1522 = vmatprep.subr.mxu0 0.0
        %1523 = vmatpush2.msra.mxu0 0.0
        %1524 = vmatprep.subr.mxu0 0.0
        %1525 = vmatpush2.msra.mxu0 0.0
        %1526 = vmatprep.mubr.f32.mxu0 0.0
        %1527 = vmatmul.mubr.f32.gmra.mxu0 %v1066
        %v1528 = vpop.f32.mrf.mxu0
        %v1529 = vadd.f32 %v1379, %v1528
        %v1530 = vpop.f32.mrf.mxu0
        %1531 = vdwg.mxu0
        %1532 = vmatprep.subr.mxu0 0.0
        %1533 = vmatpush1.msra.mxu0 0.0
        %1534 = vmatprep.subr.mxu0 0.0
        %1535 = vmatpush1.msra.mxu0 0.0
        %1536 = vmatprep.subr.mxu0 0.0
        %1537 = vmatpush1.msra.mxu0 0.0
        %1538 = vmatprep.subr.mxu0 0.0
        %1539 = vmatpush1.msra.mxu0 0.0
        %1540 = vmatprep.subr.mxu0 0.0
        %1541 = vmatpush1.msra.mxu0 0.0
        %1542 = vmatprep.subr.mxu0 0.0
        %1543 = vmatpush1.msra.mxu0 0.0
        %1544 = vmatprep.subr.mxu0 0.0
        %1545 = vmatpush1.msra.mxu0 0.0
        %1546 = vmatprep.subr.mxu0 0.0
        %1547 = vmatpush1.msra.mxu0 0.0
        %1548 = vmatprep.subr.mxu0 0.0
        %1549 = vmatpush1.msra.mxu0 0.0
        %1550 = vmatprep.subr.mxu0 0.0
        %1551 = vmatpush1.msra.mxu0 0.0
        %1552 = vmatprep.subr.mxu0 0.0
        %1553 = vmatpush1.msra.mxu0 0.0
        %1554 = vmatprep.subr.mxu0 0.0
        %1555 = vmatpush1.msra.mxu0 0.0
        %1556 = vmatprep.subr.mxu0 0.0
        %1557 = vmatpush1.msra.mxu0 %v1359
        %1558 = vmatprep.subr.mxu0 0.0
        %1559 = vmatpush1.msra.mxu0 %v1358
        %1560 = vmatprep.subr.mxu0 0.0
        %1561 = vmatpush1.msra.mxu0 %v1357
        %1562 = vmatprep.subr.mxu0 0.0
        %1563 = vmatpush1.msra.mxu0 %v1356
        %1564 = vmatprep.subr.mxu0 0.0
        %1565 = vmatpush2.msra.mxu0 0.0
        %1566 = vmatprep.subr.mxu0 0.0
        %1567 = vmatpush2.msra.mxu0 0.0
        %1568 = vmatprep.subr.mxu0 0.0
        %1569 = vmatpush2.msra.mxu0 0.0
        %1570 = vmatprep.subr.mxu0 0.0
        %1571 = vmatpush2.msra.mxu0 0.0
        %1572 = vmatprep.subr.mxu0 0.0
        %1573 = vmatpush2.msra.mxu0 0.0
        %1574 = vmatprep.subr.mxu0 0.0
        %1575 = vmatpush2.msra.mxu0 0.0
        %1576 = vmatprep.subr.mxu0 0.0
        %1577 = vmatpush2.msra.mxu0 0.0
        %1578 = vmatprep.subr.mxu0 0.0
        %1579 = vmatpush2.msra.mxu0 0.0
        %1580 = vmatprep.subr.mxu0 0.0
        %1581 = vmatpush2.msra.mxu0 0.0
        %1582 = vmatprep.subr.mxu0 0.0
        %1583 = vmatpush2.msra.mxu0 0.0
        %1584 = vmatprep.subr.mxu0 0.0
        %1585 = vmatpush2.msra.mxu0 0.0
        %1586 = vmatprep.subr.mxu0 0.0
        %1587 = vmatpush2.msra.mxu0 0.0
        %1588 = vmatprep.subr.mxu0 0.0
        %1589 = vmatpush2.msra.mxu0 0.0
        %1590 = vmatprep.subr.mxu0 0.0
        %1591 = vmatpush2.msra.mxu0 0.0
        %1592 = vmatprep.subr.mxu0 0.0
        %1593 = vmatpush2.msra.mxu0 0.0
        %1594 = vmatprep.subr.mxu0 0.0
        %1595 = vmatpush2.msra.mxu0 0.0
        %1596 = vmatprep.mubr.f32.mxu0 0.0
        %1597 = vmatmul.mubr.f32.gmra.mxu0 %v1066
        %v1598 = vpop.f32.mrf.mxu0
        %v1599 = vadd.f32 %v1383, %v1598
        %v1600 = vpop.f32.mrf.mxu0
        %1601 = vdwg.mxu0
        %1602 = vmatprep.subr.mxu0 0.0
        %1603 = vmatpush1.msra.mxu0 0.0
        %1604 = vmatprep.subr.mxu0 0.0
        %1605 = vmatpush1.msra.mxu0 0.0
        %1606 = vmatprep.subr.mxu0 0.0
        %1607 = vmatpush1.msra.mxu0 0.0
        %1608 = vmatprep.subr.mxu0 0.0
        %1609 = vmatpush1.msra.mxu0 0.0
        %1610 = vmatprep.subr.mxu0 0.0
        %1611 = vmatpush1.msra.mxu0 0.0
        %1612 = vmatprep.subr.mxu0 0.0
        %1613 = vmatpush1.msra.mxu0 0.0
        %1614 = vmatprep.subr.mxu0 0.0
        %1615 = vmatpush1.msra.mxu0 0.0
        %1616 = vmatprep.subr.mxu0 0.0
        %1617 = vmatpush1.msra.mxu0 0.0
        %1618 = vmatprep.subr.mxu0 0.0
        %1619 = vmatpush1.msra.mxu0 0.0
        %1620 = vmatprep.subr.mxu0 0.0
        %1621 = vmatpush1.msra.mxu0 0.0
        %1622 = vmatprep.subr.mxu0 0.0
        %1623 = vmatpush1.msra.mxu0 0.0
        %1624 = vmatprep.subr.mxu0 0.0
        %1625 = vmatpush1.msra.mxu0 0.0
        %1626 = vmatprep.subr.mxu0 0.0
        %1627 = vmatpush1.msra.mxu0 %v1363
        %1628 = vmatprep.subr.mxu0 0.0
        %1629 = vmatpush1.msra.mxu0 %v1362
        %1630 = vmatprep.subr.mxu0 0.0
        %1631 = vmatpush1.msra.mxu0 %v1361
        %1632 = vmatprep.subr.mxu0 0.0
        %1633 = vmatpush1.msra.mxu0 %v1360
        %1634 = vmatprep.subr.mxu0 0.0
        %1635 = vmatpush2.msra.mxu0 0.0
        %1636 = vmatprep.subr.mxu0 0.0
        %1637 = vmatpush2.msra.mxu0 0.0
        %1638 = vmatprep.subr.mxu0 0.0
        %1639 = vmatpush2.msra.mxu0 0.0
        %1640 = vmatprep.subr.mxu0 0.0
        %1641 = vmatpush2.msra.mxu0 0.0
        %1642 = vmatprep.subr.mxu0 0.0
        %1643 = vmatpush2.msra.mxu0 0.0
        %1644 = vmatprep.subr.mxu0 0.0
        %1645 = vmatpush2.msra.mxu0 0.0
        %1646 = vmatprep.subr.mxu0 0.0
        %1647 = vmatpush2.msra.mxu0 0.0
        %1648 = vmatprep.subr.mxu0 0.0
        %1649 = vmatpush2.msra.mxu0 0.0
        %1650 = vmatprep.subr.mxu0 0.0
        %1651 = vmatpush2.msra.mxu0 0.0
        %1652 = vmatprep.subr.mxu0 0.0
        %1653 = vmatpush2.msra.mxu0 0.0
        %1654 = vmatprep.subr.mxu0 0.0
        %1655 = vmatpush2.msra.mxu0 0.0
        %1656 = vmatprep.subr.mxu0 0.0
        %1657 = vmatpush2.msra.mxu0 0.0
        %1658 = vmatprep.subr.mxu0 0.0
        %1659 = vmatpush2.msra.mxu0 0.0
        %1660 = vmatprep.subr.mxu0 0.0
        %1661 = vmatpush2.msra.mxu0 0.0
        %1662 = vmatprep.subr.mxu0 0.0
        %1663 = vmatpush2.msra.mxu0 0.0
        %1664 = vmatprep.subr.mxu0 0.0
        %1665 = vmatpush2.msra.mxu0 0.0
        %1666 = vmatprep.mubr.f32.mxu0 0.0
        %1667 = vmatmul.mubr.f32.gmra.mxu0 %v1066
        %v1668 = vpop.f32.mrf.mxu0
        %v1669 = vadd.f32 %v1387, %v1668
        %v1670 = vpop.f32.mrf.mxu0
        %1671 = vdwg.mxu0
        %v1672 = vld [vmem:[%s11] sm:$0xff]
        %v1673 = vld [vmem:[%s11 + $0x8] sm:$0xff]
        %v1674 = vld [vmem:[%s11 + $0x10] sm:$0xff]
        %v1675 = vld [vmem:[%s11 + $0x18] sm:$0xff]
        %v1676 = vld [vmem:[%s11 + $0x20] sm:$0xff]
        %v1677 = vld [vmem:[%s11 + $0x28] sm:$0xff]
        %v1678 = vld [vmem:[%s11 + $0x30] sm:$0xff]
        %v1679 = vld [vmem:[%s11 + $0x38] sm:$0xff]
        %v1680 = vld [vmem:[%s11 + $0x40] sm:$0xff]
        %v1681 = vld [vmem:[%s11 + $0x48] sm:$0xff]
        %v1682 = vld [vmem:[%s11 + $0x50] sm:$0xff]
        %v1683 = vld [vmem:[%s11 + $0x58] sm:$0xff]
        %v1684 = vld [vmem:[%s11 + $0x60] sm:$0xff]
        %v1685 = vld [vmem:[%s11 + $0x68] sm:$0xff]
        %v1686 = vld [vmem:[%s11 + $0x70] sm:$0xff]
        %v1687 = vld [vmem:[%s11 + $0x78] sm:$0xff]
        %v1688 = vld [vmem:[%s17] sm:$0x1]
        %v1689 = vld [vmem:[%s17 + $0x1] sm:$0x1]
        %v1690 = vld [vmem:[%s17 + $0x2] sm:$0x1]
        %v1691 = vld [vmem:[%s17 + $0x3] sm:$0x1]
        %v1696 = vlaneseq
        %v1697 = vshrl.u32 %v1696, 7
        %v1698 = vsub.s32 0, %v1697
        %v1699 = vrot.slane %v1688, %v1698
        %v1700 = vlaneseq
        %v1701 = vshrl.u32 %v1700, 7
        %v1702 = vsub.s32 0, %v1701
        %v1703 = vrot.slane %v1689, %v1702
        %v1704 = vlaneseq
        %v1705 = vshrl.u32 %v1704, 7
        %v1706 = vsub.s32 0, %v1705
        %v1707 = vrot.slane %v1690, %v1706
        %v1708 = vlaneseq
        %v1709 = vshrl.u32 %v1708, 7
        %v1710 = vsub.s32 0, %v1709
        %v1711 = vrot.slane %v1691, %v1710
        %1716 = vmatprep.subr.mxu0 0.0
        %1717 = vmatpush1.msra.mxu0 0.0
        %1718 = vmatprep.subr.mxu0 0.0
        %1719 = vmatpush1.msra.mxu0 0.0
        %1720 = vmatprep.subr.mxu0 0.0
        %1721 = vmatpush1.msra.mxu0 0.0
        %1722 = vmatprep.subr.mxu0 0.0
        %1723 = vmatpush1.msra.mxu0 0.0
        %1724 = vmatprep.subr.mxu0 0.0
        %1725 = vmatpush1.msra.mxu0 0.0
        %1726 = vmatprep.subr.mxu0 0.0
        %1727 = vmatpush1.msra.mxu0 0.0
        %1728 = vmatprep.subr.mxu0 0.0
        %1729 = vmatpush1.msra.mxu0 0.0
        %1730 = vmatprep.subr.mxu0 0.0
        %1731 = vmatpush1.msra.mxu0 0.0
        %1732 = vmatprep.subr.mxu0 0.0
        %1733 = vmatpush1.msra.mxu0 0.0
        %1734 = vmatprep.subr.mxu0 0.0
        %1735 = vmatpush1.msra.mxu0 0.0
        %1736 = vmatprep.subr.mxu0 0.0
        %1737 = vmatpush1.msra.mxu0 0.0
        %1738 = vmatprep.subr.mxu0 0.0
        %1739 = vmatpush1.msra.mxu0 0.0
        %1740 = vmatprep.subr.mxu0 0.0
        %1741 = vmatpush1.msra.mxu0 %v1675
        %1742 = vmatprep.subr.mxu0 0.0
        %1743 = vmatpush1.msra.mxu0 %v1674
        %1744 = vmatprep.subr.mxu0 0.0
        %1745 = vmatpush1.msra.mxu0 %v1673
        %1746 = vmatprep.subr.mxu0 0.0
        %1747 = vmatpush1.msra.mxu0 %v1672
        %1748 = vmatprep.subr.mxu0 0.0
        %1749 = vmatpush2.msra.mxu0 0.0
        %1750 = vmatprep.subr.mxu0 0.0
        %1751 = vmatpush2.msra.mxu0 0.0
        %1752 = vmatprep.subr.mxu0 0.0
        %1753 = vmatpush2.msra.mxu0 0.0
        %1754 = vmatprep.subr.mxu0 0.0
        %1755 = vmatpush2.msra.mxu0 0.0
        %1756 = vmatprep.subr.mxu0 0.0
        %1757 = vmatpush2.msra.mxu0 0.0
        %1758 = vmatprep.subr.mxu0 0.0
        %1759 = vmatpush2.msra.mxu0 0.0
        %1760 = vmatprep.subr.mxu0 0.0
        %1761 = vmatpush2.msra.mxu0 0.0
        %1762 = vmatprep.subr.mxu0 0.0
        %1763 = vmatpush2.msra.mxu0 0.0
        %1764 = vmatprep.subr.mxu0 0.0
        %1765 = vmatpush2.msra.mxu0 0.0
        %1766 = vmatprep.subr.mxu0 0.0
        %1767 = vmatpush2.msra.mxu0 0.0
        %1768 = vmatprep.subr.mxu0 0.0
        %1769 = vmatpush2.msra.mxu0 0.0
        %1770 = vmatprep.subr.mxu0 0.0
        %1771 = vmatpush2.msra.mxu0 0.0
        %1772 = vmatprep.subr.mxu0 0.0
        %1773 = vmatpush2.msra.mxu0 0.0
        %1774 = vmatprep.subr.mxu0 0.0
        %1775 = vmatpush2.msra.mxu0 0.0
        %1776 = vmatprep.subr.mxu0 0.0
        %1777 = vmatpush2.msra.mxu0 0.0
        %1778 = vmatprep.subr.mxu0 0.0
        %1779 = vmatpush2.msra.mxu0 0.0
        %1780 = vmatprep.mubr.f32.mxu0 0.0
        %1781 = vmatmul.mubr.f32.gmra.mxu0 %v1066
        %v1782 = vpop.f32.mrf.mxu0
        %v1783 = vadd.f32 %v1699, %v1782
        %v1784 = vpop.f32.mrf.mxu0
        %1785 = vdwg.mxu0
        %1786 = vmatprep.subr.mxu0 0.0
        %1787 = vmatpush1.msra.mxu0 0.0
        %1788 = vmatprep.subr.mxu0 0.0
        %1789 = vmatpush1.msra.mxu0 0.0
        %1790 = vmatprep.subr.mxu0 0.0
        %1791 = vmatpush1.msra.mxu0 0.0
        %1792 = vmatprep.subr.mxu0 0.0
        %1793 = vmatpush1.msra.mxu0 0.0
        %1794 = vmatprep.subr.mxu0 0.0
        %1795 = vmatpush1.msra.mxu0 0.0
        %1796 = vmatprep.subr.mxu0 0.0
        %1797 = vmatpush1.msra.mxu0 0.0
        %1798 = vmatprep.subr.mxu0 0.0
        %1799 = vmatpush1.msra.mxu0 0.0
        %1800 = vmatprep.subr.mxu0 0.0
        %1801 = vmatpush1.msra.mxu0 0.0
        %1802 = vmatprep.subr.mxu0 0.0
        %1803 = vmatpush1.msra.mxu0 0.0
        %1804 = vmatprep.subr.mxu0 0.0
        %1805 = vmatpush1.msra.mxu0 0.0
        %1806 = vmatprep.subr.mxu0 0.0
        %1807 = vmatpush1.msra.mxu0 0.0
        %1808 = vmatprep.subr.mxu0 0.0
        %1809 = vmatpush1.msra.mxu0 0.0
        %1810 = vmatprep.subr.mxu0 0.0
        %1811 = vmatpush1.msra.mxu0 %v1679
        %1812 = vmatprep.subr.mxu0 0.0
        %1813 = vmatpush1.msra.mxu0 %v1678
        %1814 = vmatprep.subr.mxu0 0.0
        %1815 = vmatpush1.msra.mxu0 %v1677
        %1816 = vmatprep.subr.mxu0 0.0
        %1817 = vmatpush1.msra.mxu0 %v1676
        %1818 = vmatprep.subr.mxu0 0.0
        %1819 = vmatpush2.msra.mxu0 0.0
        %1820 = vmatprep.subr.mxu0 0.0
        %1821 = vmatpush2.msra.mxu0 0.0
        %1822 = vmatprep.subr.mxu0 0.0
        %1823 = vmatpush2.msra.mxu0 0.0
        %1824 = vmatprep.subr.mxu0 0.0
        %1825 = vmatpush2.msra.mxu0 0.0
        %1826 = vmatprep.subr.mxu0 0.0
        %1827 = vmatpush2.msra.mxu0 0.0
        %1828 = vmatprep.subr.mxu0 0.0
        %1829 = vmatpush2.msra.mxu0 0.0
        %1830 = vmatprep.subr.mxu0 0.0
        %1831 = vmatpush2.msra.mxu0 0.0
        %1832 = vmatprep.subr.mxu0 0.0
        %1833 = vmatpush2.msra.mxu0 0.0
        %1834 = vmatprep.subr.mxu0 0.0
        %1835 = vmatpush2.msra.mxu0 0.0
        %1836 = vmatprep.subr.mxu0 0.0
        %1837 = vmatpush2.msra.mxu0 0.0
        %1838 = vmatprep.subr.mxu0 0.0
        %1839 = vmatpush2.msra.mxu0 0.0
        %1840 = vmatprep.subr.mxu0 0.0
        %1841 = vmatpush2.msra.mxu0 0.0
        %1842 = vmatprep.subr.mxu0 0.0
        %1843 = vmatpush2.msra.mxu0 0.0
        %1844 = vmatprep.subr.mxu0 0.0
        %1845 = vmatpush2.msra.mxu0 0.0
        %1846 = vmatprep.subr.mxu0 0.0
        %1847 = vmatpush2.msra.mxu0 0.0
        %1848 = vmatprep.subr.mxu0 0.0
        %1849 = vmatpush2.msra.mxu0 0.0
        %1850 = vmatprep.mubr.f32.mxu0 0.0
        %1851 = vmatmul.mubr.f32.gmra.mxu0 %v1066
        %v1852 = vpop.f32.mrf.mxu0
        %v1853 = vadd.f32 %v1703, %v1852
        %v1854 = vpop.f32.mrf.mxu0
        %1855 = vdwg.mxu0
        %1856 = vmatprep.subr.mxu0 0.0
        %1857 = vmatpush1.msra.mxu0 0.0
        %1858 = vmatprep.subr.mxu0 0.0
        %1859 = vmatpush1.msra.mxu0 0.0
        %1860 = vmatprep.subr.mxu0 0.0
        %1861 = vmatpush1.msra.mxu0 0.0
        %1862 = vmatprep.subr.mxu0 0.0
        %1863 = vmatpush1.msra.mxu0 0.0
        %1864 = vmatprep.subr.mxu0 0.0
        %1865 = vmatpush1.msra.mxu0 0.0
        %1866 = vmatprep.subr.mxu0 0.0
        %1867 = vmatpush1.msra.mxu0 0.0
        %1868 = vmatprep.subr.mxu0 0.0
        %1869 = vmatpush1.msra.mxu0 0.0
        %1870 = vmatprep.subr.mxu0 0.0
        %1871 = vmatpush1.msra.mxu0 0.0
        %1872 = vmatprep.subr.mxu0 0.0
        %1873 = vmatpush1.msra.mxu0 0.0
        %1874 = vmatprep.subr.mxu0 0.0
        %1875 = vmatpush1.msra.mxu0 0.0
        %1876 = vmatprep.subr.mxu0 0.0
        %1877 = vmatpush1.msra.mxu0 0.0
        %1878 = vmatprep.subr.mxu0 0.0
        %1879 = vmatpush1.msra.mxu0 0.0
        %1880 = vmatprep.subr.mxu0 0.0
        %1881 = vmatpush1.msra.mxu0 %v1683
        %1882 = vmatprep.subr.mxu0 0.0
        %1883 = vmatpush1.msra.mxu0 %v1682
        %1884 = vmatprep.subr.mxu0 0.0
        %1885 = vmatpush1.msra.mxu0 %v1681
        %1886 = vmatprep.subr.mxu0 0.0
        %1887 = vmatpush1.msra.mxu0 %v1680
        %1888 = vmatprep.subr.mxu0 0.0
        %1889 = vmatpush2.msra.mxu0 0.0
        %1890 = vmatprep.subr.mxu0 0.0
        %1891 = vmatpush2.msra.mxu0 0.0
        %1892 = vmatprep.subr.mxu0 0.0
        %1893 = vmatpush2.msra.mxu0 0.0
        %1894 = vmatprep.subr.mxu0 0.0
        %1895 = vmatpush2.msra.mxu0 0.0
        %1896 = vmatprep.subr.mxu0 0.0
        %1897 = vmatpush2.msra.mxu0 0.0
        %1898 = vmatprep.subr.mxu0 0.0
        %1899 = vmatpush2.msra.mxu0 0.0
        %1900 = vmatprep.subr.mxu0 0.0
        %1901 = vmatpush2.msra.mxu0 0.0
        %1902 = vmatprep.subr.mxu0 0.0
        %1903 = vmatpush2.msra.mxu0 0.0
        %1904 = vmatprep.subr.mxu0 0.0
        %1905 = vmatpush2.msra.mxu0 0.0
        %1906 = vmatprep.subr.mxu0 0.0
        %1907 = vmatpush2.msra.mxu0 0.0
        %1908 = vmatprep.subr.mxu0 0.0
        %1909 = vmatpush2.msra.mxu0 0.0
        %1910 = vmatprep.subr.mxu0 0.0
        %1911 = vmatpush2.msra.mxu0 0.0
        %1912 = vmatprep.subr.mxu0 0.0
        %1913 = vmatpush2.msra.mxu0 0.0
        %1914 = vmatprep.subr.mxu0 0.0
        %1915 = vmatpush2.msra.mxu0 0.0
        %1916 = vmatprep.subr.mxu0 0.0
        %1917 = vmatpush2.msra.mxu0 0.0
        %1918 = vmatprep.subr.mxu0 0.0
        %1919 = vmatpush2.msra.mxu0 0.0
        %1920 = vmatprep.mubr.f32.mxu0 0.0
        %1921 = vmatmul.mubr.f32.gmra.mxu0 %v1066
        %v1922 = vpop.f32.mrf.mxu0
        %v1923 = vadd.f32 %v1707, %v1922
        %v1924 = vpop.f32.mrf.mxu0
        %1925 = vdwg.mxu0
        %1926 = vmatprep.subr.mxu0 0.0
        %1927 = vmatpush1.msra.mxu0 0.0
        %1928 = vmatprep.subr.mxu0 0.0
        %1929 = vmatpush1.msra.mxu0 0.0
        %1930 = vmatprep.subr.mxu0 0.0
        %1931 = vmatpush1.msra.mxu0 0.0
        %1932 = vmatprep.subr.mxu0 0.0
        %1933 = vmatpush1.msra.mxu0 0.0
        %1934 = vmatprep.subr.mxu0 0.0
        %1935 = vmatpush1.msra.mxu0 0.0
        %1936 = vmatprep.subr.mxu0 0.0
        %1937 = vmatpush1.msra.mxu0 0.0
        %1938 = vmatprep.subr.mxu0 0.0
        %1939 = vmatpush1.msra.mxu0 0.0
        %1940 = vmatprep.subr.mxu0 0.0
        %1941 = vmatpush1.msra.mxu0 0.0
        %1942 = vmatprep.subr.mxu0 0.0
        %1943 = vmatpush1.msra.mxu0 0.0
        %1944 = vmatprep.subr.mxu0 0.0
        %1945 = vmatpush1.msra.mxu0 0.0
        %1946 = vmatprep.subr.mxu0 0.0
        %1947 = vmatpush1.msra.mxu0 0.0
        %1948 = vmatprep.subr.mxu0 0.0
        %1949 = vmatpush1.msra.mxu0 0.0
        %1950 = vmatprep.subr.mxu0 0.0
        %1951 = vmatpush1.msra.mxu0 %v1687
        %1952 = vmatprep.subr.mxu0 0.0
        %1953 = vmatpush1.msra.mxu0 %v1686
        %1954 = vmatprep.subr.mxu0 0.0
        %1955 = vmatpush1.msra.mxu0 %v1685
        %1956 = vmatprep.subr.mxu0 0.0
        %1957 = vmatpush1.msra.mxu0 %v1684
        %1958 = vmatprep.subr.mxu0 0.0
        %1959 = vmatpush2.msra.mxu0 0.0
        %1960 = vmatprep.subr.mxu0 0.0
        %1961 = vmatpush2.msra.mxu0 0.0
        %1962 = vmatprep.subr.mxu0 0.0
        %1963 = vmatpush2.msra.mxu0 0.0
        %1964 = vmatprep.subr.mxu0 0.0
        %1965 = vmatpush2.msra.mxu0 0.0
        %1966 = vmatprep.subr.mxu0 0.0
        %1967 = vmatpush2.msra.mxu0 0.0
        %1968 = vmatprep.subr.mxu0 0.0
        %1969 = vmatpush2.msra.mxu0 0.0
        %1970 = vmatprep.subr.mxu0 0.0
        %1971 = vmatpush2.msra.mxu0 0.0
        %1972 = vmatprep.subr.mxu0 0.0
        %1973 = vmatpush2.msra.mxu0 0.0
        %1974 = vmatprep.subr.mxu0 0.0
        %1975 = vmatpush2.msra.mxu0 0.0
        %1976 = vmatprep.subr.mxu0 0.0
        %1977 = vmatpush2.msra.mxu0 0.0
        %1978 = vmatprep.subr.mxu0 0.0
        %1979 = vmatpush2.msra.mxu0 0.0
        %1980 = vmatprep.subr.mxu0 0.0
        %1981 = vmatpush2.msra.mxu0 0.0
        %1982 = vmatprep.subr.mxu0 0.0
        %1983 = vmatpush2.msra.mxu0 0.0
        %1984 = vmatprep.subr.mxu0 0.0
        %1985 = vmatpush2.msra.mxu0 0.0
        %1986 = vmatprep.subr.mxu0 0.0
        %1987 = vmatpush2.msra.mxu0 0.0
        %1988 = vmatprep.subr.mxu0 0.0
        %1989 = vmatpush2.msra.mxu0 0.0
        %1990 = vmatprep.mubr.f32.mxu0 0.0
        %1991 = vmatmul.mubr.f32.gmra.mxu0 %v1066
        %v1992 = vpop.f32.mrf.mxu0
        %v1993 = vadd.f32 %v1711, %v1992
        %v1994 = vpop.f32.mrf.mxu0
        %1995 = vdwg.mxu0
        %v1996 = vmul.f32 %v1135, 0.35355338
        %v1997 = vmul.f32 %v1205, 0.35355338
        %v1998 = vmul.f32 %v1275, 0.35355338
        %v1999 = vmul.f32 %v1345, 0.35355338
        %vm2000 = vcmask 64512
        %v2002 = vsel %vm2000, %v1996, 0
        %v2005 = vsel %vm2000, %v1459, 0
        %2007 = vmatprep.subr.mxu0 0.0
        %2008 = vmatpush1.xpose.msra.mxu0 0.0
        %2009 = vmatprep.subr.mxu0 0.0
        %2010 = vmatpush1.xpose.msra.mxu0 0.0
        %2011 = vmatprep.subr.mxu0 0.0
        %2012 = vmatpush1.xpose.msra.mxu0 0.0
        %2013 = vmatprep.subr.mxu0 0.0
        %2014 = vmatpush1.xpose.msra.mxu0 0.0
        %2015 = vmatprep.subr.mxu0 0.0
        %2016 = vmatpush1.xpose.msra.mxu0 0.0
        %2017 = vmatprep.subr.mxu0 0.0
        %2018 = vmatpush1.xpose.msra.mxu0 0.0
        %2019 = vmatprep.subr.mxu0 0.0
        %2020 = vmatpush1.xpose.msra.mxu0 0.0
        %2021 = vmatprep.subr.mxu0 0.0
        %2022 = vmatpush1.xpose.msra.mxu0 0.0
        %2023 = vmatprep.subr.mxu0 0.0
        %2024 = vmatpush1.xpose.msra.mxu0 0.0
        %2025 = vmatprep.subr.mxu0 0.0
        %2026 = vmatpush1.xpose.msra.mxu0 0.0
        %2027 = vmatprep.subr.mxu0 0.0
        %2028 = vmatpush1.xpose.msra.mxu0 0.0
        %2029 = vmatprep.subr.mxu0 0.0
        %2030 = vmatpush1.xpose.msra.mxu0 0.0
        %2031 = vmatprep.subr.mxu0 0.0
        %2032 = vmatpush1.xpose.msra.mxu0 0.0
        %2033 = vmatprep.subr.mxu0 0.0
        %2034 = vmatpush1.xpose.msra.mxu0 0.0
        %2035 = vmatprep.subr.mxu0 0.0
        %2036 = vmatpush1.xpose.msra.mxu0 0.0
        %2037 = vmatprep.subr.mxu0 0.0
        %2038 = vmatpush1.xpose.msra.mxu0 %v2005
        %2039 = vmatprep.subr.mxu0 0.0
        %2040 = vmatpush2.xpose.msra.mxu0 0.0
        %2041 = vmatprep.subr.mxu0 0.0
        %2042 = vmatpush2.xpose.msra.mxu0 0.0
        %2043 = vmatprep.subr.mxu0 0.0
        %2044 = vmatpush2.xpose.msra.mxu0 0.0
        %2045 = vmatprep.subr.mxu0 0.0
        %2046 = vmatpush2.xpose.msra.mxu0 0.0
        %2047 = vmatprep.subr.mxu0 0.0
        %2048 = vmatpush2.xpose.msra.mxu0 0.0
        %2049 = vmatprep.subr.mxu0 0.0
        %2050 = vmatpush2.xpose.msra.mxu0 0.0
        %2051 = vmatprep.subr.mxu0 0.0
        %2052 = vmatpush2.xpose.msra.mxu0 0.0
        %2053 = vmatprep.subr.mxu0 0.0
        %2054 = vmatpush2.xpose.msra.mxu0 0.0
        %2055 = vmatprep.subr.mxu0 0.0
        %2056 = vmatpush2.xpose.msra.mxu0 0.0
        %2057 = vmatprep.subr.mxu0 0.0
        %2058 = vmatpush2.xpose.msra.mxu0 0.0
        %2059 = vmatprep.subr.mxu0 0.0
        %2060 = vmatpush2.xpose.msra.mxu0 0.0
        %2061 = vmatprep.subr.mxu0 0.0
        %2062 = vmatpush2.xpose.msra.mxu0 0.0
        %2063 = vmatprep.subr.mxu0 0.0
        %2064 = vmatpush2.xpose.msra.mxu0 0.0
        %2065 = vmatprep.subr.mxu0 0.0
        %2066 = vmatpush2.xpose.msra.mxu0 0.0
        %2067 = vmatprep.subr.mxu0 0.0
        %2068 = vmatpush2.xpose.msra.mxu0 0.0
        %2069 = vmatprep.subr.mxu0 0.0
        %2070 = vmatpush2.xpose.msra.mxu0 0.0
        %2071 = vmatprep.mubr.f32.mxu0 0.0
        %2072 = vmatmul.mubr.f32.gmra.mxu0 %v2002
        %v2073 = vpop.f32.mrf.mxu0
        %v2074 = vadd.f32 0.0, %v2073
        %v2075 = vpop.f32.mrf.mxu0
        %2076 = vdwg.mxu0
        %v2078 = vsel %vm2000, %v1997, 0
        %v2081 = vsel %vm2000, %v1529, 0
        %2083 = vmatprep.subr.mxu0 0.0
        %2084 = vmatpush1.xpose.msra.mxu0 0.0
        %2085 = vmatprep.subr.mxu0 0.0
        %2086 = vmatpush1.xpose.msra.mxu0 0.0
        %2087 = vmatprep.subr.mxu0 0.0
        %2088 = vmatpush1.xpose.msra.mxu0 0.0
        %2089 = vmatprep.subr.mxu0 0.0
        %2090 = vmatpush1.xpose.msra.mxu0 0.0
        %2091 = vmatprep.subr.mxu0 0.0
        %2092 = vmatpush1.xpose.msra.mxu0 0.0
        %2093 = vmatprep.subr.mxu0 0.0
        %2094 = vmatpush1.xpose.msra.mxu0 0.0
        %2095 = vmatprep.subr.mxu0 0.0
        %2096 = vmatpush1.xpose.msra.mxu0 0.0
        %2097 = vmatprep.subr.mxu0 0.0
        %2098 = vmatpush1.xpose.msra.mxu0 0.0
        %2099 = vmatprep.subr.mxu0 0.0
        %2100 = vmatpush1.xpose.msra.mxu0 0.0
        %2101 = vmatprep.subr.mxu0 0.0
        %2102 = vmatpush1.xpose.msra.mxu0 0.0
        %2103 = vmatprep.subr.mxu0 0.0
        %2104 = vmatpush1.xpose.msra.mxu0 0.0
        %2105 = vmatprep.subr.mxu0 0.0
        %2106 = vmatpush1.xpose.msra.mxu0 0.0
        %2107 = vmatprep.subr.mxu0 0.0
        %2108 = vmatpush1.xpose.msra.mxu0 0.0
        %2109 = vmatprep.subr.mxu0 0.0
        %2110 = vmatpush1.xpose.msra.mxu0 0.0
        %2111 = vmatprep.subr.mxu0 0.0
        %2112 = vmatpush1.xpose.msra.mxu0 0.0
        %2113 = vmatprep.subr.mxu0 0.0
        %2114 = vmatpush1.xpose.msra.mxu0 %v2081
        %2115 = vmatprep.subr.mxu0 0.0
        %2116 = vmatpush2.xpose.msra.mxu0 0.0
        %2117 = vmatprep.subr.mxu0 0.0
        %2118 = vmatpush2.xpose.msra.mxu0 0.0
        %2119 = vmatprep.subr.mxu0 0.0
        %2120 = vmatpush2.xpose.msra.mxu0 0.0
        %2121 = vmatprep.subr.mxu0 0.0
        %2122 = vmatpush2.xpose.msra.mxu0 0.0
        %2123 = vmatprep.subr.mxu0 0.0
        %2124 = vmatpush2.xpose.msra.mxu0 0.0
        %2125 = vmatprep.subr.mxu0 0.0
        %2126 = vmatpush2.xpose.msra.mxu0 0.0
        %2127 = vmatprep.subr.mxu0 0.0
        %2128 = vmatpush2.xpose.msra.mxu0 0.0
        %2129 = vmatprep.subr.mxu0 0.0
        %2130 = vmatpush2.xpose.msra.mxu0 0.0
        %2131 = vmatprep.subr.mxu0 0.0
        %2132 = vmatpush2.xpose.msra.mxu0 0.0
        %2133 = vmatprep.subr.mxu0 0.0
        %2134 = vmatpush2.xpose.msra.mxu0 0.0
        %2135 = vmatprep.subr.mxu0 0.0
        %2136 = vmatpush2.xpose.msra.mxu0 0.0
        %2137 = vmatprep.subr.mxu0 0.0
        %2138 = vmatpush2.xpose.msra.mxu0 0.0
        %2139 = vmatprep.subr.mxu0 0.0
        %2140 = vmatpush2.xpose.msra.mxu0 0.0
        %2141 = vmatprep.subr.mxu0 0.0
        %2142 = vmatpush2.xpose.msra.mxu0 0.0
        %2143 = vmatprep.subr.mxu0 0.0
        %2144 = vmatpush2.xpose.msra.mxu0 0.0
        %2145 = vmatprep.subr.mxu0 0.0
        %2146 = vmatpush2.xpose.msra.mxu0 0.0
        %2147 = vmatprep.mubr.f32.mxu0 0.0
        %2148 = vmatmul.mubr.f32.gmra.mxu0 %v2078
        %v2149 = vpop.f32.mrf.mxu0
        %v2150 = vadd.f32 0.0, %v2149
        %v2151 = vpop.f32.mrf.mxu0
        %2152 = vdwg.mxu0
        %v2154 = vsel %vm2000, %v1998, 0
        %v2157 = vsel %vm2000, %v1599, 0
        %2159 = vmatprep.subr.mxu0 0.0
        %2160 = vmatpush1.xpose.msra.mxu0 0.0
        %2161 = vmatprep.subr.mxu0 0.0
        %2162 = vmatpush1.xpose.msra.mxu0 0.0
        %2163 = vmatprep.subr.mxu0 0.0
        %2164 = vmatpush1.xpose.msra.mxu0 0.0
        %2165 = vmatprep.subr.mxu0 0.0
        %2166 = vmatpush1.xpose.msra.mxu0 0.0
        %2167 = vmatprep.subr.mxu0 0.0
        %2168 = vmatpush1.xpose.msra.mxu0 0.0
        %2169 = vmatprep.subr.mxu0 0.0
        %2170 = vmatpush1.xpose.msra.mxu0 0.0
        %2171 = vmatprep.subr.mxu0 0.0
        %2172 = vmatpush1.xpose.msra.mxu0 0.0
        %2173 = vmatprep.subr.mxu0 0.0
        %2174 = vmatpush1.xpose.msra.mxu0 0.0
        %2175 = vmatprep.subr.mxu0 0.0
        %2176 = vmatpush1.xpose.msra.mxu0 0.0
        %2177 = vmatprep.subr.mxu0 0.0
        %2178 = vmatpush1.xpose.msra.mxu0 0.0
        %2179 = vmatprep.subr.mxu0 0.0
        %2180 = vmatpush1.xpose.msra.mxu0 0.0
        %2181 = vmatprep.subr.mxu0 0.0
        %2182 = vmatpush1.xpose.msra.mxu0 0.0
        %2183 = vmatprep.subr.mxu0 0.0
        %2184 = vmatpush1.xpose.msra.mxu0 0.0
        %2185 = vmatprep.subr.mxu0 0.0
        %2186 = vmatpush1.xpose.msra.mxu0 0.0
        %2187 = vmatprep.subr.mxu0 0.0
        %2188 = vmatpush1.xpose.msra.mxu0 0.0
        %2189 = vmatprep.subr.mxu0 0.0
        %2190 = vmatpush1.xpose.msra.mxu0 %v2157
        %2191 = vmatprep.subr.mxu0 0.0
        %2192 = vmatpush2.xpose.msra.mxu0 0.0
        %2193 = vmatprep.subr.mxu0 0.0
        %2194 = vmatpush2.xpose.msra.mxu0 0.0
        %2195 = vmatprep.subr.mxu0 0.0
        %2196 = vmatpush2.xpose.msra.mxu0 0.0
        %2197 = vmatprep.subr.mxu0 0.0
        %2198 = vmatpush2.xpose.msra.mxu0 0.0
        %2199 = vmatprep.subr.mxu0 0.0
        %2200 = vmatpush2.xpose.msra.mxu0 0.0
        %2201 = vmatprep.subr.mxu0 0.0
        %2202 = vmatpush2.xpose.msra.mxu0 0.0
        %2203 = vmatprep.subr.mxu0 0.0
        %2204 = vmatpush2.xpose.msra.mxu0 0.0
        %2205 = vmatprep.subr.mxu0 0.0
        %2206 = vmatpush2.xpose.msra.mxu0 0.0
        %2207 = vmatprep.subr.mxu0 0.0
        %2208 = vmatpush2.xpose.msra.mxu0 0.0
        %2209 = vmatprep.subr.mxu0 0.0
        %2210 = vmatpush2.xpose.msra.mxu0 0.0
        %2211 = vmatprep.subr.mxu0 0.0
        %2212 = vmatpush2.xpose.msra.mxu0 0.0
        %2213 = vmatprep.subr.mxu0 0.0
        %2214 = vmatpush2.xpose.msra.mxu0 0.0
        %2215 = vmatprep.subr.mxu0 0.0
        %2216 = vmatpush2.xpose.msra.mxu0 0.0
        %2217 = vmatprep.subr.mxu0 0.0
        %2218 = vmatpush2.xpose.msra.mxu0 0.0
        %2219 = vmatprep.subr.mxu0 0.0
        %2220 = vmatpush2.xpose.msra.mxu0 0.0
        %2221 = vmatprep.subr.mxu0 0.0
        %2222 = vmatpush2.xpose.msra.mxu0 0.0
        %2223 = vmatprep.mubr.f32.mxu0 0.0
        %2224 = vmatmul.mubr.f32.gmra.mxu0 %v2154
        %v2225 = vpop.f32.mrf.mxu0
        %v2226 = vadd.f32 0.0, %v2225
        %v2227 = vpop.f32.mrf.mxu0
        %2228 = vdwg.mxu0
        %v2230 = vsel %vm2000, %v1999, 0
        %v2233 = vsel %vm2000, %v1669, 0
        %2235 = vmatprep.subr.mxu0 0.0
        %2236 = vmatpush1.xpose.msra.mxu0 0.0
        %2237 = vmatprep.subr.mxu0 0.0
        %2238 = vmatpush1.xpose.msra.mxu0 0.0
        %2239 = vmatprep.subr.mxu0 0.0
        %2240 = vmatpush1.xpose.msra.mxu0 0.0
        %2241 = vmatprep.subr.mxu0 0.0
        %2242 = vmatpush1.xpose.msra.mxu0 0.0
        %2243 = vmatprep.subr.mxu0 0.0
        %2244 = vmatpush1.xpose.msra.mxu0 0.0
        %2245 = vmatprep.subr.mxu0 0.0
        %2246 = vmatpush1.xpose.msra.mxu0 0.0
        %2247 = vmatprep.subr.mxu0 0.0
        %2248 = vmatpush1.xpose.msra.mxu0 0.0
        %2249 = vmatprep.subr.mxu0 0.0
        %2250 = vmatpush1.xpose.msra.mxu0 0.0
        %2251 = vmatprep.subr.mxu0 0.0
        %2252 = vmatpush1.xpose.msra.mxu0 0.0
        %2253 = vmatprep.subr.mxu0 0.0
        %2254 = vmatpush1.xpose.msra.mxu0 0.0
        %2255 = vmatprep.subr.mxu0 0.0
        %2256 = vmatpush1.xpose.msra.mxu0 0.0
        %2257 = vmatprep.subr.mxu0 0.0
        %2258 = vmatpush1.xpose.msra.mxu0 0.0
        %2259 = vmatprep.subr.mxu0 0.0
        %2260 = vmatpush1.xpose.msra.mxu0 0.0
        %2261 = vmatprep.subr.mxu0 0.0
        %2262 = vmatpush1.xpose.msra.mxu0 0.0
        %2263 = vmatprep.subr.mxu0 0.0
        %2264 = vmatpush1.xpose.msra.mxu0 0.0
        %2265 = vmatprep.subr.mxu0 0.0
        %2266 = vmatpush1.xpose.msra.mxu0 %v2233
        %2267 = vmatprep.subr.mxu0 0.0
        %2268 = vmatpush2.xpose.msra.mxu0 0.0
        %2269 = vmatprep.subr.mxu0 0.0
        %2270 = vmatpush2.xpose.msra.mxu0 0.0
        %2271 = vmatprep.subr.mxu0 0.0
        %2272 = vmatpush2.xpose.msra.mxu0 0.0
        %2273 = vmatprep.subr.mxu0 0.0
        %2274 = vmatpush2.xpose.msra.mxu0 0.0
        %2275 = vmatprep.subr.mxu0 0.0
        %2276 = vmatpush2.xpose.msra.mxu0 0.0
        %2277 = vmatprep.subr.mxu0 0.0
        %2278 = vmatpush2.xpose.msra.mxu0 0.0
        %2279 = vmatprep.subr.mxu0 0.0
        %2280 = vmatpush2.xpose.msra.mxu0 0.0
        %2281 = vmatprep.subr.mxu0 0.0
        %2282 = vmatpush2.xpose.msra.mxu0 0.0
        %2283 = vmatprep.subr.mxu0 0.0
        %2284 = vmatpush2.xpose.msra.mxu0 0.0
        %2285 = vmatprep.subr.mxu0 0.0
        %2286 = vmatpush2.xpose.msra.mxu0 0.0
        %2287 = vmatprep.subr.mxu0 0.0
        %2288 = vmatpush2.xpose.msra.mxu0 0.0
        %2289 = vmatprep.subr.mxu0 0.0
        %2290 = vmatpush2.xpose.msra.mxu0 0.0
        %2291 = vmatprep.subr.mxu0 0.0
        %2292 = vmatpush2.xpose.msra.mxu0 0.0
        %2293 = vmatprep.subr.mxu0 0.0
        %2294 = vmatpush2.xpose.msra.mxu0 0.0
        %2295 = vmatprep.subr.mxu0 0.0
        %2296 = vmatpush2.xpose.msra.mxu0 0.0
        %2297 = vmatprep.subr.mxu0 0.0
        %2298 = vmatpush2.xpose.msra.mxu0 0.0
        %2299 = vmatprep.mubr.f32.mxu0 0.0
        %2300 = vmatmul.mubr.f32.gmra.mxu0 %v2230
        %v2301 = vpop.f32.mrf.mxu0
        %v2302 = vadd.f32 0.0, %v2301
        %v2303 = vpop.f32.mrf.mxu0
        %2304 = vdwg.mxu0
        %v2305 = vsel %vm2000, %v2074, -inf
        %2306 = vmax.xlane.f32.xlu0 %v2305
        %v2307 = vpop.xlane.xlu0 %2306
        %v2308 = vsel %vm2000, %v2150, -inf
        %2309 = vmax.xlane.f32.xlu0 %v2308
        %v2310 = vpop.xlane.xlu0 %2309
        %v2311 = vsel %vm2000, %v2226, -inf
        %2312 = vmax.xlane.f32.xlu0 %v2311
        %v2313 = vpop.xlane.xlu0 %2312
        %v2314 = vsel %vm2000, %v2302, -inf
        %2315 = vmax.xlane.f32.xlu0 %v2314
        %v2316 = vpop.xlane.xlu0 %2315
        %v2317 = vsub.f32 %v2074, %v2307
        %v2318 = vsub.f32 %v2150, %v2310
        %v2319 = vsub.f32 %v2226, %v2313
        %v2320 = vsub.f32 %v2302, %v2316
        %v2321 = vmul.f32 %v2317, 1.442695
        %v2322 = vpow.pop %v2321
        %v2323 = vmul.f32 %v2318, 1.442695
        %v2324 = vpow.pop %v2323
        %v2325 = vmul.f32 %v2319, 1.442695
        %v2326 = vpow.pop %v2325
        %v2327 = vmul.f32 %v2320, 1.442695
        %v2328 = vpow.pop %v2327
        %v2329 = vsel %vm2000, %v2322, 0.0
        %2330 = vadd.xlane.f32.xlu0 %v2329
        %v2331 = vpop.xlane.xlu0 %2330
        %v2332 = vsel %vm2000, %v2324, 0.0
        %2333 = vadd.xlane.f32.xlu0 %v2332
        %v2334 = vpop.xlane.xlu0 %2333
        %v2335 = vsel %vm2000, %v2326, 0.0
        %2336 = vadd.xlane.f32.xlu0 %v2335
        %v2337 = vpop.xlane.xlu0 %2336
        %v2338 = vsel %vm2000, %v2328, 0.0
        %2339 = vadd.xlane.f32.xlu0 %v2338
        %v2340 = vpop.xlane.xlu0 %2339
        %v2341 = vrcp.pop %v2331
        %v2342 = vrcp.pop %v2334
        %v2343 = vrcp.pop %v2337
        %v2344 = vrcp.pop %v2340
        %v2345 = vmul.f32 %v2322, %v2341
        %v2346 = vmul.f32 %v2324, %v2342
        %v2347 = vmul.f32 %v2326, %v2343
        %v2348 = vmul.f32 %v2328, %v2344
        %v2350 = vsel %vm2000, %v2345, 0
        %2352 = vmatprep.subr.mxu0 0.0
        %2353 = vmatpush1.msra.mxu0 0.0
        %2354 = vmatprep.subr.mxu0 0.0
        %2355 = vmatpush1.msra.mxu0 0.0
        %2356 = vmatprep.subr.mxu0 0.0
        %2357 = vmatpush1.msra.mxu0 0.0
        %2358 = vmatprep.subr.mxu0 0.0
        %2359 = vmatpush1.msra.mxu0 0.0
        %2360 = vmatprep.subr.mxu0 0.0
        %2361 = vmatpush1.msra.mxu0 0.0
        %2362 = vmatprep.subr.mxu0 0.0
        %2363 = vmatpush1.msra.mxu0 0.0
        %2364 = vmatprep.subr.mxu0 0.0
        %2365 = vmatpush1.msra.mxu0 0.0
        %2366 = vmatprep.subr.mxu0 0.0
        %2367 = vmatpush1.msra.mxu0 0.0
        %2368 = vmatprep.subr.mxu0 0.0
        %2369 = vmatpush1.msra.mxu0 0.0
        %2370 = vmatprep.subr.mxu0 0.0
        %2371 = vmatpush1.msra.mxu0 0.0
        %2372 = vmatprep.subr.mxu0 0.0
        %2373 = vmatpush1.msra.mxu0 0.0
        %2374 = vmatprep.subr.mxu0 0.0
        %2375 = vmatpush1.msra.mxu0 0.0
        %2376 = vmatprep.subr.mxu0 0.0
        %2377 = vmatpush1.msra.mxu0 0.0
        %2378 = vmatprep.subr.mxu0 0.0
        %2379 = vmatpush1.msra.mxu0 0.0
        %2380 = vmatprep.subr.mxu0 0.0
        %2381 = vmatpush1.msra.mxu0 0.0
        %2382 = vmatprep.subr.mxu0 0.0
        %2383 = vmatpush1.msra.mxu0 %v1783
        %2384 = vmatprep.subr.mxu0 0.0
        %2385 = vmatpush2.msra.mxu0 0.0
        %2386 = vmatprep.subr.mxu0 0.0
        %2387 = vmatpush2.msra.mxu0 0.0
        %2388 = vmatprep.subr.mxu0 0.0
        %2389 = vmatpush2.msra.mxu0 0.0
        %2390 = vmatprep.subr.mxu0 0.0
        %2391 = vmatpush2.msra.mxu0 0.0
        %2392 = vmatprep.subr.mxu0 0.0
        %2393 = vmatpush2.msra.mxu0 0.0
        %2394 = vmatprep.subr.mxu0 0.0
        %2395 = vmatpush2.msra.mxu0 0.0
        %2396 = vmatprep.subr.mxu0 0.0
        %2397 = vmatpush2.msra.mxu0 0.0
        %2398 = vmatprep.subr.mxu0 0.0
        %2399 = vmatpush2.msra.mxu0 0.0
        %2400 = vmatprep.subr.mxu0 0.0
        %2401 = vmatpush2.msra.mxu0 0.0
        %2402 = vmatprep.subr.mxu0 0.0
        %2403 = vmatpush2.msra.mxu0 0.0
        %2404 = vmatprep.subr.mxu0 0.0
        %2405 = vmatpush2.msra.mxu0 0.0
        %2406 = vmatprep.subr.mxu0 0.0
        %2407 = vmatpush2.msra.mxu0 0.0
        %2408 = vmatprep.subr.mxu0 0.0
        %2409 = vmatpush2.msra.mxu0 0.0
        %2410 = vmatprep.subr.mxu0 0.0
        %2411 = vmatpush2.msra.mxu0 0.0
        %2412 = vmatprep.subr.mxu0 0.0
        %2413 = vmatpush2.msra.mxu0 0.0
        %2414 = vmatprep.subr.mxu0 0.0
        %2415 = vmatpush2.msra.mxu0 0.0
        %2416 = vmatprep.mubr.f32.mxu0 0.0
        %2417 = vmatmul.mubr.f32.gmra.mxu0 %v2350
        %v2418 = vpop.f32.mrf.mxu0
        %v2419 = vadd.f32 0.0, %v2418
        %v2420 = vpop.f32.mrf.mxu0
        %2421 = vdwg.mxu0
        %v2423 = vsel %vm2000, %v2346, 0
        %2425 = vmatprep.subr.mxu0 0.0
        %2426 = vmatpush1.msra.mxu0 0.0
        %2427 = vmatprep.subr.mxu0 0.0
        %2428 = vmatpush1.msra.mxu0 0.0
        %2429 = vmatprep.subr.mxu0 0.0
        %2430 = vmatpush1.msra.mxu0 0.0
        %2431 = vmatprep.subr.mxu0 0.0
        %2432 = vmatpush1.msra.mxu0 0.0
        %2433 = vmatprep.subr.mxu0 0.0
        %2434 = vmatpush1.msra.mxu0 0.0
        %2435 = vmatprep.subr.mxu0 0.0
        %2436 = vmatpush1.msra.mxu0 0.0
        %2437 = vmatprep.subr.mxu0 0.0
        %2438 = vmatpush1.msra.mxu0 0.0
        %2439 = vmatprep.subr.mxu0 0.0
        %2440 = vmatpush1.msra.mxu0 0.0
        %2441 = vmatprep.subr.mxu0 0.0
        %2442 = vmatpush1.msra.mxu0 0.0
        %2443 = vmatprep.subr.mxu0 0.0
        %2444 = vmatpush1.msra.mxu0 0.0
        %2445 = vmatprep.subr.mxu0 0.0
        %2446 = vmatpush1.msra.mxu0 0.0
        %2447 = vmatprep.subr.mxu0 0.0
        %2448 = vmatpush1.msra.mxu0 0.0
        %2449 = vmatprep.subr.mxu0 0.0
        %2450 = vmatpush1.msra.mxu0 0.0
        %2451 = vmatprep.subr.mxu0 0.0
        %2452 = vmatpush1.msra.mxu0 0.0
        %2453 = vmatprep.subr.mxu0 0.0
        %2454 = vmatpush1.msra.mxu0 0.0
        %2455 = vmatprep.subr.mxu0 0.0
        %2456 = vmatpush1.msra.mxu0 %v1853
        %2457 = vmatprep.subr.mxu0 0.0
        %2458 = vmatpush2.msra.mxu0 0.0
        %2459 = vmatprep.subr.mxu0 0.0
        %2460 = vmatpush2.msra.mxu0 0.0
        %2461 = vmatprep.subr.mxu0 0.0
        %2462 = vmatpush2.msra.mxu0 0.0
        %2463 = vmatprep.subr.mxu0 0.0
        %2464 = vmatpush2.msra.mxu0 0.0
        %2465 = vmatprep.subr.mxu0 0.0
        %2466 = vmatpush2.msra.mxu0 0.0
        %2467 = vmatprep.subr.mxu0 0.0
        %2468 = vmatpush2.msra.mxu0 0.0
        %2469 = vmatprep.subr.mxu0 0.0
        %2470 = vmatpush2.msra.mxu0 0.0
        %2471 = vmatprep.subr.mxu0 0.0
        %2472 = vmatpush2.msra.mxu0 0.0
        %2473 = vmatprep.subr.mxu0 0.0
        %2474 = vmatpush2.msra.mxu0 0.0
        %2475 = vmatprep.subr.mxu0 0.0
        %2476 = vmatpush2.msra.mxu0 0.0
        %2477 = vmatprep.subr.mxu0 0.0
        %2478 = vmatpush2.msra.mxu0 0.0
        %2479 = vmatprep.subr.mxu0 0.0
        %2480 = vmatpush2.msra.mxu0 0.0
        %2481 = vmatprep.subr.mxu0 0.0
        %2482 = vmatpush2.msra.mxu0 0.0
        %2483 = vmatprep.subr.mxu0 0.0
        %2484 = vmatpush2.msra.mxu0 0.0
        %2485 = vmatprep.subr.mxu0 0.0
        %2486 = vmatpush2.msra.mxu0 0.0
        %2487 = vmatprep.subr.mxu0 0.0
        %2488 = vmatpush2.msra.mxu0 0.0
        %2489 = vmatprep.mubr.f32.mxu0 0.0
        %2490 = vmatmul.mubr.f32.gmra.mxu0 %v2423
        %v2491 = vpop.f32.mrf.mxu0
        %v2492 = vadd.f32 0.0, %v2491
        %v2493 = vpop.f32.mrf.mxu0
        %2494 = vdwg.mxu0
        %v2496 = vsel %vm2000, %v2347, 0
        %2498 = vmatprep.subr.mxu0 0.0
        %2499 = vmatpush1.msra.mxu0 0.0
        %2500 = vmatprep.subr.mxu0 0.0
        %2501 = vmatpush1.msra.mxu0 0.0
        %2502 = vmatprep.subr.mxu0 0.0
        %2503 = vmatpush1.msra.mxu0 0.0
        %2504 = vmatprep.subr.mxu0 0.0
        %2505 = vmatpush1.msra.mxu0 0.0
        %2506 = vmatprep.subr.mxu0 0.0
        %2507 = vmatpush1.msra.mxu0 0.0
        %2508 = vmatprep.subr.mxu0 0.0
        %2509 = vmatpush1.msra.mxu0 0.0
        %2510 = vmatprep.subr.mxu0 0.0
        %2511 = vmatpush1.msra.mxu0 0.0
        %2512 = vmatprep.subr.mxu0 0.0
        %2513 = vmatpush1.msra.mxu0 0.0
        %2514 = vmatprep.subr.mxu0 0.0
        %2515 = vmatpush1.msra.mxu0 0.0
        %2516 = vmatprep.subr.mxu0 0.0
        %2517 = vmatpush1.msra.mxu0 0.0
        %2518 = vmatprep.subr.mxu0 0.0
        %2519 = vmatpush1.msra.mxu0 0.0
        %2520 = vmatprep.subr.mxu0 0.0
        %2521 = vmatpush1.msra.mxu0 0.0
        %2522 = vmatprep.subr.mxu0 0.0
        %2523 = vmatpush1.msra.mxu0 0.0
        %2524 = vmatprep.subr.mxu0 0.0
        %2525 = vmatpush1.msra.mxu0 0.0
        %2526 = vmatprep.subr.mxu0 0.0
        %2527 = vmatpush1.msra.mxu0 0.0
        %2528 = vmatprep.subr.mxu0 0.0
        %2529 = vmatpush1.msra.mxu0 %v1923
        %2530 = vmatprep.subr.mxu0 0.0
        %2531 = vmatpush2.msra.mxu0 0.0
        %2532 = vmatprep.subr.mxu0 0.0
        %2533 = vmatpush2.msra.mxu0 0.0
        %2534 = vmatprep.subr.mxu0 0.0
        %2535 = vmatpush2.msra.mxu0 0.0
        %2536 = vmatprep.subr.mxu0 0.0
        %2537 = vmatpush2.msra.mxu0 0.0
        %2538 = vmatprep.subr.mxu0 0.0
        %2539 = vmatpush2.msra.mxu0 0.0
        %2540 = vmatprep.subr.mxu0 0.0
        %2541 = vmatpush2.msra.mxu0 0.0
        %2542 = vmatprep.subr.mxu0 0.0
        %2543 = vmatpush2.msra.mxu0 0.0
        %2544 = vmatprep.subr.mxu0 0.0
        %2545 = vmatpush2.msra.mxu0 0.0
        %2546 = vmatprep.subr.mxu0 0.0
        %2547 = vmatpush2.msra.mxu0 0.0
        %2548 = vmatprep.subr.mxu0 0.0
        %2549 = vmatpush2.msra.mxu0 0.0
        %2550 = vmatprep.subr.mxu0 0.0
        %2551 = vmatpush2.msra.mxu0 0.0
        %2552 = vmatprep.subr.mxu0 0.0
        %2553 = vmatpush2.msra.mxu0 0.0
        %2554 = vmatprep.subr.mxu0 0.0
        %2555 = vmatpush2.msra.mxu0 0.0
        %2556 = vmatprep.subr.mxu0 0.0
        %2557 = vmatpush2.msra.mxu0 0.0
        %2558 = vmatprep.subr.mxu0 0.0
        %2559 = vmatpush2.msra.mxu0 0.0
        %2560 = vmatprep.subr.mxu0 0.0
        %2561 = vmatpush2.msra.mxu0 0.0
        %2562 = vmatprep.mubr.f32.mxu0 0.0
        %2563 = vmatmul.mubr.f32.gmra.mxu0 %v2496
        %v2564 = vpop.f32.mrf.mxu0
        %v2565 = vadd.f32 0.0, %v2564
        %v2566 = vpop.f32.mrf.mxu0
        %2567 = vdwg.mxu0
        %v2569 = vsel %vm2000, %v2348, 0
        %2571 = vmatprep.subr.mxu0 0.0
        %2572 = vmatpush1.msra.mxu0 0.0
        %2573 = vmatprep.subr.mxu0 0.0
        %2574 = vmatpush1.msra.mxu0 0.0
        %2575 = vmatprep.subr.mxu0 0.0
        %2576 = vmatpush1.msra.mxu0 0.0
        %2577 = vmatprep.subr.mxu0 0.0
        %2578 = vmatpush1.msra.mxu0 0.0
        %2579 = vmatprep.subr.mxu0 0.0
        %2580 = vmatpush1.msra.mxu0 0.0
        %2581 = vmatprep.subr.mxu0 0.0
        %2582 = vmatpush1.msra.mxu0 0.0
        %2583 = vmatprep.subr.mxu0 0.0
        %2584 = vmatpush1.msra.mxu0 0.0
        %2585 = vmatprep.subr.mxu0 0.0
        %2586 = vmatpush1.msra.mxu0 0.0
        %2587 = vmatprep.subr.mxu0 0.0
        %2588 = vmatpush1.msra.mxu0 0.0
        %2589 = vmatprep.subr.mxu0 0.0
        %2590 = vmatpush1.msra.mxu0 0.0
        %2591 = vmatprep.subr.mxu0 0.0
        %2592 = vmatpush1.msra.mxu0 0.0
        %2593 = vmatprep.subr.mxu0 0.0
        %2594 = vmatpush1.msra.mxu0 0.0
        %2595 = vmatprep.subr.mxu0 0.0
        %2596 = vmatpush1.msra.mxu0 0.0
        %2597 = vmatprep.subr.mxu0 0.0
        %2598 = vmatpush1.msra.mxu0 0.0
        %2599 = vmatprep.subr.mxu0 0.0
        %2600 = vmatpush1.msra.mxu0 0.0
        %2601 = vmatprep.subr.mxu0 0.0
        %2602 = vmatpush1.msra.mxu0 %v1993
        %2603 = vmatprep.subr.mxu0 0.0
        %2604 = vmatpush2.msra.mxu0 0.0
        %2605 = vmatprep.subr.mxu0 0.0
        %2606 = vmatpush2.msra.mxu0 0.0
        %2607 = vmatprep.subr.mxu0 0.0
        %2608 = vmatpush2.msra.mxu0 0.0
        %2609 = vmatprep.subr.mxu0 0.0
        %2610 = vmatpush2.msra.mxu0 0.0
        %2611 = vmatprep.subr.mxu0 0.0
        %2612 = vmatpush2.msra.mxu0 0.0
        %2613 = vmatprep.subr.mxu0 0.0
        %2614 = vmatpush2.msra.mxu0 0.0
        %2615 = vmatprep.subr.mxu0 0.0
        %2616 = vmatpush2.msra.mxu0 0.0
        %2617 = vmatprep.subr.mxu0 0.0
        %2618 = vmatpush2.msra.mxu0 0.0
        %2619 = vmatprep.subr.mxu0 0.0
        %2620 = vmatpush2.msra.mxu0 0.0
        %2621 = vmatprep.subr.mxu0 0.0
        %2622 = vmatpush2.msra.mxu0 0.0
        %2623 = vmatprep.subr.mxu0 0.0
        %2624 = vmatpush2.msra.mxu0 0.0
        %2625 = vmatprep.subr.mxu0 0.0
        %2626 = vmatpush2.msra.mxu0 0.0
        %2627 = vmatprep.subr.mxu0 0.0
        %2628 = vmatpush2.msra.mxu0 0.0
        %2629 = vmatprep.subr.mxu0 0.0
        %2630 = vmatpush2.msra.mxu0 0.0
        %2631 = vmatprep.subr.mxu0 0.0
        %2632 = vmatpush2.msra.mxu0 0.0
        %2633 = vmatprep.subr.mxu0 0.0
        %2634 = vmatpush2.msra.mxu0 0.0
        %2635 = vmatprep.mubr.f32.mxu0 0.0
        %2636 = vmatmul.mubr.f32.gmra.mxu0 %v2569
        %v2637 = vpop.f32.mrf.mxu0
        %v2638 = vadd.f32 0.0, %v2637
        %v2639 = vpop.f32.mrf.mxu0
        %2640 = vdwg.mxu0
        %v2641 = vld [vmem:[%s19] sm:$0xff]
        %v2642 = vld [vmem:[%s19 + $0x8] sm:$0xff]
        %v2643 = vld [vmem:[%s19 + $0x10] sm:$0xff]
        %v2644 = vld [vmem:[%s19 + $0x18] sm:$0xff]
        %v2646 = vsel %vm2000, %v2419, 0
        %2648 = vmatprep.subr.mxu0 0.0
        %2649 = vmatpush1.msra.mxu0 0.0
        %2650 = vmatprep.subr.mxu0 0.0
        %2651 = vmatpush1.msra.mxu0 0.0
        %2652 = vmatprep.subr.mxu0 0.0
        %2653 = vmatpush1.msra.mxu0 0.0
        %2654 = vmatprep.subr.mxu0 0.0
        %2655 = vmatpush1.msra.mxu0 0.0
        %2656 = vmatprep.subr.mxu0 0.0
        %2657 = vmatpush1.msra.mxu0 0.0
        %2658 = vmatprep.subr.mxu0 0.0
        %2659 = vmatpush1.msra.mxu0 0.0
        %2660 = vmatprep.subr.mxu0 0.0
        %2661 = vmatpush1.msra.mxu0 0.0
        %2662 = vmatprep.subr.mxu0 0.0
        %2663 = vmatpush1.msra.mxu0 0.0
        %2664 = vmatprep.subr.mxu0 0.0
        %2665 = vmatpush1.msra.mxu0 0.0
        %2666 = vmatprep.subr.mxu0 0.0
        %2667 = vmatpush1.msra.mxu0 0.0
        %2668 = vmatprep.subr.mxu0 0.0
        %2669 = vmatpush1.msra.mxu0 0.0
        %2670 = vmatprep.subr.mxu0 0.0
        %2671 = vmatpush1.msra.mxu0 0.0
        %2672 = vmatprep.subr.mxu0 0.0
        %2673 = vmatpush1.msra.mxu0 0.0
        %2674 = vmatprep.subr.mxu0 0.0
        %2675 = vmatpush1.msra.mxu0 0.0
        %2676 = vmatprep.subr.mxu0 0.0
        %2677 = vmatpush1.msra.mxu0 0.0
        %2678 = vmatprep.subr.mxu0 0.0
        %2679 = vmatpush1.msra.mxu0 %v2641
        %2680 = vmatprep.subr.mxu0 0.0
        %2681 = vmatpush2.msra.mxu0 0.0
        %2682 = vmatprep.subr.mxu0 0.0
        %2683 = vmatpush2.msra.mxu0 0.0
        %2684 = vmatprep.subr.mxu0 0.0
        %2685 = vmatpush2.msra.mxu0 0.0
        %2686 = vmatprep.subr.mxu0 0.0
        %2687 = vmatpush2.msra.mxu0 0.0
        %2688 = vmatprep.subr.mxu0 0.0
        %2689 = vmatpush2.msra.mxu0 0.0
        %2690 = vmatprep.subr.mxu0 0.0
        %2691 = vmatpush2.msra.mxu0 0.0
        %2692 = vmatprep.subr.mxu0 0.0
        %2693 = vmatpush2.msra.mxu0 0.0
        %2694 = vmatprep.subr.mxu0 0.0
        %2695 = vmatpush2.msra.mxu0 0.0
        %2696 = vmatprep.subr.mxu0 0.0
        %2697 = vmatpush2.msra.mxu0 0.0
        %2698 = vmatprep.subr.mxu0 0.0
        %2699 = vmatpush2.msra.mxu0 0.0
        %2700 = vmatprep.subr.mxu0 0.0
        %2701 = vmatpush2.msra.mxu0 0.0
        %2702 = vmatprep.subr.mxu0 0.0
        %2703 = vmatpush2.msra.mxu0 0.0
        %2704 = vmatprep.subr.mxu0 0.0
        %2705 = vmatpush2.msra.mxu0 0.0
        %2706 = vmatprep.subr.mxu0 0.0
        %2707 = vmatpush2.msra.mxu0 0.0
        %2708 = vmatprep.subr.mxu0 0.0
        %2709 = vmatpush2.msra.mxu0 0.0
        %2710 = vmatprep.subr.mxu0 0.0
        %2711 = vmatpush2.msra.mxu0 0.0
        %2712 = vmatprep.mubr.f32.mxu0 0.0
        %2713 = vmatmul.mubr.f32.gmra.mxu0 %v2646
        %v2714 = vpop.f32.mrf.mxu0
        %v2715 = vadd.f32 0.0, %v2714
        %v2716 = vpop.f32.mrf.mxu0
        %2717 = vdwg.mxu0
        %v2719 = vsel %vm2000, %v2492, 0
        %2721 = vmatprep.subr.mxu0 0.0
        %2722 = vmatpush1.msra.mxu0 0.0
        %2723 = vmatprep.subr.mxu0 0.0
        %2724 = vmatpush1.msra.mxu0 0.0
        %2725 = vmatprep.subr.mxu0 0.0
        %2726 = vmatpush1.msra.mxu0 0.0
        %2727 = vmatprep.subr.mxu0 0.0
        %2728 = vmatpush1.msra.mxu0 0.0
        %2729 = vmatprep.subr.mxu0 0.0
        %2730 = vmatpush1.msra.mxu0 0.0
        %2731 = vmatprep.subr.mxu0 0.0
        %2732 = vmatpush1.msra.mxu0 0.0
        %2733 = vmatprep.subr.mxu0 0.0
        %2734 = vmatpush1.msra.mxu0 0.0
        %2735 = vmatprep.subr.mxu0 0.0
        %2736 = vmatpush1.msra.mxu0 0.0
        %2737 = vmatprep.subr.mxu0 0.0
        %2738 = vmatpush1.msra.mxu0 0.0
        %2739 = vmatprep.subr.mxu0 0.0
        %2740 = vmatpush1.msra.mxu0 0.0
        %2741 = vmatprep.subr.mxu0 0.0
        %2742 = vmatpush1.msra.mxu0 0.0
        %2743 = vmatprep.subr.mxu0 0.0
        %2744 = vmatpush1.msra.mxu0 0.0
        %2745 = vmatprep.subr.mxu0 0.0
        %2746 = vmatpush1.msra.mxu0 0.0
        %2747 = vmatprep.subr.mxu0 0.0
        %2748 = vmatpush1.msra.mxu0 0.0
        %2749 = vmatprep.subr.mxu0 0.0
        %2750 = vmatpush1.msra.mxu0 0.0
        %2751 = vmatprep.subr.mxu0 0.0
        %2752 = vmatpush1.msra.mxu0 %v2642
        %2753 = vmatprep.subr.mxu0 0.0
        %2754 = vmatpush2.msra.mxu0 0.0
        %2755 = vmatprep.subr.mxu0 0.0
        %2756 = vmatpush2.msra.mxu0 0.0
        %2757 = vmatprep.subr.mxu0 0.0
        %2758 = vmatpush2.msra.mxu0 0.0
        %2759 = vmatprep.subr.mxu0 0.0
        %2760 = vmatpush2.msra.mxu0 0.0
        %2761 = vmatprep.subr.mxu0 0.0
        %2762 = vmatpush2.msra.mxu0 0.0
        %2763 = vmatprep.subr.mxu0 0.0
        %2764 = vmatpush2.msra.mxu0 0.0
        %2765 = vmatprep.subr.mxu0 0.0
        %2766 = vmatpush2.msra.mxu0 0.0
        %2767 = vmatprep.subr.mxu0 0.0
        %2768 = vmatpush2.msra.mxu0 0.0
        %2769 = vmatprep.subr.mxu0 0.0
        %2770 = vmatpush2.msra.mxu0 0.0
        %2771 = vmatprep.subr.mxu0 0.0
        %2772 = vmatpush2.msra.mxu0 0.0
        %2773 = vmatprep.subr.mxu0 0.0
        %2774 = vmatpush2.msra.mxu0 0.0
        %2775 = vmatprep.subr.mxu0 0.0
        %2776 = vmatpush2.msra.mxu0 0.0
        %2777 = vmatprep.subr.mxu0 0.0
        %2778 = vmatpush2.msra.mxu0 0.0
        %2779 = vmatprep.subr.mxu0 0.0
        %2780 = vmatpush2.msra.mxu0 0.0
        %2781 = vmatprep.subr.mxu0 0.0
        %2782 = vmatpush2.msra.mxu0 0.0
        %2783 = vmatprep.subr.mxu0 0.0
        %2784 = vmatpush2.msra.mxu0 0.0
        %2785 = vmatprep.mubr.f32.mxu0 0.0
        %2786 = vmatmul.mubr.f32.gmra.mxu0 %v2719
        %v2787 = vpop.f32.mrf.mxu0
        %v2788 = vadd.f32 0.0, %v2787
        %v2789 = vpop.f32.mrf.mxu0
        %2790 = vdwg.mxu0
        %v2792 = vsel %vm2000, %v2565, 0
        %2794 = vmatprep.subr.mxu0 0.0
        %2795 = vmatpush1.msra.mxu0 0.0
        %2796 = vmatprep.subr.mxu0 0.0
        %2797 = vmatpush1.msra.mxu0 0.0
        %2798 = vmatprep.subr.mxu0 0.0
        %2799 = vmatpush1.msra.mxu0 0.0
        %2800 = vmatprep.subr.mxu0 0.0
        %2801 = vmatpush1.msra.mxu0 0.0
        %2802 = vmatprep.subr.mxu0 0.0
        %2803 = vmatpush1.msra.mxu0 0.0
        %2804 = vmatprep.subr.mxu0 0.0
        %2805 = vmatpush1.msra.mxu0 0.0
        %2806 = vmatprep.subr.mxu0 0.0
        %2807 = vmatpush1.msra.mxu0 0.0
        %2808 = vmatprep.subr.mxu0 0.0
        %2809 = vmatpush1.msra.mxu0 0.0
        %2810 = vmatprep.subr.mxu0 0.0
        %2811 = vmatpush1.msra.mxu0 0.0
        %2812 = vmatprep.subr.mxu0 0.0
        %2813 = vmatpush1.msra.mxu0 0.0
        %2814 = vmatprep.subr.mxu0 0.0
        %2815 = vmatpush1.msra.mxu0 0.0
        %2816 = vmatprep.subr.mxu0 0.0
        %2817 = vmatpush1.msra.mxu0 0.0
        %2818 = vmatprep.subr.mxu0 0.0
        %2819 = vmatpush1.msra.mxu0 0.0
        %2820 = vmatprep.subr.mxu0 0.0
        %2821 = vmatpush1.msra.mxu0 0.0
        %2822 = vmatprep.subr.mxu0 0.0
        %2823 = vmatpush1.msra.mxu0 0.0
        %2824 = vmatprep.subr.mxu0 0.0
        %2825 = vmatpush1.msra.mxu0 %v2643
        %2826 = vmatprep.subr.mxu0 0.0
        %2827 = vmatpush2.msra.mxu0 0.0
        %2828 = vmatprep.subr.mxu0 0.0
        %2829 = vmatpush2.msra.mxu0 0.0
        %2830 = vmatprep.subr.mxu0 0.0
        %2831 = vmatpush2.msra.mxu0 0.0
        %2832 = vmatprep.subr.mxu0 0.0
        %2833 = vmatpush2.msra.mxu0 0.0
        %2834 = vmatprep.subr.mxu0 0.0
        %2835 = vmatpush2.msra.mxu0 0.0
        %2836 = vmatprep.subr.mxu0 0.0
        %2837 = vmatpush2.msra.mxu0 0.0
        %2838 = vmatprep.subr.mxu0 0.0
        %2839 = vmatpush2.msra.mxu0 0.0
        %2840 = vmatprep.subr.mxu0 0.0
        %2841 = vmatpush2.msra.mxu0 0.0
        %2842 = vmatprep.subr.mxu0 0.0
        %2843 = vmatpush2.msra.mxu0 0.0
        %2844 = vmatprep.subr.mxu0 0.0
        %2845 = vmatpush2.msra.mxu0 0.0
        %2846 = vmatprep.subr.mxu0 0.0
        %2847 = vmatpush2.msra.mxu0 0.0
        %2848 = vmatprep.subr.mxu0 0.0
        %2849 = vmatpush2.msra.mxu0 0.0
        %2850 = vmatprep.subr.mxu0 0.0
        %2851 = vmatpush2.msra.mxu0 0.0
        %2852 = vmatprep.subr.mxu0 0.0
        %2853 = vmatpush2.msra.mxu0 0.0
        %2854 = vmatprep.subr.mxu0 0.0
        %2855 = vmatpush2.msra.mxu0 0.0
        %2856 = vmatprep.subr.mxu0 0.0
        %2857 = vmatpush2.msra.mxu0 0.0
        %2858 = vmatprep.mubr.f32.mxu0 0.0
        %2859 = vmatmul.mubr.f32.gmra.mxu0 %v2792
        %v2860 = vpop.f32.mrf.mxu0
        %v2861 = vadd.f32 0.0, %v2860
        %v2862 = vpop.f32.mrf.mxu0
        %2863 = vdwg.mxu0
        %v2865 = vsel %vm2000, %v2638, 0
        %2867 = vmatprep.subr.mxu0 0.0
        %2868 = vmatpush1.msra.mxu0 0.0
        %2869 = vmatprep.subr.mxu0 0.0
        %2870 = vmatpush1.msra.mxu0 0.0
        %2871 = vmatprep.subr.mxu0 0.0
        %2872 = vmatpush1.msra.mxu0 0.0
        %2873 = vmatprep.subr.mxu0 0.0
        %2874 = vmatpush1.msra.mxu0 0.0
        %2875 = vmatprep.subr.mxu0 0.0
        %2876 = vmatpush1.msra.mxu0 0.0
        %2877 = vmatprep.subr.mxu0 0.0
        %2878 = vmatpush1.msra.mxu0 0.0
        %2879 = vmatprep.subr.mxu0 0.0
        %2880 = vmatpush1.msra.mxu0 0.0
        %2881 = vmatprep.subr.mxu0 0.0
        %2882 = vmatpush1.msra.mxu0 0.0
        %2883 = vmatprep.subr.mxu0 0.0
        %2884 = vmatpush1.msra.mxu0 0.0
        %2885 = vmatprep.subr.mxu0 0.0
        %2886 = vmatpush1.msra.mxu0 0.0
        %2887 = vmatprep.subr.mxu0 0.0
        %2888 = vmatpush1.msra.mxu0 0.0
        %2889 = vmatprep.subr.mxu0 0.0
        %2890 = vmatpush1.msra.mxu0 0.0
        %2891 = vmatprep.subr.mxu0 0.0
        %2892 = vmatpush1.msra.mxu0 0.0
        %2893 = vmatprep.subr.mxu0 0.0
        %2894 = vmatpush1.msra.mxu0 0.0
        %2895 = vmatprep.subr.mxu0 0.0
        %2896 = vmatpush1.msra.mxu0 0.0
        %2897 = vmatprep.subr.mxu0 0.0
        %2898 = vmatpush1.msra.mxu0 %v2644
        %2899 = vmatprep.subr.mxu0 0.0
        %2900 = vmatpush2.msra.mxu0 0.0
        %2901 = vmatprep.subr.mxu0 0.0
        %2902 = vmatpush2.msra.mxu0 0.0
        %2903 = vmatprep.subr.mxu0 0.0
        %2904 = vmatpush2.msra.mxu0 0.0
        %2905 = vmatprep.subr.mxu0 0.0
        %2906 = vmatpush2.msra.mxu0 0.0
        %2907 = vmatprep.subr.mxu0 0.0
        %2908 = vmatpush2.msra.mxu0 0.0
        %2909 = vmatprep.subr.mxu0 0.0
        %2910 = vmatpush2.msra.mxu0 0.0
        %2911 = vmatprep.subr.mxu0 0.0
        %2912 = vmatpush2.msra.mxu0 0.0
        %2913 = vmatprep.subr.mxu0 0.0
        %2914 = vmatpush2.msra.mxu0 0.0
        %2915 = vmatprep.subr.mxu0 0.0
        %2916 = vmatpush2.msra.mxu0 0.0
        %2917 = vmatprep.subr.mxu0 0.0
        %2918 = vmatpush2.msra.mxu0 0.0
        %2919 = vmatprep.subr.mxu0 0.0
        %2920 = vmatpush2.msra.mxu0 0.0
        %2921 = vmatprep.subr.mxu0 0.0
        %2922 = vmatpush2.msra.mxu0 0.0
        %2923 = vmatprep.subr.mxu0 0.0
        %2924 = vmatpush2.msra.mxu0 0.0
        %2925 = vmatprep.subr.mxu0 0.0
        %2926 = vmatpush2.msra.mxu0 0.0
        %2927 = vmatprep.subr.mxu0 0.0
        %2928 = vmatpush2.msra.mxu0 0.0
        %2929 = vmatprep.subr.mxu0 0.0
        %2930 = vmatpush2.msra.mxu0 0.0
        %2931 = vmatprep.mubr.f32.mxu0 0.0
        %2932 = vmatmul.mubr.f32.gmra.mxu0 %v2865
        %v2933 = vpop.f32.mrf.mxu0
        %v2934 = vadd.f32 0.0, %v2933
        %v2935 = vpop.f32.mrf.mxu0
        %2936 = vdwg.mxu0
        %v2937 = vsel %vm1064, %v2715, 0.0
        %v2938 = vsel %vm1064, %v2788, 0.0
        %v2939 = vadd.f32 %v2937, %v2938
        %v2940 = vsel %vm1064, %v2861, 0.0
        %v2941 = vadd.f32 %v2939, %v2940
        %v2942 = vsel %vm1064, %v2934, 0.0
        %v2943 = vadd.f32 %v2941, %v2942
        %v2944 = vld [vmem:[%s21] sm:$0x1]
        %v2946 = vlaneseq
        %v2947 = vshrl.u32 %v2946, 7
        %v2948 = vsub.s32 0, %v2947
        %v2949 = vrot.slane %v2944, %v2948
        %v2951 = vadd.f32 %v2943, %v2949
        %v2952 = vadd.f32 %v1019, %v2951
        %v2953 = vld [vmem:[%s23] sm:$0x1]
        %v2954 = vld [vmem:[%s25] sm:$0x1]
        %v2955 = vsel %vm1064, %v2952, 0.0
        %2956 = vadd.xlane.f32.xlu0 %v2955
        %v2957 = vpop.xlane.xlu0 %2956
        %v2958 = vrcp.pop 32.0
        %v2959 = vmul.f32 %v2957, %v2958
        %v2960 = vsub.f32 %v2952, %v2959
        %v2961 = vmul.f32 %v2960, %v2960
        %v2962 = vsel %vm1064, %v2961, 0.0
        %2963 = vadd.xlane.f32.xlu0 %v2962
        %v2964 = vpop.xlane.xlu0 %2963
        %v2965 = vmul.f32 %v2964, %v2958
        %v2966 = vadd.f32 %v2965, 1e-05
        %v2967 = vrsqrt.pop %v2966
        %v2968 = vmul.f32 %v2960, %v2967
        %v2970 = vlaneseq
        %v2971 = vshrl.u32 %v2970, 7
        %v2972 = vsub.s32 0, %v2971
        %v2973 = vrot.slane %v2953, %v2972
        %v2975 = vmul.f32 %v2968, %v2973
        %v2977 = vlaneseq
        %v2978 = vshrl.u32 %v2977, 7
        %v2979 = vsub.s32 0, %v2978
        %v2980 = vrot.slane %v2954, %v2979
        %v2982 = vadd.f32 %v2975, %v2980
        %v2983 = vld [vmem:[%s27] sm:$0xff]
        %v2984 = vld [vmem:[%s27 + $0x8] sm:$0xff]
        %v2985 = vld [vmem:[%s27 + $0x10] sm:$0xff]
        %v2986 = vld [vmem:[%s27 + $0x18] sm:$0xff]
        %v2987 = vld [vmem:[%s29] sm:$0x1]
        %v2989 = vlaneseq
        %v2990 = vshrl.u32 %v2989, 7
        %v2991 = vsub.s32 0, %v2990
        %v2992 = vrot.slane %v2987, %v2991
        %v2995 = vsel %vm1064, %v2982, 0
        %2997 = vmatprep.subr.mxu0 0.0
        %2998 = vmatpush1.msra.mxu0 0.0
        %2999 = vmatprep.subr.mxu0 0.0
        %3000 = vmatpush1.msra.mxu0 0.0
        %3001 = vmatprep.subr.mxu0 0.0
        %3002 = vmatpush1.msra.mxu0 0.0
        %3003 = vmatprep.subr.mxu0 0.0
        %3004 = vmatpush1.msra.mxu0 0.0
        %3005 = vmatprep.subr.mxu0 0.0
        %3006 = vmatpush1.msra.mxu0 0.0
        %3007 = vmatprep.subr.mxu0 0.0
        %3008 = vmatpush1.msra.mxu0 0.0
        %3009 = vmatprep.subr.mxu0 0.0
        %3010 = vmatpush1.msra.mxu0 0.0
        %3011 = vmatprep.subr.mxu0 0.0
        %3012 = vmatpush1.msra.mxu0 0.0
        %3013 = vmatprep.subr.mxu0 0.0
        %3014 = vmatpush1.msra.mxu0 0.0
        %3015 = vmatprep.subr.mxu0 0.0
        %3016 = vmatpush1.msra.mxu0 0.0
        %3017 = vmatprep.subr.mxu0 0.0
        %3018 = vmatpush1.msra.mxu0 0.0
        %3019 = vmatprep.subr.mxu0 0.0
        %3020 = vmatpush1.msra.mxu0 0.0
        %3021 = vmatprep.subr.mxu0 0.0
        %3022 = vmatpush1.msra.mxu0 %v2986
        %3023 = vmatprep.subr.mxu0 0.0
        %3024 = vmatpush1.msra.mxu0 %v2985
        %3025 = vmatprep.subr.mxu0 0.0
        %3026 = vmatpush1.msra.mxu0 %v2984
        %3027 = vmatprep.subr.mxu0 0.0
        %3028 = vmatpush1.msra.mxu0 %v2983
        %3029 = vmatprep.subr.mxu0 0.0
        %3030 = vmatpush2.msra.mxu0 0.0
        %3031 = vmatprep.subr.mxu0 0.0
        %3032 = vmatpush2.msra.mxu0 0.0
        %3033 = vmatprep.subr.mxu0 0.0
        %3034 = vmatpush2.msra.mxu0 0.0
        %3035 = vmatprep.subr.mxu0 0.0
        %3036 = vmatpush2.msra.mxu0 0.0
        %3037 = vmatprep.subr.mxu0 0.0
        %3038 = vmatpush2.msra.mxu0 0.0
        %3039 = vmatprep.subr.mxu0 0.0
        %3040 = vmatpush2.msra.mxu0 0.0
        %3041 = vmatprep.subr.mxu0 0.0
        %3042 = vmatpush2.msra.mxu0 0.0
        %3043 = vmatprep.subr.mxu0 0.0
        %3044 = vmatpush2.msra.mxu0 0.0
        %3045 = vmatprep.subr.mxu0 0.0
        %3046 = vmatpush2.msra.mxu0 0.0
        %3047 = vmatprep.subr.mxu0 0.0
        %3048 = vmatpush2.msra.mxu0 0.0
        %3049 = vmatprep.subr.mxu0 0.0
        %3050 = vmatpush2.msra.mxu0 0.0
        %3051 = vmatprep.subr.mxu0 0.0
        %3052 = vmatpush2.msra.mxu0 0.0
        %3053 = vmatprep.subr.mxu0 0.0
        %3054 = vmatpush2.msra.mxu0 0.0
        %3055 = vmatprep.subr.mxu0 0.0
        %3056 = vmatpush2.msra.mxu0 0.0
        %3057 = vmatprep.subr.mxu0 0.0
        %3058 = vmatpush2.msra.mxu0 0.0
        %3059 = vmatprep.subr.mxu0 0.0
        %3060 = vmatpush2.msra.mxu0 0.0
        %3061 = vmatprep.mubr.f32.mxu0 0.0
        %3062 = vmatmul.mubr.f32.gmra.mxu0 %v2995
        %v3063 = vpop.f32.mrf.mxu0
        %v3064 = vadd.f32 %v2992, %v3063
        %v3065 = vpop.f32.mrf.mxu0
        %3066 = vdwg.mxu0
        %v3067 = vmax.f32 %v3064, 0.0
        %v3068 = vld [vmem:[%s31] sm:$0xff]
        %v3069 = vld [vmem:[%s31 + $0x8] sm:$0xff]
        %v3070 = vld [vmem:[%s31 + $0x10] sm:$0xff]
        %v3071 = vld [vmem:[%s31 + $0x18] sm:$0xff]
        %v3072 = vld [vmem:[%s31 + $0x20] sm:$0xff]
        %v3073 = vld [vmem:[%s31 + $0x28] sm:$0xff]
        %v3074 = vld [vmem:[%s31 + $0x30] sm:$0xff]
        %v3075 = vld [vmem:[%s31 + $0x38] sm:$0xff]
        %v3076 = vld [vmem:[%s33] sm:$0x1]
        %v3078 = vlaneseq
        %v3079 = vshrl.u32 %v3078, 7
        %v3080 = vsub.s32 0, %v3079
        %v3081 = vrot.slane %v3076, %v3080
        %vm3083 = vcmask 523264
        %v3085 = vsel %vm3083, %v3067, 0
        %3087 = vmatprep.subr.mxu0 0.0
        %3088 = vmatpush1.msra.mxu0 0.0
        %3089 = vmatprep.subr.mxu0 0.0
        %3090 = vmatpush1.msra.mxu0 0.0
        %3091 = vmatprep.subr.mxu0 0.0
        %3092 = vmatpush1.msra.mxu0 0.0
        %3093 = vmatprep.subr.mxu0 0.0
        %3094 = vmatpush1.msra.mxu0 0.0
        %3095 = vmatprep.subr.mxu0 0.0
        %3096 = vmatpush1.msra.mxu0 0.0
        %3097 = vmatprep.subr.mxu0 0.0
        %3098 = vmatpush1.msra.mxu0 0.0
        %3099 = vmatprep.subr.mxu0 0.0
        %3100 = vmatpush1.msra.mxu0 0.0
        %3101 = vmatprep.subr.mxu0 0.0
        %3102 = vmatpush1.msra.mxu0 0.0
        %3103 = vmatprep.subr.mxu0 0.0
        %3104 = vmatpush1.msra.mxu0 %v3075
        %3105 = vmatprep.subr.mxu0 0.0
        %3106 = vmatpush1.msra.mxu0 %v3074
        %3107 = vmatprep.subr.mxu0 0.0
        %3108 = vmatpush1.msra.mxu0 %v3073
        %3109 = vmatprep.subr.mxu0 0.0
        %3110 = vmatpush1.msra.mxu0 %v3072
        %3111 = vmatprep.subr.mxu0 0.0
        %3112 = vmatpush1.msra.mxu0 %v3071
        %3113 = vmatprep.subr.mxu0 0.0
        %3114 = vmatpush1.msra.mxu0 %v3070
        %3115 = vmatprep.subr.mxu0 0.0
        %3116 = vmatpush1.msra.mxu0 %v3069
        %3117 = vmatprep.subr.mxu0 0.0
        %3118 = vmatpush1.msra.mxu0 %v3068
        %3119 = vmatprep.subr.mxu0 0.0
        %3120 = vmatpush2.msra.mxu0 0.0
        %3121 = vmatprep.subr.mxu0 0.0
        %3122 = vmatpush2.msra.mxu0 0.0
        %3123 = vmatprep.subr.mxu0 0.0
        %3124 = vmatpush2.msra.mxu0 0.0
        %3125 = vmatprep.subr.mxu0 0.0
        %3126 = vmatpush2.msra.mxu0 0.0
        %3127 = vmatprep.subr.mxu0 0.0
        %3128 = vmatpush2.msra.mxu0 0.0
        %3129 = vmatprep.subr.mxu0 0.0
        %3130 = vmatpush2.msra.mxu0 0.0
        %3131 = vmatprep.subr.mxu0 0.0
        %3132 = vmatpush2.msra.mxu0 0.0
        %3133 = vmatprep.subr.mxu0 0.0
        %3134 = vmatpush2.msra.mxu0 0.0
        %3135 = vmatprep.subr.mxu0 0.0
        %3136 = vmatpush2.msra.mxu0 0.0
        %3137 = vmatprep.subr.mxu0 0.0
        %3138 = vmatpush2.msra.mxu0 0.0
        %3139 = vmatprep.subr.mxu0 0.0
        %3140 = vmatpush2.msra.mxu0 0.0
        %3141 = vmatprep.subr.mxu0 0.0
        %3142 = vmatpush2.msra.mxu0 0.0
        %3143 = vmatprep.subr.mxu0 0.0
        %3144 = vmatpush2.msra.mxu0 0.0
        %3145 = vmatprep.subr.mxu0 0.0
        %3146 = vmatpush2.msra.mxu0 0.0
        %3147 = vmatprep.subr.mxu0 0.0
        %3148 = vmatpush2.msra.mxu0 0.0
        %3149 = vmatprep.subr.mxu0 0.0
        %3150 = vmatpush2.msra.mxu0 0.0
        %3151 = vmatprep.mubr.f32.mxu0 0.0
        %3152 = vmatmul.mubr.f32.gmra.mxu0 %v3085
        %v3153 = vpop.f32.mrf.mxu0
        %v3154 = vadd.f32 %v3081, %v3153
        %v3155 = vpop.f32.mrf.mxu0
        %3156 = vdwg.mxu0
        %v3157 = vadd.f32 %v2982, %v3154
        %v3158 = vld [vmem:[%s35] sm:$0x1]
        %v3159 = vld [vmem:[%s37] sm:$0x1]
        %v3160 = vsel %vm1064, %v3157, 0.0
        %3161 = vadd.xlane.f32.xlu0 %v3160
        %v3162 = vpop.xlane.xlu0 %3161
        %v3163 = vmul.f32 %v3162, %v2958
        %v3164 = vsub.f32 %v3157, %v3163
        %v3165 = vmul.f32 %v3164, %v3164
        %v3166 = vsel %vm1064, %v3165, 0.0
        %3167 = vadd.xlane.f32.xlu0 %v3166
        %v3168 = vpop.xlane.xlu0 %3167
        %v3169 = vmul.f32 %v3168, %v2958
        %v3170 = vadd.f32 %v3169, 1e-05
        %v3171 = vrsqrt.pop %v3170
        %v3172 = vmul.f32 %v3164, %v3171
        %v3174 = vlaneseq
        %v3175 = vshrl.u32 %v3174, 7
        %v3176 = vsub.s32 0, %v3175
        %v3177 = vrot.slane %v3158, %v3176
        %v3179 = vmul.f32 %v3172, %v3177
        %v3181 = vlaneseq
        %v3182 = vshrl.u32 %v3181, 7
        %v3183 = vsub.s32 0, %v3182
        %v3184 = vrot.slane %v3159, %v3183
        %v3186 = vadd.f32 %v3179, %v3184
        %v3187 = vld [vmem:[%s41] sm:$0x1]
        %v3188 = vld [vmem:[%s39] sm:$0xff]
        %v3189 = vld [vmem:[%s39 + $0x8] sm:$0xff]
        %v3190 = vld [vmem:[%s39 + $0x10] sm:$0xff]
        %v3191 = vld [vmem:[%s39 + $0x18] sm:$0xff]
        %v3193 = vsel %vm1064, %v3186, 0
        %3195 = vmatprep.subr.mxu0 0.0
        %3196 = vmatpush1.msra.mxu0 0.0
        %3197 = vmatprep.subr.mxu0 0.0
        %3198 = vmatpush1.msra.mxu0 0.0
        %3199 = vmatprep.subr.mxu0 0.0
        %3200 = vmatpush1.msra.mxu0 0.0
        %3201 = vmatprep.subr.mxu0 0.0
        %3202 = vmatpush1.msra.mxu0 0.0
        %3203 = vmatprep.subr.mxu0 0.0
        %3204 = vmatpush1.msra.mxu0 0.0
        %3205 = vmatprep.subr.mxu0 0.0
        %3206 = vmatpush1.msra.mxu0 0.0
        %3207 = vmatprep.subr.mxu0 0.0
        %3208 = vmatpush1.msra.mxu0 0.0
        %3209 = vmatprep.subr.mxu0 0.0
        %3210 = vmatpush1.msra.mxu0 0.0
        %3211 = vmatprep.subr.mxu0 0.0
        %3212 = vmatpush1.msra.mxu0 0.0
        %3213 = vmatprep.subr.mxu0 0.0
        %3214 = vmatpush1.msra.mxu0 0.0
        %3215 = vmatprep.subr.mxu0 0.0
        %3216 = vmatpush1.msra.mxu0 0.0
        %3217 = vmatprep.subr.mxu0 0.0
        %3218 = vmatpush1.msra.mxu0 0.0
        %3219 = vmatprep.subr.mxu0 0.0
        %3220 = vmatpush1.msra.mxu0 %v3191
        %3221 = vmatprep.subr.mxu0 0.0
        %3222 = vmatpush1.msra.mxu0 %v3190
        %3223 = vmatprep.subr.mxu0 0.0
        %3224 = vmatpush1.msra.mxu0 %v3189
        %3225 = vmatprep.subr.mxu0 0.0
        %3226 = vmatpush1.msra.mxu0 %v3188
        %3227 = vmatprep.subr.mxu0 0.0
        %3228 = vmatpush2.msra.mxu0 0.0
        %3229 = vmatprep.subr.mxu0 0.0
        %3230 = vmatpush2.msra.mxu0 0.0
        %3231 = vmatprep.subr.mxu0 0.0
        %3232 = vmatpush2.msra.mxu0 0.0
        %3233 = vmatprep.subr.mxu0 0.0
        %3234 = vmatpush2.msra.mxu0 0.0
        %3235 = vmatprep.subr.mxu0 0.0
        %3236 = vmatpush2.msra.mxu0 0.0
        %3237 = vmatprep.subr.mxu0 0.0
        %3238 = vmatpush2.msra.mxu0 0.0
        %3239 = vmatprep.subr.mxu0 0.0
        %3240 = vmatpush2.msra.mxu0 0.0
        %3241 = vmatprep.subr.mxu0 0.0
        %3242 = vmatpush2.msra.mxu0 0.0
        %3243 = vmatprep.subr.mxu0 0.0
        %3244 = vmatpush2.msra.mxu0 0.0
        %3245 = vmatprep.subr.mxu0 0.0
        %3246 = vmatpush2.msra.mxu0 0.0
        %3247 = vmatprep.subr.mxu0 0.0
        %3248 = vmatpush2.msra.mxu0 0.0
        %3249 = vmatprep.subr.mxu0 0.0
        %3250 = vmatpush2.msra.mxu0 0.0
        %3251 = vmatprep.subr.mxu0 0.0
        %3252 = vmatpush2.msra.mxu0 0.0
        %3253 = vmatprep.subr.mxu0 0.0
        %3254 = vmatpush2.msra.mxu0 0.0
        %3255 = vmatprep.subr.mxu0 0.0
        %3256 = vmatpush2.msra.mxu0 0.0
        %3257 = vmatprep.subr.mxu0 0.0
        %3258 = vmatpush2.msra.mxu0 0.0
        %3259 = vmatprep.mubr.f32.mxu0 0.0
        %3260 = vmatmul.mubr.f32.gmra.mxu0 %v3193
        %v3261 = vpop.f32.mrf.mxu0
        %v3262 = vadd.f32 0.0, %v3261
        %v3263 = vpop.f32.mrf.mxu0
        %3264 = vdwg.mxu0
        %v3265 = vadd.f32 %v3187, %v3262
        %s3266 = scalar_lea.vmem %s39, 32
        %v3267 = vld [vmem:[%s3266] sm:$0xff]
        %v3268 = vld [vmem:[%s3266 + $0x8] sm:$0xff]
        %v3269 = vld [vmem:[%s3266 + $0x10] sm:$0xff]
        %v3270 = vld [vmem:[%s3266 + $0x18] sm:$0xff]
        %v3271 = vrot.slane %v3186, 1
        %v3272 = vsel %vm1064, %v3271, 0
        %3274 = vmatprep.subr.mxu0 0.0
        %3275 = vmatpush1.msra.mxu0 0.0
        %3276 = vmatprep.subr.mxu0 0.0
        %3277 = vmatpush1.msra.mxu0 0.0
        %3278 = vmatprep.subr.mxu0 0.0
        %3279 = vmatpush1.msra.mxu0 0.0
        %3280 = vmatprep.subr.mxu0 0.0
        %3281 = vmatpush1.msra.mxu0 0.0
        %3282 = vmatprep.subr.mxu0 0.0
        %3283 = vmatpush1.msra.mxu0 0.0
        %3284 = vmatprep.subr.mxu0 0.0
        %3285 = vmatpush1.msra.mxu0 0.0
        %3286 = vmatprep.subr.mxu0 0.0
        %3287 = vmatpush1.msra.mxu0 0.0
        %3288 = vmatprep.subr.mxu0 0.0
        %3289 = vmatpush1.msra.mxu0 0.0
        %3290 = vmatprep.subr.mxu0 0.0
        %3291 = vmatpush1.msra.mxu0 0.0
        %3292 = vmatprep.subr.mxu0 0.0
        %3293 = vmatpush1.msra.mxu0 0.0
        %3294 = vmatprep.subr.mxu0 0.0
        %3295 = vmatpush1.msra.mxu0 0.0
        %3296 = vmatprep.subr.mxu0 0.0
        %3297 = vmatpush1.msra.mxu0 0.0
        %3298 = vmatprep.subr.mxu0 0.0
        %3299 = vmatpush1.msra.mxu0 %v3270
        %3300 = vmatprep.subr.mxu0 0.0
        %3301 = vmatpush1.msra.mxu0 %v3269
        %3302 = vmatprep.subr.mxu0 0.0
        %3303 = vmatpush1.msra.mxu0 %v3268
        %3304 = vmatprep.subr.mxu0 0.0
        %3305 = vmatpush1.msra.mxu0 %v3267
        %3306 = vmatprep.subr.mxu0 0.0
        %3307 = vmatpush2.msra.mxu0 0.0
        %3308 = vmatprep.subr.mxu0 0.0
        %3309 = vmatpush2.msra.mxu0 0.0
        %3310 = vmatprep.subr.mxu0 0.0
        %3311 = vmatpush2.msra.mxu0 0.0
        %3312 = vmatprep.subr.mxu0 0.0
        %3313 = vmatpush2.msra.mxu0 0.0
        %3314 = vmatprep.subr.mxu0 0.0
        %3315 = vmatpush2.msra.mxu0 0.0
        %3316 = vmatprep.subr.mxu0 0.0
        %3317 = vmatpush2.msra.mxu0 0.0
        %3318 = vmatprep.subr.mxu0 0.0
        %3319 = vmatpush2.msra.mxu0 0.0
        %3320 = vmatprep.subr.mxu0 0.0
        %3321 = vmatpush2.msra.mxu0 0.0
        %3322 = vmatprep.subr.mxu0 0.0
        %3323 = vmatpush2.msra.mxu0 0.0
        %3324 = vmatprep.subr.mxu0 0.0
        %3325 = vmatpush2.msra.mxu0 0.0
        %3326 = vmatprep.subr.mxu0 0.0
        %3327 = vmatpush2.msra.mxu0 0.0
        %3328 = vmatprep.subr.mxu0 0.0
        %3329 = vmatpush2.msra.mxu0 0.0
        %3330 = vmatprep.subr.mxu0 0.0
        %3331 = vmatpush2.msra.mxu0 0.0
        %3332 = vmatprep.subr.mxu0 0.0
        %3333 = vmatpush2.msra.mxu0 0.0
        %3334 = vmatprep.subr.mxu0 0.0
        %3335 = vmatpush2.msra.mxu0 0.0
        %3336 = vmatprep.subr.mxu0 0.0
        %3337 = vmatpush2.msra.mxu0 0.0
        %3338 = vmatprep.mubr.f32.mxu0 0.0
        %3339 = vmatmul.mubr.f32.gmra.mxu0 %v3272
        %v3340 = vpop.f32.mrf.mxu0
        %v3341 = vadd.f32 0.0, %v3340
        %v3342 = vpop.f32.mrf.mxu0
        %3343 = vdwg.mxu0
        %v3344 = vadd.f32 %v3265, %v3341
        %s3345 = scalar_lea.vmem %s39, 64
        %v3346 = vld [vmem:[%s3345] sm:$0xff]
        %v3347 = vld [vmem:[%s3345 + $0x8] sm:$0xff]
        %v3348 = vld [vmem:[%s3345 + $0x10] sm:$0xff]
        %v3349 = vld [vmem:[%s3345 + $0x18] sm:$0xff]
        %v3350 = vrot.slane %v3186, 2
        %v3351 = vsel %vm1064, %v3350, 0
        %3353 = vmatprep.subr.mxu0 0.0
        %3354 = vmatpush1.msra.mxu0 0.0
        %3355 = vmatprep.subr.mxu0 0.0
        %3356 = vmatpush1.msra.mxu0 0.0
        %3357 = vmatprep.subr.mxu0 0.0
        %3358 = vmatpush1.msra.mxu0 0.0
        %3359 = vmatprep.subr.mxu0 0.0
        %3360 = vmatpush1.msra.mxu0 0.0
        %3361 = vmatprep.subr.mxu0 0.0
        %3362 = vmatpush1.msra.mxu0 0.0
        %3363 = vmatprep.subr.mxu0 0.0
        %3364 = vmatpush1.msra.mxu0 0.0
        %3365 = vmatprep.subr.mxu0 0.0
        %3366 = vmatpush1.msra.mxu0 0.0
        %3367 = vmatprep.subr.mxu0 0.0
        %3368 = vmatpush1.msra.mxu0 0.0
        %3369 = vmatprep.subr.mxu0 0.0
        %3370 = vmatpush1.msra.mxu0 0.0
        %3371 = vmatprep.subr.mxu0 0.0
        %3372 = vmatpush1.msra.mxu0 0.0
        %3373 = vmatprep.subr.mxu0 0.0
        %3374 = vmatpush1.msra.mxu0 0.0
        %3375 = vmatprep.subr.mxu0 0.0
        %3376 = vmatpush1.msra.mxu0 0.0
        %3377 = vmatprep.subr.mxu0 0.0
        %3378 = vmatpush1.msra.mxu0 %v3349
        %3379 = vmatprep.subr.mxu0 0.0
        %3380 = vmatpush1.msra.mxu0 %v3348
        %3381 = vmatprep.subr.mxu0 0.0
        %3382 = vmatpush1.msra.mxu0 %v3347
        %3383 = vmatprep.subr.mxu0 0.0
        %3384 = vmatpush1.msra.mxu0 %v3346
        %3385 = vmatprep.subr.mxu0 0.0
        %3386 = vmatpush2.msra.mxu0 0.0
        %3387 = vmatprep.subr.mxu0 0.0
        %3388 = vmatpush2.msra.mxu0 0.0
        %3389 = vmatprep.subr.mxu0 0.0
        %3390 = vmatpush2.msra.mxu0 0.0
        %3391 = vmatprep.subr.mxu0 0.0
        %3392 = vmatpush2.msra.mxu0 0.0
        %3393 = vmatprep.subr.mxu0 0.0
        %3394 = vmatpush2.msra.mxu0 0.0
        %3395 = vmatprep.subr.mxu0 0.0
        %3396 = vmatpush2.msra.mxu0 0.0
        %3397 = vmatprep.subr.mxu0 0.0
        %3398 = vmatpush2.msra.mxu0 0.0
        %3399 = vmatprep.subr.mxu0 0.0
        %3400 = vmatpush2.msra.mxu0 0.0
        %3401 = vmatprep.subr.mxu0 0.0
        %3402 = vmatpush2.msra.mxu0 0.0
        %3403 = vmatprep.subr.mxu0 0.0
        %3404 = vmatpush2.msra.mxu0 0.0
        %3405 = vmatprep.subr.mxu0 0.0
        %3406 = vmatpush2.msra.mxu0 0.0
        %3407 = vmatprep.subr.mxu0 0.0
        %3408 = vmatpush2.msra.mxu0 0.0
        %3409 = vmatprep.subr.mxu0 0.0
        %3410 = vmatpush2.msra.mxu0 0.0
        %3411 = vmatprep.subr.mxu0 0.0
        %3412 = vmatpush2.msra.mxu0 0.0
        %3413 = vmatprep.subr.mxu0 0.0
        %3414 = vmatpush2.msra.mxu0 0.0
        %3415 = vmatprep.subr.mxu0 0.0
        %3416 = vmatpush2.msra.mxu0 0.0
        %3417 = vmatprep.mubr.f32.mxu0 0.0
        %3418 = vmatmul.mubr.f32.gmra.mxu0 %v3351
        %v3419 = vpop.f32.mrf.mxu0
        %v3420 = vadd.f32 0.0, %v3419
        %v3421 = vpop.f32.mrf.mxu0
        %3422 = vdwg.mxu0
        %v3423 = vadd.f32 %v3344, %v3420
        %s3424 = scalar_lea.vmem %s39, 96
        %v3425 = vld [vmem:[%s3424] sm:$0xff]
        %v3426 = vld [vmem:[%s3424 + $0x8] sm:$0xff]
        %v3427 = vld [vmem:[%s3424 + $0x10] sm:$0xff]
        %v3428 = vld [vmem:[%s3424 + $0x18] sm:$0xff]
        %v3429 = vrot.slane %v3186, 3
        %v3430 = vsel %vm1064, %v3429, 0
        %3432 = vmatprep.subr.mxu0 0.0
        %3433 = vmatpush1.msra.mxu0 0.0
        %3434 = vmatprep.subr.mxu0 0.0
        %3435 = vmatpush1.msra.mxu0 0.0
        %3436 = vmatprep.subr.mxu0 0.0
        %3437 = vmatpush1.msra.mxu0 0.0
        %3438 = vmatprep.subr.mxu0 0.0
        %3439 = vmatpush1.msra.mxu0 0.0
        %3440 = vmatprep.subr.mxu0 0.0
        %3441 = vmatpush1.msra.mxu0 0.0
        %3442 = vmatprep.subr.mxu0 0.0
        %3443 = vmatpush1.msra.mxu0 0.0
        %3444 = vmatprep.subr.mxu0 0.0
        %3445 = vmatpush1.msra.mxu0 0.0
        %3446 = vmatprep.subr.mxu0 0.0
        %3447 = vmatpush1.msra.mxu0 0.0
        %3448 = vmatprep.subr.mxu0 0.0
        %3449 = vmatpush1.msra.mxu0 0.0
        %3450 = vmatprep.subr.mxu0 0.0
        %3451 = vmatpush1.msra.mxu0 0.0
        %3452 = vmatprep.subr.mxu0 0.0
        %3453 = vmatpush1.msra.mxu0 0.0
        %3454 = vmatprep.subr.mxu0 0.0
        %3455 = vmatpush1.msra.mxu0 0.0
        %3456 = vmatprep.subr.mxu0 0.0
        %3457 = vmatpush1.msra.mxu0 %v3428
        %3458 = vmatprep.subr.mxu0 0.0
        %3459 = vmatpush1.msra.mxu0 %v3427
        %3460 = vmatprep.subr.mxu0 0.0
        %3461 = vmatpush1.msra.mxu0 %v3426
        %3462 = vmatprep.subr.mxu0 0.0
        %3463 = vmatpush1.msra.mxu0 %v3425
        %3464 = vmatprep.subr.mxu0 0.0
        %3465 = vmatpush2.msra.mxu0 0.0
        %3466 = vmatprep.subr.mxu0 0.0
        %3467 = vmatpush2.msra.mxu0 0.0
        %3468 = vmatprep.subr.mxu0 0.0
        %3469 = vmatpush2.msra.mxu0 0.0
        %3470 = vmatprep.subr.mxu0 0.0
        %3471 = vmatpush2.msra.mxu0 0.0
        %3472 = vmatprep.subr.mxu0 0.0
        %3473 = vmatpush2.msra.mxu0 0.0
        %3474 = vmatprep.subr.mxu0 0.0
        %3475 = vmatpush2.msra.mxu0 0.0
        %3476 = vmatprep.subr.mxu0 0.0
        %3477 = vmatpush2.msra.mxu0 0.0
        %3478 = vmatprep.subr.mxu0 0.0
        %3479 = vmatpush2.msra.mxu0 0.0
        %3480 = vmatprep.subr.mxu0 0.0
        %3481 = vmatpush2.msra.mxu0 0.0
        %3482 = vmatprep.subr.mxu0 0.0
        %3483 = vmatpush2.msra.mxu0 0.0
        %3484 = vmatprep.subr.mxu0 0.0
        %3485 = vmatpush2.msra.mxu0 0.0
        %3486 = vmatprep.subr.mxu0 0.0
        %3487 = vmatpush2.msra.mxu0 0.0
        %3488 = vmatprep.subr.mxu0 0.0
        %3489 = vmatpush2.msra.mxu0 0.0
        %3490 = vmatprep.subr.mxu0 0.0
        %3491 = vmatpush2.msra.mxu0 0.0
        %3492 = vmatprep.subr.mxu0 0.0
        %3493 = vmatpush2.msra.mxu0 0.0
        %3494 = vmatprep.subr.mxu0 0.0
        %3495 = vmatpush2.msra.mxu0 0.0
        %3496 = vmatprep.mubr.f32.mxu0 0.0
        %3497 = vmatmul.mubr.f32.gmra.mxu0 %v3430
        %v3498 = vpop.f32.mrf.mxu0
        %v3499 = vadd.f32 0.0, %v3498
        %v3500 = vpop.f32.mrf.mxu0
        %3501 = vdwg.mxu0
        %v3502 = vadd.f32 %v3423, %v3499
        %s3503 = scalar_lea.vmem %s39, 128
        %v3504 = vld [vmem:[%s3503] sm:$0xff]
        %v3505 = vld [vmem:[%s3503 + $0x8] sm:$0xff]
        %v3506 = vld [vmem:[%s3503 + $0x10] sm:$0xff]
        %v3507 = vld [vmem:[%s3503 + $0x18] sm:$0xff]
        %v3508 = vrot.slane %v3186, 4
        %v3509 = vsel %vm1064, %v3508, 0
        %3511 = vmatprep.subr.mxu0 0.0
        %3512 = vmatpush1.msra.mxu0 0.0
        %3513 = vmatprep.subr.mxu0 0.0
        %3514 = vmatpush1.msra.mxu0 0.0
        %3515 = vmatprep.subr.mxu0 0.0
        %3516 = vmatpush1.msra.mxu0 0.0
        %3517 = vmatprep.subr.mxu0 0.0
        %3518 = vmatpush1.msra.mxu0 0.0
        %3519 = vmatprep.subr.mxu0 0.0
        %3520 = vmatpush1.msra.mxu0 0.0
        %3521 = vmatprep.subr.mxu0 0.0
        %3522 = vmatpush1.msra.mxu0 0.0
        %3523 = vmatprep.subr.mxu0 0.0
        %3524 = vmatpush1.msra.mxu0 0.0
        %3525 = vmatprep.subr.mxu0 0.0
        %3526 = vmatpush1.msra.mxu0 0.0
        %3527 = vmatprep.subr.mxu0 0.0
        %3528 = vmatpush1.msra.mxu0 0.0
        %3529 = vmatprep.subr.mxu0 0.0
        %3530 = vmatpush1.msra.mxu0 0.0
        %3531 = vmatprep.subr.mxu0 0.0
        %3532 = vmatpush1.msra.mxu0 0.0
        %3533 = vmatprep.subr.mxu0 0.0
        %3534 = vmatpush1.msra.mxu0 0.0
        %3535 = vmatprep.subr.mxu0 0.0
        %3536 = vmatpush1.msra.mxu0 %v3507
        %3537 = vmatprep.subr.mxu0 0.0
        %3538 = vmatpush1.msra.mxu0 %v3506
        %3539 = vmatprep.subr.mxu0 0.0
        %3540 = vmatpush1.msra.mxu0 %v3505
        %3541 = vmatprep.subr.mxu0 0.0
        %3542 = vmatpush1.msra.mxu0 %v3504
        %3543 = vmatprep.subr.mxu0 0.0
        %3544 = vmatpush2.msra.mxu0 0.0
        %3545 = vmatprep.subr.mxu0 0.0
        %3546 = vmatpush2.msra.mxu0 0.0
        %3547 = vmatprep.subr.mxu0 0.0
        %3548 = vmatpush2.msra.mxu0 0.0
        %3549 = vmatprep.subr.mxu0 0.0
        %3550 = vmatpush2.msra.mxu0 0.0
        %3551 = vmatprep.subr.mxu0 0.0
        %3552 = vmatpush2.msra.mxu0 0.0
        %3553 = vmatprep.subr.mxu0 0.0
        %3554 = vmatpush2.msra.mxu0 0.0
        %3555 = vmatprep.subr.mxu0 0.0
        %3556 = vmatpush2.msra.mxu0 0.0
        %3557 = vmatprep.subr.mxu0 0.0
        %3558 = vmatpush2.msra.mxu0 0.0
        %3559 = vmatprep.subr.mxu0 0.0
        %3560 = vmatpush2.msra.mxu0 0.0
        %3561 = vmatprep.subr.mxu0 0.0
        %3562 = vmatpush2.msra.mxu0 0.0
        %3563 = vmatprep.subr.mxu0 0.0
        %3564 = vmatpush2.msra.mxu0 0.0
        %3565 = vmatprep.subr.mxu0 0.0
        %3566 = vmatpush2.msra.mxu0 0.0
        %3567 = vmatprep.subr.mxu0 0.0
        %3568 = vmatpush2.msra.mxu0 0.0
        %3569 = vmatprep.subr.mxu0 0.0
        %3570 = vmatpush2.msra.mxu0 0.0
        %3571 = vmatprep.subr.mxu0 0.0
        %3572 = vmatpush2.msra.mxu0 0.0
        %3573 = vmatprep.subr.mxu0 0.0
        %3574 = vmatpush2.msra.mxu0 0.0
        %3575 = vmatprep.mubr.f32.mxu0 0.0
        %3576 = vmatmul.mubr.f32.gmra.mxu0 %v3509
        %v3577 = vpop.f32.mrf.mxu0
        %v3578 = vadd.f32 0.0, %v3577
        %v3579 = vpop.f32.mrf.mxu0
        %3580 = vdwg.mxu0
        %v3581 = vadd.f32 %v3502, %v3578
        %s3582 = scalar_lea.vmem %s39, 160
        %v3583 = vld [vmem:[%s3582] sm:$0xff]
        %v3584 = vld [vmem:[%s3582 + $0x8] sm:$0xff]
        %v3585 = vld [vmem:[%s3582 + $0x10] sm:$0xff]
        %v3586 = vld [vmem:[%s3582 + $0x18] sm:$0xff]
        %v3587 = vrot.slane %v3186, 5
        %v3588 = vsel %vm1064, %v3587, 0
        %3590 = vmatprep.subr.mxu0 0.0
        %3591 = vmatpush1.msra.mxu0 0.0
        %3592 = vmatprep.subr.mxu0 0.0
        %3593 = vmatpush1.msra.mxu0 0.0
        %3594 = vmatprep.subr.mxu0 0.0
        %3595 = vmatpush1.msra.mxu0 0.0
        %3596 = vmatprep.subr.mxu0 0.0
        %3597 = vmatpush1.msra.mxu0 0.0
        %3598 = vmatprep.subr.mxu0 0.0
        %3599 = vmatpush1.msra.mxu0 0.0
        %3600 = vmatprep.subr.mxu0 0.0
        %3601 = vmatpush1.msra.mxu0 0.0
        %3602 = vmatprep.subr.mxu0 0.0
        %3603 = vmatpush1.msra.mxu0 0.0
        %3604 = vmatprep.subr.mxu0 0.0
        %3605 = vmatpush1.msra.mxu0 0.0
        %3606 = vmatprep.subr.mxu0 0.0
        %3607 = vmatpush1.msra.mxu0 0.0
        %3608 = vmatprep.subr.mxu0 0.0
        %3609 = vmatpush1.msra.mxu0 0.0
        %3610 = vmatprep.subr.mxu0 0.0
        %3611 = vmatpush1.msra.mxu0 0.0
        %3612 = vmatprep.subr.mxu0 0.0
        %3613 = vmatpush1.msra.mxu0 0.0
        %3614 = vmatprep.subr.mxu0 0.0
        %3615 = vmatpush1.msra.mxu0 %v3586
        %3616 = vmatprep.subr.mxu0 0.0
        %3617 = vmatpush1.msra.mxu0 %v3585
        %3618 = vmatprep.subr.mxu0 0.0
        %3619 = vmatpush1.msra.mxu0 %v3584
        %3620 = vmatprep.subr.mxu0 0.0
        %3621 = vmatpush1.msra.mxu0 %v3583
        %3622 = vmatprep.subr.mxu0 0.0
        %3623 = vmatpush2.msra.mxu0 0.0
        %3624 = vmatprep.subr.mxu0 0.0
        %3625 = vmatpush2.msra.mxu0 0.0
        %3626 = vmatprep.subr.mxu0 0.0
        %3627 = vmatpush2.msra.mxu0 0.0
        %3628 = vmatprep.subr.mxu0 0.0
        %3629 = vmatpush2.msra.mxu0 0.0
        %3630 = vmatprep.subr.mxu0 0.0
        %3631 = vmatpush2.msra.mxu0 0.0
        %3632 = vmatprep.subr.mxu0 0.0
        %3633 = vmatpush2.msra.mxu0 0.0
        %3634 = vmatprep.subr.mxu0 0.0
        %3635 = vmatpush2.msra.mxu0 0.0
        %3636 = vmatprep.subr.mxu0 0.0
        %3637 = vmatpush2.msra.mxu0 0.0
        %3638 = vmatprep.subr.mxu0 0.0
        %3639 = vmatpush2.msra.mxu0 0.0
        %3640 = vmatprep.subr.mxu0 0.0
        %3641 = vmatpush2.msra.mxu0 0.0
        %3642 = vmatprep.subr.mxu0 0.0
        %3643 = vmatpush2.msra.mxu0 0.0
        %3644 = vmatprep.subr.mxu0 0.0
        %3645 = vmatpush2.msra.mxu0 0.0
        %3646 = vmatprep.subr.mxu0 0.0
        %3647 = vmatpush2.msra.mxu0 0.0
        %3648 = vmatprep.subr.mxu0 0.0
        %3649 = vmatpush2.msra.mxu0 0.0
        %3650 = vmatprep.subr.mxu0 0.0
        %3651 = vmatpush2.msra.mxu0 0.0
        %3652 = vmatprep.subr.mxu0 0.0
        %3653 = vmatpush2.msra.mxu0 0.0
        %3654 = vmatprep.mubr.f32.mxu0 0.0
        %3655 = vmatmul.mubr.f32.gmra.mxu0 %v3588
        %v3656 = vpop.f32.mrf.mxu0
        %v3657 = vadd.f32 0.0, %v3656
        %v3658 = vpop.f32.mrf.mxu0
        %3659 = vdwg.mxu0
        %v3660 = vadd.f32 %v3581, %v3657
        %s3661 = scalar_lea.vmem %s39, 192
        %v3662 = vld [vmem:[%s3661] sm:$0xff]
        %v3663 = vld [vmem:[%s3661 + $0x8] sm:$0xff]
        %v3664 = vld [vmem:[%s3661 + $0x10] sm:$0xff]
        %v3665 = vld [vmem:[%s3661 + $0x18] sm:$0xff]
        %v3666 = vrot.slane %v3186, 6
        %v3667 = vsel %vm1064, %v3666, 0
        %3669 = vmatprep.subr.mxu0 0.0
        %3670 = vmatpush1.msra.mxu0 0.0
        %3671 = vmatprep.subr.mxu0 0.0
        %3672 = vmatpush1.msra.mxu0 0.0
        %3673 = vmatprep.subr.mxu0 0.0
        %3674 = vmatpush1.msra.mxu0 0.0
        %3675 = vmatprep.subr.mxu0 0.0
        %3676 = vmatpush1.msra.mxu0 0.0
        %3677 = vmatprep.subr.mxu0 0.0
        %3678 = vmatpush1.msra.mxu0 0.0
        %3679 = vmatprep.subr.mxu0 0.0
        %3680 = vmatpush1.msra.mxu0 0.0
        %3681 = vmatprep.subr.mxu0 0.0
        %3682 = vmatpush1.msra.mxu0 0.0
        %3683 = vmatprep.subr.mxu0 0.0
        %3684 = vmatpush1.msra.mxu0 0.0
        %3685 = vmatprep.subr.mxu0 0.0
        %3686 = vmatpush1.msra.mxu0 0.0
        %3687 = vmatprep.subr.mxu0 0.0
        %3688 = vmatpush1.msra.mxu0 0.0
        %3689 = vmatprep.subr.mxu0 0.0
        %3690 = vmatpush1.msra.mxu0 0.0
        %3691 = vmatprep.subr.mxu0 0.0
        %3692 = vmatpush1.msra.mxu0 0.0
        %3693 = vmatprep.subr.mxu0 0.0
        %3694 = vmatpush1.msra.mxu0 %v3665
        %3695 = vmatprep.subr.mxu0 0.0
        %3696 = vmatpush1.msra.mxu0 %v3664
        %3697 = vmatprep.subr.mxu0 0.0
        %3698 = vmatpush1.msra.mxu0 %v3663
        %3699 = vmatprep.subr.mxu0 0.0
        %3700 = vmatpush1.msra.mxu0 %v3662
        %3701 = vmatprep.subr.mxu0 0.0
        %3702 = vmatpush2.msra.mxu0 0.0
        %3703 = vmatprep.subr.mxu0 0.0
        %3704 = vmatpush2.msra.mxu0 0.0
        %3705 = vmatprep.subr.mxu0 0.0
        %3706 = vmatpush2.msra.mxu0 0.0
        %3707 = vmatprep.subr.mxu0 0.0
        %3708 = vmatpush2.msra.mxu0 0.0
        %3709 = vmatprep.subr.mxu0 0.0
        %3710 = vmatpush2.msra.mxu0 0.0
        %3711 = vmatprep.subr.mxu0 0.0
        %3712 = vmatpush2.msra.mxu0 0.0
        %3713 = vmatprep.subr.mxu0 0.0
        %3714 = vmatpush2.msra.mxu0 0.0
        %3715 = vmatprep.subr.mxu0 0.0
        %3716 = vmatpush2.msra.mxu0 0.0
        %3717 = vmatprep.subr.mxu0 0.0
        %3718 = vmatpush2.msra.mxu0 0.0
        %3719 = vmatprep.subr.mxu0 0.0
        %3720 = vmatpush2.msra.mxu0 0.0
        %3721 = vmatprep.subr.mxu0 0.0
        %3722 = vmatpush2.msra.mxu0 0.0
        %3723 = vmatprep.subr.mxu0 0.0
        %3724 = vmatpush2.msra.mxu0 0.0
        %3725 = vmatprep.subr.mxu0 0.0
        %3726 = vmatpush2.msra.mxu0 0.0
        %3727 = vmatprep.subr.mxu0 0.0
        %3728 = vmatpush2.msra.mxu0 0.0
        %3729 = vmatprep.subr.mxu0 0.0
        %3730 = vmatpush2.msra.mxu0 0.0
        %3731 = vmatprep.subr.mxu0 0.0
        %3732 = vmatpush2.msra.mxu0 0.0
        %3733 = vmatprep.mubr.f32.mxu0 0.0
        %3734 = vmatmul.mubr.f32.gmra.mxu0 %v3667
        %v3735 = vpop.f32.mrf.mxu0
        %v3736 = vadd.f32 0.0, %v3735
        %v3737 = vpop.f32.mrf.mxu0
        %3738 = vdwg.mxu0
        %v3739 = vadd.f32 %v3660, %v3736
        %s3740 = scalar_lea.vmem %s39, 224
        %v3741 = vld [vmem:[%s3740] sm:$0xff]
        %v3742 = vld [vmem:[%s3740 + $0x8] sm:$0xff]
        %v3743 = vld [vmem:[%s3740 + $0x10] sm:$0xff]
        %v3744 = vld [vmem:[%s3740 + $0x18] sm:$0xff]
        %v3745 = vrot.slane %v3186, 7
        %v3746 = vsel %vm1064, %v3745, 0
        %3748 = vmatprep.subr.mxu0 0.0
        %3749 = vmatpush1.msra.mxu0 0.0
        %3750 = vmatprep.subr.mxu0 0.0
        %3751 = vmatpush1.msra.mxu0 0.0
        %3752 = vmatprep.subr.mxu0 0.0
        %3753 = vmatpush1.msra.mxu0 0.0
        %3754 = vmatprep.subr.mxu0 0.0
        %3755 = vmatpush1.msra.mxu0 0.0
        %3756 = vmatprep.subr.mxu0 0.0
        %3757 = vmatpush1.msra.mxu0 0.0
        %3758 = vmatprep.subr.mxu0 0.0
        %3759 = vmatpush1.msra.mxu0 0.0
        %3760 = vmatprep.subr.mxu0 0.0
        %3761 = vmatpush1.msra.mxu0 0.0
        %3762 = vmatprep.subr.mxu0 0.0
        %3763 = vmatpush1.msra.mxu0 0.0
        %3764 = vmatprep.subr.mxu0 0.0
        %3765 = vmatpush1.msra.mxu0 0.0
        %3766 = vmatprep.subr.mxu0 0.0
        %3767 = vmatpush1.msra.mxu0 0.0
        %3768 = vmatprep.subr.mxu0 0.0
        %3769 = vmatpush1.msra.mxu0 0.0
        %3770 = vmatprep.subr.mxu0 0.0
        %3771 = vmatpush1.msra.mxu0 0.0
        %3772 = vmatprep.subr.mxu0 0.0
        %3773 = vmatpush1.msra.mxu0 %v3744
        %3774 = vmatprep.subr.mxu0 0.0
        %3775 = vmatpush1.msra.mxu0 %v3743
        %3776 = vmatprep.subr.mxu0 0.0
        %3777 = vmatpush1.msra.mxu0 %v3742
        %3778 = vmatprep.subr.mxu0 0.0
        %3779 = vmatpush1.msra.mxu0 %v3741
        %3780 = vmatprep.subr.mxu0 0.0
        %3781 = vmatpush2.msra.mxu0 0.0
        %3782 = vmatprep.subr.mxu0 0.0
        %3783 = vmatpush2.msra.mxu0 0.0
        %3784 = vmatprep.subr.mxu0 0.0
        %3785 = vmatpush2.msra.mxu0 0.0
        %3786 = vmatprep.subr.mxu0 0.0
        %3787 = vmatpush2.msra.mxu0 0.0
        %3788 = vmatprep.subr.mxu0 0.0
        %3789 = vmatpush2.msra.mxu0 0.0
        %3790 = vmatprep.subr.mxu0 0.0
        %3791 = vmatpush2.msra.mxu0 0.0
        %3792 = vmatprep.subr.mxu0 0.0
        %3793 = vmatpush2.msra.mxu0 0.0
        %3794 = vmatprep.subr.mxu0 0.0
        %3795 = vmatpush2.msra.mxu0 0.0
        %3796 = vmatprep.subr.mxu0 0.0
        %3797 = vmatpush2.msra.mxu0 0.0
        %3798 = vmatprep.subr.mxu0 0.0
        %3799 = vmatpush2.msra.mxu0 0.0
        %3800 = vmatprep.subr.mxu0 0.0
        %3801 = vmatpush2.msra.mxu0 0.0
        %3802 = vmatprep.subr.mxu0 0.0
        %3803 = vmatpush2.msra.mxu0 0.0
        %3804 = vmatprep.subr.mxu0 0.0
        %3805 = vmatpush2.msra.mxu0 0.0
        %3806 = vmatprep.subr.mxu0 0.0
        %3807 = vmatpush2.msra.mxu0 0.0
        %3808 = vmatprep.subr.mxu0 0.0
        %3809 = vmatpush2.msra.mxu0 0.0
        %3810 = vmatprep.subr.mxu0 0.0
        %3811 = vmatpush2.msra.mxu0 0.0
        %3812 = vmatprep.mubr.f32.mxu0 0.0
        %3813 = vmatmul.mubr.f32.gmra.mxu0 %v3746
        %v3814 = vpop.f32.mrf.mxu0
        %v3815 = vadd.f32 0.0, %v3814
        %v3816 = vpop.f32.mrf.mxu0
        %3817 = vdwg.mxu0
        %v3818 = vadd.f32 %v3739, %v3815
        %v3819 = vld [vmem:[%s1018] sm:$0x1]
        %v3820 = vld [vmem:[%s43] sm:$0x3f]
        %v3821 = vld [vmem:[%s45] sm:$0x1]
        %vm3822 = vcmask 48128
        %v3824 = vsel %vm3822, %v3819, 0
        %vm3826 = vcmask 1045504
        %v3828 = vsel %vm3826, %v3820, 0
        %3830 = vmatprep.subr.mxu0 0.0
        %3831 = vmatpush1.msra.mxu0 0.0
        %3832 = vmatprep.subr.mxu0 0.0
        %3833 = vmatpush1.msra.mxu0 0.0
        %3834 = vmatprep.subr.mxu0 0.0
        %3835 = vmatpush1.msra.mxu0 0.0
        %3836 = vmatprep.subr.mxu0 0.0
        %3837 = vmatpush1.msra.mxu0 0.0
        %3838 = vmatprep.subr.mxu0 0.0
        %3839 = vmatpush1.msra.mxu0 0.0
        %3840 = vmatprep.subr.mxu0 0.0
        %3841 = vmatpush1.msra.mxu0 0.0
        %3842 = vmatprep.subr.mxu0 0.0
        %3843 = vmatpush1.msra.mxu0 0.0
        %3844 = vmatprep.subr.mxu0 0.0
        %3845 = vmatpush1.msra.mxu0 0.0
        %3846 = vmatprep.subr.mxu0 0.0
        %3847 = vmatpush1.msra.mxu0 0.0
        %3848 = vmatprep.subr.mxu0 0.0
        %3849 = vmatpush1.msra.mxu0 0.0
        %3850 = vmatprep.subr.mxu0 0.0
        %3851 = vmatpush1.msra.mxu0 0.0
        %3852 = vmatprep.subr.mxu0 0.0
        %3853 = vmatpush1.msra.mxu0 0.0
        %3854 = vmatprep.subr.mxu0 0.0
        %3855 = vmatpush1.msra.mxu0 0.0
        %3856 = vmatprep.subr.mxu0 0.0
        %3857 = vmatpush1.msra.mxu0 0.0
        %3858 = vmatprep.subr.mxu0 0.0
        %3859 = vmatpush1.msra.mxu0 0.0
        %3860 = vmatprep.subr.mxu0 0.0
        %3861 = vmatpush1.msra.mxu0 %v3828
        %3862 = vmatprep.subr.mxu0 0.0
        %3863 = vmatpush2.msra.mxu0 0.0
        %3864 = vmatprep.subr.mxu0 0.0
        %3865 = vmatpush2.msra.mxu0 0.0
        %3866 = vmatprep.subr.mxu0 0.0
        %3867 = vmatpush2.msra.mxu0 0.0
        %3868 = vmatprep.subr.mxu0 0.0
        %3869 = vmatpush2.msra.mxu0 0.0
        %3870 = vmatprep.subr.mxu0 0.0
        %3871 = vmatpush2.msra.mxu0 0.0
        %3872 = vmatprep.subr.mxu0 0.0
        %3873 = vmatpush2.msra.mxu0 0.0
        %3874 = vmatprep.subr.mxu0 0.0
        %3875 = vmatpush2.msra.mxu0 0.0
        %3876 = vmatprep.subr.mxu0 0.0
        %3877 = vmatpush2.msra.mxu0 0.0
        %3878 = vmatprep.subr.mxu0 0.0
        %3879 = vmatpush2.msra.mxu0 0.0
        %3880 = vmatprep.subr.mxu0 0.0
        %3881 = vmatpush2.msra.mxu0 0.0
        %3882 = vmatprep.subr.mxu0 0.0
        %3883 = vmatpush2.msra.mxu0 0.0
        %3884 = vmatprep.subr.mxu0 0.0
        %3885 = vmatpush2.msra.mxu0 0.0
        %3886 = vmatprep.subr.mxu0 0.0
        %3887 = vmatpush2.msra.mxu0 0.0
        %3888 = vmatprep.subr.mxu0 0.0
        %3889 = vmatpush2.msra.mxu0 0.0
        %3890 = vmatprep.subr.mxu0 0.0
        %3891 = vmatpush2.msra.mxu0 0.0
        %3892 = vmatprep.subr.mxu0 0.0
        %3893 = vmatpush2.msra.mxu0 0.0
        %3894 = vmatprep.mubr.f32.mxu0 0.0
        %3895 = vmatmul.mubr.f32.gmra.mxu0 %v3824
        %v3896 = vpop.f32.mrf.mxu0
        %v3897 = vadd.f32 %v3821, %v3896
        %v3898 = vpop.f32.mrf.mxu0
        %3899 = vdwg.mxu0
        %vm3900 = vcmp.gt.f32.partialorder %v3897, 0.0
        %v3901 = vmul.f32 %v3897, 1.442695
        %v3902 = vpow.pop %v3901
        %v3903 = vsub.f32 %v3902, 1.0
        %v3904 = vsel %vm3900, %v3897, %v3903
        %v3905 = vld [vmem:[%s47] sm:$0x1]
        %v3906 = vld [vmem:[%s49] sm:$0x1]
        %vm3907 = vcmask 40960
        %v3908 = vsel %vm3907, %v3904, 0.0
        %3909 = vadd.xlane.f32.xlu0 %v3908
        %v3910 = vpop.xlane.xlu0 %3909
        %v3911 = vrcp.pop 6.0
        %v3912 = vmul.f32 %v3910, %v3911
        %v3913 = vsub.f32 %v3904, %v3912
        %v3914 = vmul.f32 %v3913, %v3913
        %v3915 = vsel %vm3907, %v3914, 0.0
        %3916 = vadd.xlane.f32.xlu0 %v3915
        %v3917 = vpop.xlane.xlu0 %3916
        %v3918 = vmul.f32 %v3917, %v3911
        %v3919 = vadd.f32 %v3918, 1e-05
        %v3920 = vrsqrt.pop %v3919
        %v3921 = vmul.f32 %v3913, %v3920
        %v3922 = vmul.f32 %v3921, %v3905
        %v3923 = vadd.f32 %v3922, %v3906
        %v3924 = vld [vmem:[%s1015] sm:$0x1]
        %v3926 = vlaneseq
        %v3927 = vshrl.u32 %v3926, 7
        %v3928 = vsub.s32 0, %v3927
        %v3929 = vrot.slane %v3818, %v3928
        %3930 = vrot.lane.b32.xlu0 %v3929, 32
        %v3931 = vpop.permute.xlu0 %3930
        %3934 = vrot.lane.b32.xlu0 %v3923, 64
        %v3935 = vpop.permute.xlu0 %3934
        %v3937 = vsel %vm1064, %v3924, %v3931
        %v3938 = vsel %vm3083, %v3937, %v3935
        %vm3939 = vcmask 565248
        %3940 = vst.msk [vmem:[%s1002] sm:$0x1] %vm3939, %v3938
        %v3941 = vld [vmem:[%s51] sm:$0xff]
        %v3942 = vld [vmem:[%s51 + $0x8] sm:$0xff]
        %v3943 = vld [vmem:[%s51 + $0x10] sm:$0xff]
        %v3944 = vld [vmem:[%s51 + $0x18] sm:$0xff]
        %v3945 = vld [vmem:[%s51 + $0x20] sm:$0xff]
        %v3946 = vld [vmem:[%s51 + $0x28] sm:$0xff]
        %v3947 = vld [vmem:[%s51 + $0x30] sm:$0xff]
        %v3948 = vld [vmem:[%s51 + $0x38] sm:$0xff]
        %v3949 = vld [vmem:[%s51 + $0x40] sm:$0x3f]
        %v3950 = vld [vmem:[%s53] sm:$0x1]
        %vm3951 = vcmask 572416
        %v3953 = vsel %vm3951, %v3938, 0
        %v3956 = vsel %vm3826, %v3949, 0
        %3958 = vmatprep.subr.mxu0 0.0
        %3959 = vmatpush1.msra.mxu0 0.0
        %3960 = vmatprep.subr.mxu0 0.0
        %3961 = vmatpush1.msra.mxu0 0.0
        %3962 = vmatprep.subr.mxu0 0.0
        %3963 = vmatpush1.msra.mxu0 0.0
        %3964 = vmatprep.subr.mxu0 0.0
        %3965 = vmatpush1.msra.mxu0 0.0
        %3966 = vmatprep.subr.mxu0 0.0
        %3967 = vmatpush1.msra.mxu0 0.0
        %3968 = vmatprep.subr.mxu0 0.0
        %3969 = vmatpush1.msra.mxu0 0.0
        %3970 = vmatprep.subr.mxu0 0.0
        %3971 = vmatpush1.msra.mxu0 0.0
        %3972 = vmatprep.subr.mxu0 0.0
        %3973 = vmatpush1.msra.mxu0 %v3956
        %3974 = vmatprep.subr.mxu0 0.0
        %3975 = vmatpush1.msra.mxu0 %v3948
        %3976 = vmatprep.subr.mxu0 0.0
        %3977 = vmatpush1.msra.mxu0 %v3947
        %3978 = vmatprep.subr.mxu0 0.0
        %3979 = vmatpush1.msra.mxu0 %v3946
        %3980 = vmatprep.subr.mxu0 0.0
        %3981 = vmatpush1.msra.mxu0 %v3945
        %3982 = vmatprep.subr.mxu0 0.0
        %3983 = vmatpush1.msra.mxu0 %v3944
        %3984 = vmatprep.subr.mxu0 0.0
        %3985 = vmatpush1.msra.mxu0 %v3943
        %3986 = vmatprep.subr.mxu0 0.0
        %3987 = vmatpush1.msra.mxu0 %v3942
        %3988 = vmatprep.subr.mxu0 0.0
        %3989 = vmatpush1.msra.mxu0 %v3941
        %3990 = vmatprep.subr.mxu0 0.0
        %3991 = vmatpush2.msra.mxu0 0.0
        %3992 = vmatprep.subr.mxu0 0.0
        %3993 = vmatpush2.msra.mxu0 0.0
        %3994 = vmatprep.subr.mxu0 0.0
        %3995 = vmatpush2.msra.mxu0 0.0
        %3996 = vmatprep.subr.mxu0 0.0
        %3997 = vmatpush2.msra.mxu0 0.0
        %3998 = vmatprep.subr.mxu0 0.0
        %3999 = vmatpush2.msra.mxu0 0.0
        %4000 = vmatprep.subr.mxu0 0.0
        %4001 = vmatpush2.msra.mxu0 0.0
        %4002 = vmatprep.subr.mxu0 0.0
        %4003 = vmatpush2.msra.mxu0 0.0
        %4004 = vmatprep.subr.mxu0 0.0
        %4005 = vmatpush2.msra.mxu0 0.0
        %4006 = vmatprep.subr.mxu0 0.0
        %4007 = vmatpush2.msra.mxu0 0.0
        %4008 = vmatprep.subr.mxu0 0.0
        %4009 = vmatpush2.msra.mxu0 0.0
        %4010 = vmatprep.subr.mxu0 0.0
        %4011 = vmatpush2.msra.mxu0 0.0
        %4012 = vmatprep.subr.mxu0 0.0
        %4013 = vmatpush2.msra.mxu0 0.0
        %4014 = vmatprep.subr.mxu0 0.0
        %4015 = vmatpush2.msra.mxu0 0.0
        %4016 = vmatprep.subr.mxu0 0.0
        %4017 = vmatpush2.msra.mxu0 0.0
        %4018 = vmatprep.subr.mxu0 0.0
        %4019 = vmatpush2.msra.mxu0 0.0
        %4020 = vmatprep.subr.mxu0 0.0
        %4021 = vmatpush2.msra.mxu0 0.0
        %4022 = vmatprep.mubr.f32.mxu0 0.0
        %4023 = vmatmul.mubr.f32.gmra.mxu0 %v3953
        %v4024 = vpop.f32.mrf.mxu0
        %v4025 = vadd.f32 %v3950, %v4024
        %v4026 = vpop.f32.mrf.mxu0
        %4027 = vdwg.mxu0
        %v4028 = vmax.f32 %v4025, 0.0
        %v4029 = vld [vmem:[%s55] sm:$0xff]
        %v4030 = vld [vmem:[%s55 + $0x8] sm:$0xff]
        %v4031 = vld [vmem:[%s57] sm:$0x1]
        %vm4032 = vcmask 130048
        %v4034 = vsel %vm4032, %v4028, 0
        %4036 = vmatprep.subr.mxu0 0.0
        %4037 = vmatpush1.msra.mxu0 0.0
        %4038 = vmatprep.subr.mxu0 0.0
        %4039 = vmatpush1.msra.mxu0 0.0
        %4040 = vmatprep.subr.mxu0 0.0
        %4041 = vmatpush1.msra.mxu0 0.0
        %4042 = vmatprep.subr.mxu0 0.0
        %4043 = vmatpush1.msra.mxu0 0.0
        %4044 = vmatprep.subr.mxu0 0.0
        %4045 = vmatpush1.msra.mxu0 0.0
        %4046 = vmatprep.subr.mxu0 0.0
        %4047 = vmatpush1.msra.mxu0 0.0
        %4048 = vmatprep.subr.mxu0 0.0
        %4049 = vmatpush1.msra.mxu0 0.0
        %4050 = vmatprep.subr.mxu0 0.0
        %4051 = vmatpush1.msra.mxu0 0.0
        %4052 = vmatprep.subr.mxu0 0.0
        %4053 = vmatpush1.msra.mxu0 0.0
        %4054 = vmatprep.subr.mxu0 0.0
        %4055 = vmatpush1.msra.mxu0 0.0
        %4056 = vmatprep.subr.mxu0 0.0
        %4057 = vmatpush1.msra.mxu0 0.0
        %4058 = vmatprep.subr.mxu0 0.0
        %4059 = vmatpush1.msra.mxu0 0.0
        %4060 = vmatprep.subr.mxu0 0.0
        %4061 = vmatpush1.msra.mxu0 0.0
        %4062 = vmatprep.subr.mxu0 0.0
        %4063 = vmatpush1.msra.mxu0 0.0
        %4064 = vmatprep.subr.mxu0 0.0
        %4065 = vmatpush1.msra.mxu0 %v4030
        %4066 = vmatprep.subr.mxu0 0.0
        %4067 = vmatpush1.msra.mxu0 %v4029
        %4068 = vmatprep.subr.mxu0 0.0
        %4069 = vmatpush2.msra.mxu0 0.0
        %4070 = vmatprep.subr.mxu0 0.0
        %4071 = vmatpush2.msra.mxu0 0.0
        %4072 = vmatprep.subr.mxu0 0.0
        %4073 = vmatpush2.msra.mxu0 0.0
        %4074 = vmatprep.subr.mxu0 0.0
        %4075 = vmatpush2.msra.mxu0 0.0
        %4076 = vmatprep.subr.mxu0 0.0
        %4077 = vmatpush2.msra.mxu0 0.0
        %4078 = vmatprep.subr.mxu0 0.0
        %4079 = vmatpush2.msra.mxu0 0.0
        %4080 = vmatprep.subr.mxu0 0.0
        %4081 = vmatpush2.msra.mxu0 0.0
        %4082 = vmatprep.subr.mxu0 0.0
        %4083 = vmatpush2.msra.mxu0 0.0
        %4084 = vmatprep.subr.mxu0 0.0
        %4085 = vmatpush2.msra.mxu0 0.0
        %4086 = vmatprep.subr.mxu0 0.0
        %4087 = vmatpush2.msra.mxu0 0.0
        %4088 = vmatprep.subr.mxu0 0.0
        %4089 = vmatpush2.msra.mxu0 0.0
        %4090 = vmatprep.subr.mxu0 0.0
        %4091 = vmatpush2.msra.mxu0 0.0
        %4092 = vmatprep.subr.mxu0 0.0
        %4093 = vmatpush2.msra.mxu0 0.0
        %4094 = vmatprep.subr.mxu0 0.0
        %4095 = vmatpush2.msra.mxu0 0.0
        %4096 = vmatprep.subr.mxu0 0.0
        %4097 = vmatpush2.msra.mxu0 0.0
        %4098 = vmatprep.subr.mxu0 0.0
        %4099 = vmatpush2.msra.mxu0 0.0
        %4100 = vmatprep.mubr.f32.mxu0 0.0
        %4101 = vmatmul.mubr.f32.gmra.mxu0 %v4034
        %v4102 = vpop.f32.mrf.mxu0
        %v4103 = vadd.f32 %v4031, %v4102
        %v4104 = vpop.f32.mrf.mxu0
        %4105 = vdwg.mxu0
        %v4106 = vmax.f32 %v4103, 0.0
        %v4107 = vld [vmem:[%s59] sm:$0xff]
        %v4108 = vld [vmem:[%s59 + $0x8] sm:$0xff]
        %v4109 = vld [vmem:[%s61] sm:$0x1]
        %v4111 = vsel %vm4032, %v4106, 0
        %4113 = vmatprep.subr.mxu0 0.0
        %4114 = vmatpush1.msra.mxu0 0.0
        %4115 = vmatprep.subr.mxu0 0.0
        %4116 = vmatpush1.msra.mxu0 0.0
        %4117 = vmatprep.subr.mxu0 0.0
        %4118 = vmatpush1.msra.mxu0 0.0
        %4119 = vmatprep.subr.mxu0 0.0
        %4120 = vmatpush1.msra.mxu0 0.0
        %4121 = vmatprep.subr.mxu0 0.0
        %4122 = vmatpush1.msra.mxu0 0.0
        %4123 = vmatprep.subr.mxu0 0.0
        %4124 = vmatpush1.msra.mxu0 0.0
        %4125 = vmatprep.subr.mxu0 0.0
        %4126 = vmatpush1.msra.mxu0 0.0
        %4127 = vmatprep.subr.mxu0 0.0
        %4128 = vmatpush1.msra.mxu0 0.0
        %4129 = vmatprep.subr.mxu0 0.0
        %4130 = vmatpush1.msra.mxu0 0.0
        %4131 = vmatprep.subr.mxu0 0.0
        %4132 = vmatpush1.msra.mxu0 0.0
        %4133 = vmatprep.subr.mxu0 0.0
        %4134 = vmatpush1.msra.mxu0 0.0
        %4135 = vmatprep.subr.mxu0 0.0
        %4136 = vmatpush1.msra.mxu0 0.0
        %4137 = vmatprep.subr.mxu0 0.0
        %4138 = vmatpush1.msra.mxu0 0.0
        %4139 = vmatprep.subr.mxu0 0.0
        %4140 = vmatpush1.msra.mxu0 0.0
        %4141 = vmatprep.subr.mxu0 0.0
        %4142 = vmatpush1.msra.mxu0 %v4108
        %4143 = vmatprep.subr.mxu0 0.0
        %4144 = vmatpush1.msra.mxu0 %v4107
        %4145 = vmatprep.subr.mxu0 0.0
        %4146 = vmatpush2.msra.mxu0 0.0
        %4147 = vmatprep.subr.mxu0 0.0
        %4148 = vmatpush2.msra.mxu0 0.0
        %4149 = vmatprep.subr.mxu0 0.0
        %4150 = vmatpush2.msra.mxu0 0.0
        %4151 = vmatprep.subr.mxu0 0.0
        %4152 = vmatpush2.msra.mxu0 0.0
        %4153 = vmatprep.subr.mxu0 0.0
        %4154 = vmatpush2.msra.mxu0 0.0
        %4155 = vmatprep.subr.mxu0 0.0
        %4156 = vmatpush2.msra.mxu0 0.0
        %4157 = vmatprep.subr.mxu0 0.0
        %4158 = vmatpush2.msra.mxu0 0.0
        %4159 = vmatprep.subr.mxu0 0.0
        %4160 = vmatpush2.msra.mxu0 0.0
        %4161 = vmatprep.subr.mxu0 0.0
        %4162 = vmatpush2.msra.mxu0 0.0
        %4163 = vmatprep.subr.mxu0 0.0
        %4164 = vmatpush2.msra.mxu0 0.0
        %4165 = vmatprep.subr.mxu0 0.0
        %4166 = vmatpush2.msra.mxu0 0.0
        %4167 = vmatprep.subr.mxu0 0.0
        %4168 = vmatpush2.msra.mxu0 0.0
        %4169 = vmatprep.subr.mxu0 0.0
        %4170 = vmatpush2.msra.mxu0 0.0
        %4171 = vmatprep.subr.mxu0 0.0
        %4172 = vmatpush2.msra.mxu0 0.0
        %4173 = vmatprep.subr.mxu0 0.0
        %4174 = vmatpush2.msra.mxu0 0.0
        %4175 = vmatprep.subr.mxu0 0.0
        %4176 = vmatpush2.msra.mxu0 0.0
        %4177 = vmatprep.mubr.f32.mxu0 0.0
        %4178 = vmatmul.mubr.f32.gmra.mxu0 %v4111
        %v4179 = vpop.f32.mrf.mxu0
        %v4180 = vadd.f32 %v4109, %v4179
        %v4181 = vpop.f32.mrf.mxu0
        %4182 = vdwg.mxu0
        %vm4183 = vcmask 24576
        %4184 = vst.msk [vmem:[%s1008] sm:$0x1] %vm4183, %v4180
        %s4185 = sand.u32 %s757, 1
        %s4186 = scalar_lea.sflag [#allocation3], %s4185
        %s4187 = sand.u32 %s757, 1
        %s4188 = scalar_lea.vmem [#allocation2], %s4187
        %s4189 = sand.u32 %s783, 1
        %s4190 = scalar_lea.sflag [#allocation5], %s4189
        %s4191 = sand.u32 %s783, 1
        %s4192 = scalar_lea.vmem [#allocation4], %s4191
        // Predicated region
        $region145: #{icc_tf_forward.1} parent=143 // pred_check
          %p4193 = pneg %p767
        $region146: #{icc_tf_forward.1} parent=143 // pred_check_branch
          %4195 = sbr.rel (%p4193) target = $region148
        $region147: #{icc_tf_forward.1} parent=143 // pred_region
          %s4197 = ssub.s32 16, 16
          %4198 = vsyncadd %s4186, %s4197
          %s4199 = smul.addr %s83, 16
          %s4200 = scalar_lea.hbm %s63, %s4199
          %s4202 = sshll.u32 %s4188, 4
          %s4203 = int_to_ptr.vmem [resolvable:$true] %s4202
          %4205 = dma.vmem_to_hbm [thread:$0]  %s4203, 16, %s4200, %s4186
        $region148: #{icc_tf_forward.1} parent=143 // pred_fallthru
          _
        // Predicated region
        $region149: #{icc_tf_forward.1} parent=143 // pred_check
          %p4206 = pneg %p793
        $region150: #{icc_tf_forward.1} parent=143 // pred_check_branch
          %4208 = sbr.rel (%p4206) target = $region152
        $region151: #{icc_tf_forward.1} parent=143 // pred_region
          %s4210 = ssub.s32 16, 16
          %4211 = vsyncadd %s4190, %s4210
          %s4212 = smul.addr %s83, 16
          %s4213 = scalar_lea.hbm %s65, %s4212
          %s4215 = sshll.u32 %s4192, 4
          %s4216 = int_to_ptr.vmem [resolvable:$true] %s4215
          %4218 = dma.vmem_to_hbm [thread:$0]  %s4216, 16, %s4213, %s4190
        $region152: #{icc_tf_forward.1} parent=143 // pred_fallthru
          _
      $region144: #{icc_tf_forward.1} parent=5 // pred_fallthru
        _
      %p4219 = scmp.le.s32.totalorder 2, %s78
      // Predicated region
      $region153: #{icc_tf_forward.1} parent=5 // pred_check
        %p4220 = pneg %p4219
      $region154: #{icc_tf_forward.1} parent=5 // pred_check_branch
        %4222 = sbr.rel (%p4220) target = $region156
      $region155: #{icc_tf_forward.1} parent=5 // pred_region
        %s4223 = ssub.s32 %s78, 2
        // Predicated region
        $region157: #{icc_tf_forward.1} parent=155 // pred_check
          %p4224 = pneg %p773
        $region158: #{icc_tf_forward.1} parent=155 // pred_check_branch
          %4226 = sbr.rel (%p4224) target = $region160
        $region159: #{icc_tf_forward.1} parent=155 // pred_region
          %s4227 = sand.u32 %s758, 1
          %s4228 = scalar_lea.sflag [#allocation3], %s4227
          %s4229 = sand.u32 %s758, 1
          %s4230 = scalar_lea.vmem [#allocation2], %s4229
          %4231 = dma.done %s4228, 16
        $region160: #{icc_tf_forward.1} parent=155 // pred_fallthru
          _
        // Predicated region
        $region161: #{icc_tf_forward.1} parent=155 // pred_check
          %p4232 = pneg %p799
        $region162: #{icc_tf_forward.1} parent=155 // pred_check_branch
          %4234 = sbr.rel (%p4232) target = $region164
        $region163: #{icc_tf_forward.1} parent=155 // pred_region
          %s4235 = sand.u32 %s784, 1
          %s4236 = scalar_lea.sflag [#allocation5], %s4235
          %s4237 = sand.u32 %s784, 1
          %s4238 = scalar_lea.vmem [#allocation4], %s4237
          %4239 = dma.done %s4236, 16
        $region164: #{icc_tf_forward.1} parent=155 // pred_fallthru
          _
      $region156: #{icc_tf_forward.1} parent=5 // pred_fallthru
        _
    $region6: #{icc_tf_forward.1} parent=1 // loop_footer
      %s82 = sadd.s32 1, %s78
    $region7: #{icc_tf_forward.1} parent=1 // loop_footer_branch
      %77 = sbr.rel target = $region3
    $region8: #{icc_tf_forward.1} parent=1 // loop_exit
      _
    %4240 = vsyncpa [#allocation3], 1
    %s4241 = scalar_lea.sflag [#allocation3], 1
    %4242 = vsyncpa %s4241, 1
    %4243 = vsyncpa [#allocation5], 1
    %s4244 = scalar_lea.sflag [#allocation5], 1
    %4245 = vsyncpa %s4244, 1

</llo_original>
